<compile_context>
chip_gen: v5e
topology: v5e:2x2
jax: 0.10.0
libtpu: 0.0.40
codegen_flags: <defaults>
</compile_context>

<pallas_src>
import functools
import math

import jax
import jax.numpy as jnp
from jax import lax
from jax.experimental import pallas as pl
from jax.experimental.pallas import tpu as pltpu

EPS = 1e-5
NEG_INF = -1e30

FF_KEYS = ("ln_g", "ln_b", "w1", "b1", "w2", "b2")
ATTN_KEYS = ("ln_g", "ln_b", "wq", "bq", "wk", "bk", "wv", "bv", "wo", "bo")
CONV_KEYS = ("ln_g", "ln_b", "pc1_w", "pc1_b", "dc_w", "bn_g", "bn_b",
             "pc2_w", "pc2_b", "mlp_w1", "mlp_bn_g", "mlp_bn_b", "mlp_w2")


def _flatten_params(params):
    flat = []
    for k in FF_KEYS:
        flat.append(params["ff1"][k])
    for k in ATTN_KEYS:
        flat.append(params["attn"][k])
    for k in CONV_KEYS:
        flat.append(params["conv"][k])
    for k in FF_KEYS:
        flat.append(params["ff2"][k])
    flat.append(params["ln_g"])
    flat.append(params["ln_b"])
    return flat


def _layernorm(x, g, b):
    mu = jnp.mean(x, axis=-1, keepdims=True)
    var = jnp.mean((x - mu) ** 2, axis=-1, keepdims=True)
    return (x - mu) * lax.rsqrt(var + EPS) * g + b


def _ffn(x, p):
    xn = _layernorm(x, p["ln_g"][...], p["ln_b"][...])
    h = jnp.dot(xn, p["w1"][...], preferred_element_type=jnp.float32) + p["b1"][...]
    h = h * jax.nn.sigmoid(h)                                   # Swish
    return jnp.dot(h, p["w2"][...], preferred_element_type=jnp.float32) + p["b2"][...]


# ------------------------- fused ConformerBlock kernel -------------------------
def conformer_kernel(n_valid, *refs):
    (x_ref, bias_ref, ef_ref, wng_ref, wnc_ref, wei_ref, weo_ref,
     cent_ref, enc_ref, nn_ref) = refs[:10]
    o_ref = refs[-1]
    p_refs = list(refs[10:-1])

    def take(keys):
        nonlocal p_refs
        d = dict(zip(keys, p_refs[:len(keys)]))
        p_refs = p_refs[len(keys):]
        return d

    ff1 = take(FF_KEYS)
    att = take(ATTN_KEYS)
    cv = take(CONV_KEYS)
    ff2 = take(FF_KEYS)
    fln_g, fln_b = p_refs[0], p_refs[1]

    f32 = jnp.float32
    bs, n_pad, H = x_ref.shape
    n_heads = bias_ref.shape[0]
    dh = H // n_heads
    scale = dh ** -0.5
    L = wng_ref.shape[1]
    ne_pad = ef_ref.shape[1]
    K = cv["dc_w"].shape[0]
    Lp = L - K + 1                                   # 'valid' depthwise conv length
    rows = bs * n_pad
    BL = bs * L

    # ---- batched one-hot gather / scatter / count matrices (iota compares) ----
    oh_gather = jnp.where(                           # (bs, L, n_pad): row l -> node wn+1
        lax.broadcasted_iota(jnp.int32, (bs, L, n_pad), 2) == wng_ref[...], 1.0, 0.0)
    oh_count = jnp.where(                            # (bs, n_pad, L): node j <- walk rows
        lax.broadcasted_iota(jnp.int32, (bs, n_pad, L), 1) == wnc_ref[...], 1.0, 0.0)
    oh_edge_i = jnp.where(
        lax.broadcasted_iota(jnp.int32, (bs, L, ne_pad), 2) == wei_ref[...], 1.0, 0.0)
    oh_edge_o = jnp.where(
        lax.broadcasted_iota(jnp.int32, (bs, L, ne_pad), 2) == weo_ref[...], 1.0, 0.0)
    oh_scat = jnp.where(                             # (bs, n_pad, L): rows l >= Lp are zero
        lax.broadcasted_iota(jnp.int32, (bs, n_pad, L), 1) == cent_ref[...], 1.0, 0.0)
    ones_bl1 = jnp.ones((bs, L, 1), f32)

    # activations as one resident (bs*n_pad, H) row slab for the whole block
    x0 = x_ref[...].astype(f32).reshape(rows, H)

    # ---------------- ff1 (half-step residual) ----------------
    x1 = _ffn(x0, ff1) * 0.5 + x0

    # ---------------- multi-head attention ----------------
    xn = _layernorm(x1, att["ln_g"][...], att["ln_b"][...])
    q = (jnp.dot(xn, att["wq"][...], preferred_element_type=f32)
         + att["bq"][...]).reshape(bs, n_pad, H)
    k = (jnp.dot(xn, att["wk"][...], preferred_element_type=f32)
         + att["bk"][...]).reshape(bs, n_pad, H)
    v = (jnp.dot(xn, att["wv"][...], preferred_element_type=f32)
         + att["bv"][...]).reshape(bs, n_pad, H)

    # random-walk visit-count weighting (weight[:, 0] == 1 in the reference)
    counts = jnp.einsum("bjl,blo->bjo", oh_count, ones_bl1,
                        preferred_element_type=f32)            # (bs, n_pad, 1)
    col = lax.broadcasted_iota(jnp.int32, (bs, n_pad, 1), 1)
    weight = jnp.where(col == 0, 1.0, counts * nn_ref[...] * (1.0 / L))
    v = v * weight

    bias_all = bias_ref[...].astype(f32)                       # (heads, bs, n_pad, n_pad)
    key_mask = jnp.where(                                      # mask padded key columns
        lax.broadcasted_iota(jnp.int32, (1, 1, n_pad), 2) < n_valid, 0.0, NEG_INF)

    o_heads = []
    for h in range(n_heads):                                   # static unroll, batched over bs
        qh = q[:, :, h * dh:(h + 1) * dh]
        kh = k[:, :, h * dh:(h + 1) * dh]
        vh = v[:, :, h * dh:(h + 1) * dh]
        s = jnp.einsum("bqd,bkd->bqk", qh, kh, preferred_element_type=f32) * scale
        s = s + bias_all[h] + key_mask
        s = s - jnp.max(s, axis=-1, keepdims=True)
        p = jnp.exp(s)
        p = p / jnp.sum(p, axis=-1, keepdims=True)
        o_heads.append(jnp.einsum("bqk,bkd->bqd", p, vh, preferred_element_type=f32))
    o_cat = jnp.concatenate(o_heads, axis=-1).reshape(rows, H)
    x2 = (jnp.dot(o_cat, att["wo"][...], preferred_element_type=f32)
          + att["bo"][...]) + x1                               # single Wo matmul

    # ---------------- conv module ----------------
    ln3 = _layernorm(x2, cv["ln_g"][...], cv["ln_b"][...])     # (bs*n_pad, H)
    ln3_b = ln3.reshape(bs, n_pad, H)
    vn = ln3_b[:, 0, :]                                        # (bs, H) virtual node (post-LN)

    xw = jnp.einsum("blj,bjh->blh", oh_gather, ln3_b, preferred_element_type=f32)
    efb = ef_ref[...].astype(f32)                              # (bs, ne_pad, E)
    wi = jnp.einsum("ble,bef->blf", oh_edge_i, efb, preferred_element_type=f32)
    wo_feat = jnp.einsum("ble,bef->blf", oh_edge_o, efb, preferred_element_type=f32)
    enc = enc_ref[...].astype(f32)                             # (bs, L, win)

    E = efb.shape[2]
    win = enc.shape[2]
    pc1w = cv["pc1_w"][...]
    w_x = pc1w[0:H, :]
    w_i = pc1w[H:H + E, :]
    w_o = pc1w[H + E:H + 2 * E, :]
    w_e = pc1w[H + 2 * E:, :]

    # pc1 over the whole batch at once (split-weight form of the channel concat)
    h_all = (jnp.dot(xw.reshape(BL, H), w_x, preferred_element_type=f32)
             + jnp.dot(wi.reshape(BL, E), w_i, preferred_element_type=f32)
             + jnp.dot(wo_feat.reshape(BL, E), w_o, preferred_element_type=f32)
             + jnp.dot(enc.reshape(BL, win), w_e, preferred_element_type=f32)
             + cv["pc1_b"][...])                               # (bs*L, 2H)
    g1 = h_all[:, :H] * jax.nn.sigmoid(h_all[:, H:2 * H])      # GLU (channel dim)

    # depthwise conv ('valid') via XLU sublane rolls on the flat slab; rows
    # l >= Lp of each batch (the only ones whose roll crosses a batch
    # boundary) are masked out of the BN statistics and of the scatter below.
    dcw = cv["dc_w"][...]                                      # (K, H)
    pre = g1 * dcw[0:1, :]
    for kk in range(1, K):
        pre = pre + pltpu.roll(g1, BL - kk, axis=0) * dcw[kk:kk + 1, :]

    # BatchNorm1d over (batch, valid length): training-mode stats, biased var
    lmask = jnp.where(
        lax.broadcasted_iota(jnp.int32, (bs, L, 1), 1) < Lp, 1.0, 0.0).reshape(BL, 1)
    inv_cnt = 1.0 / float(bs * Lp)
    mu = jnp.sum(pre * lmask, axis=0, keepdims=True) * inv_cnt
    dev = (pre - mu) * lmask
    var = jnp.sum(dev * dev, axis=0, keepdims=True) * inv_cnt
    yb = (pre - mu) * lax.rsqrt(var + EPS) * cv["bn_g"][...] + cv["bn_b"][...]
    yb = yb * jax.nn.sigmoid(yb)                               # Swish
    y2 = (jnp.dot(yb, cv["pc2_w"][...], preferred_element_type=f32)
          + cv["pc2_b"][...]).reshape(bs, L, H)

    # scatter_mean over center nodes (invalid rows are already zero in oh_scat)
    sums = jnp.einsum("bjl,blh->bjh", oh_scat, y2, preferred_element_type=f32)
    cnts = jnp.einsum("bjl,blo->bjo", oh_scat, ones_bl1, preferred_element_type=f32)
    node_mean = sums / jnp.maximum(cnts, 1.0)                  # rows 0 and >= n stay 0

    # virtual-node MLP: Linear -> BatchNorm1d (batch stats) -> ReLU -> Linear
    mlp_in = vn + jnp.sum(node_mean, axis=1)                   # (bs, H)
    z = jnp.dot(mlp_in, cv["mlp_w1"][...], preferred_element_type=f32)
    mz = jnp.mean(z, axis=0, keepdims=True)
    vz = jnp.mean((z - mz) ** 2, axis=0, keepdims=True)
    z = (z - mz) * lax.rsqrt(vz + EPS) * cv["mlp_bn_g"][...] + cv["mlp_bn_b"][...]
    z = jnp.maximum(z, 0.0)
    vn_out = jnp.dot(z, cv["mlp_w2"][...], preferred_element_type=f32)   # (bs, H)

    x3 = x2 + (node_mean + vn_out[:, None, :]).reshape(rows, H)

    # ---------------- ff2 (half-step residual) + final LayerNorm ----------------
    x4 = _ffn(x3, ff2) * 0.5 + x3
    out = _layernorm(x4, fln_g[...], fln_b[...])
    o_ref[...] = out.reshape(bs, n_pad, H).astype(o_ref.dtype)   # tile-aligned dense store


# ------------------------- wrapper -------------------------
def conformer_block(params, x, attn_bias, edge_feat, walk_nodes, walk_edges,
                    encodings, n_nodes):
    f32 = jnp.float32
    bs, n, H = x.shape
    L = walk_nodes.shape[1]
    ne = edge_feat.shape[1]
    K = params["conv"]["dc_w"].shape[0]
    Lp = L - K + 1
    cs = K // 2

    def rup(v, m):
        return ((v + m - 1) // m) * m

    n_pad = rup(n, 8)
    ne_pad = rup(ne, 8)

    # pad node / edge axes to (8,128)-friendly sizes; pad rows/cols masked in-kernel
    x_pad = jnp.pad(x.astype(f32), ((0, 0), (0, n_pad - n), (0, 0)))
    bias_pad = jnp.pad(attn_bias.astype(f32),
                       ((0, 0), (0, 0), (0, n_pad - n), (0, n_pad - n)))
    bias_pad = jnp.transpose(bias_pad, (1, 0, 2, 3))            # (heads, bs, n_pad, n_pad)
    ef_pad = jnp.pad(edge_feat.astype(f32), ((0, 0), (0, ne_pad - ne), (0, 0)))

    wn = walk_nodes.astype(jnp.int32)
    we = walk_edges.astype(jnp.int32)
    wnp1_g = (wn + 1)[..., None]                                # (bs, L, 1) gather indices
    wnp1_c = (wn + 1)[:, None, :]                               # (bs, 1, L) count indices
    neg1 = -jnp.ones((bs, 1), jnp.int32)
    we_i = jnp.concatenate([neg1, we], axis=1)[..., None]       # (bs, L, 1), -1 never matches
    we_o = jnp.concatenate([we, neg1], axis=1)[..., None]       # (bs, L, 1)
    centers = wn[:, cs:cs + Lp] + 1                             # (bs, Lp) -> output rows 1..n-1
    cent = jnp.concatenate(
        [centers, -jnp.ones((bs, L - Lp), jnp.int32)], axis=1)[:, None, :]  # (bs, 1, L)

    enc = jnp.transpose(encodings.astype(f32), (0, 2, 1))       # (bs, L, win) channels-last
    nn = n_nodes.reshape(bs, 1, 1).astype(f32)

    args = (x_pad, bias_pad, ef_pad, wnp1_g, wnp1_c, we_i, we_o, cent, enc, nn,
            *_flatten_params(params))

    vmem = pl.BlockSpec(memory_space=pltpu.MemorySpace.VMEM)
    arg_bytes = sum(int(a.size) * a.dtype.itemsize for a in args)
    vmem_limit = int(min(max(16 * arg_bytes + (4 << 20), 8 << 20), 32 << 20))

    out = pl.pallas_call(
        functools.partial(conformer_kernel, n),
        out_shape=jax.ShapeDtypeStruct((bs, n_pad, H), x.dtype),
        in_specs=[vmem] * len(args),
        out_specs=vmem,
        compiler_params=pltpu.CompilerParams(vmem_limit_bytes=vmem_limit),
    )(*args)
    return out[:, :n, :]


# ------------------------- deterministic parameter init -------------------------
def init_params(key, H, F, E, n_heads, win, K):
    C_in = H + 2 * E + win
    it = iter(jax.random.split(key, 64))

    def W(shape):
        return jax.random.normal(next(it), shape, jnp.float32) / math.sqrt(shape[0])

    def bias(d):
        return jax.random.normal(next(it), (1, d), jnp.float32) * 0.02

    def gamma(d):
        return 1.0 + jax.random.normal(next(it), (1, d), jnp.float32) * 0.05

    def beta(d):
        return jax.random.normal(next(it), (1, d), jnp.float32) * 0.05

    def ff():
        return {"ln_g": gamma(H), "ln_b": beta(H),
                "w1": W((H, F)), "b1": bias(F),
                "w2": W((F, H)), "b2": bias(H)}

    attn = {"ln_g": gamma(H), "ln_b": beta(H),
            "wq": W((H, H)), "bq": bias(H),
            "wk": W((H, H)), "bk": bias(H),
            "wv": W((H, H)), "bv": bias(H),
            "wo": W((H, H)), "bo": bias(H)}
    conv = {"ln_g": gamma(H), "ln_b": beta(H),
            "pc1_w": W((C_in, 2 * H)), "pc1_b": bias(2 * H),
            "dc_w": jax.random.normal(next(it), (K, H), jnp.float32) / math.sqrt(K),
            "bn_g": gamma(H), "bn_b": beta(H),
            "pc2_w": W((H, H)), "pc2_b": bias(H),
            "mlp_w1": W((H, H)), "mlp_bn_g": gamma(H), "mlp_bn_b": beta(H),
            "mlp_w2": W((H, H))}
    return {"ff1": ff(), "ff2": ff(), "attn": attn, "conv": conv,
            "ln_g": gamma(H), "ln_b": beta(H)}


if __name__ == "__main__":
    bs, n, H, F, E = 2, 9, 32, 64, 8          # n = 1 virtual node + 8 graph nodes
    n_heads, win, K = 4, 8, 3
    L, n_edges = 16, 12                        # random-walk length / #edges

    key = jax.random.PRNGKey(0)
    kp, kx, kb, ke, kwn, kwe, kenc = jax.random.split(key, 7)
    params = init_params(kp, H, F, E, n_heads, win, K)

    x = jax.random.normal(kx, (bs, n, H), jnp.float32)
    attn_bias = jax.random.normal(kb, (bs, n_heads, n, n), jnp.float32) * 0.1
    edge_feat = jax.random.normal(ke, (bs, n_edges, E), jnp.float32)
    walk_nodes = jax.random.randint(kwn, (bs, L), 0, n - 1, dtype=jnp.int32)
    walk_edges = jax.random.randint(kwe, (bs, L - 1), 0, n_edges, dtype=jnp.int32)
    encodings = jax.random.normal(kenc, (bs, win, L), jnp.float32)
    n_nodes = jnp.array([8.0, 7.0], jnp.float32)

    out = jax.jit(conformer_block)(params, x, attn_bias, edge_feat,
                                   walk_nodes, walk_edges, encodings, n_nodes)
    out = jax.block_until_ready(out)
    assert out.shape == (bs, n, H)
    assert bool(jnp.all(jnp.isfinite(out)))
    print("KERNEL_OK")
</pallas_src>

<mosaic_0001>
module attributes {stable_mosaic.version = 11 : i64} {
  func.func @conformer_kernel(%arg0: memref<2x16x32xf32, #tpu.memory_space<vmem>>, %arg1: memref<4x2x16x16xf32, #tpu.memory_space<vmem>>, %arg2: memref<2x16x8xf32, #tpu.memory_space<vmem>>, %arg3: memref<2x16x1xi32, #tpu.memory_space<vmem>>, %arg4: memref<2x1x16xi32, #tpu.memory_space<vmem>>, %arg5: memref<2x16x1xi32, #tpu.memory_space<vmem>>, %arg6: memref<2x16x1xi32, #tpu.memory_space<vmem>>, %arg7: memref<2x1x16xi32, #tpu.memory_space<vmem>>, %arg8: memref<2x16x8xf32, #tpu.memory_space<vmem>>, %arg9: memref<2x1x1xf32, #tpu.memory_space<vmem>>, %arg10: memref<1x32xf32, #tpu.memory_space<vmem>>, %arg11: memref<1x32xf32, #tpu.memory_space<vmem>>, %arg12: memref<32x64xf32, #tpu.memory_space<vmem>>, %arg13: memref<1x64xf32, #tpu.memory_space<vmem>>, %arg14: memref<64x32xf32, #tpu.memory_space<vmem>>, %arg15: memref<1x32xf32, #tpu.memory_space<vmem>>, %arg16: memref<1x32xf32, #tpu.memory_space<vmem>>, %arg17: memref<1x32xf32, #tpu.memory_space<vmem>>, %arg18: memref<32x32xf32, #tpu.memory_space<vmem>>, %arg19: memref<1x32xf32, #tpu.memory_space<vmem>>, %arg20: memref<32x32xf32, #tpu.memory_space<vmem>>, %arg21: memref<1x32xf32, #tpu.memory_space<vmem>>, %arg22: memref<32x32xf32, #tpu.memory_space<vmem>>, %arg23: memref<1x32xf32, #tpu.memory_space<vmem>>, %arg24: memref<32x32xf32, #tpu.memory_space<vmem>>, %arg25: memref<1x32xf32, #tpu.memory_space<vmem>>, %arg26: memref<1x32xf32, #tpu.memory_space<vmem>>, %arg27: memref<1x32xf32, #tpu.memory_space<vmem>>, %arg28: memref<56x64xf32, #tpu.memory_space<vmem>>, %arg29: memref<1x64xf32, #tpu.memory_space<vmem>>, %arg30: memref<3x32xf32, #tpu.memory_space<vmem>>, %arg31: memref<1x32xf32, #tpu.memory_space<vmem>>, %arg32: memref<1x32xf32, #tpu.memory_space<vmem>>, %arg33: memref<32x32xf32, #tpu.memory_space<vmem>>, %arg34: memref<1x32xf32, #tpu.memory_space<vmem>>, %arg35: memref<32x32xf32, #tpu.memory_space<vmem>>, %arg36: memref<1x32xf32, #tpu.memory_space<vmem>>, %arg37: memref<1x32xf32, #tpu.memory_space<vmem>>, %arg38: memref<32x32xf32, #tpu.memory_space<vmem>>, %arg39: memref<1x32xf32, #tpu.memory_space<vmem>>, %arg40: memref<1x32xf32, #tpu.memory_space<vmem>>, %arg41: memref<32x64xf32, #tpu.memory_space<vmem>>, %arg42: memref<1x64xf32, #tpu.memory_space<vmem>>, %arg43: memref<64x32xf32, #tpu.memory_space<vmem>>, %arg44: memref<1x32xf32, #tpu.memory_space<vmem>>, %arg45: memref<1x32xf32, #tpu.memory_space<vmem>>, %arg46: memref<1x32xf32, #tpu.memory_space<vmem>>, %arg47: memref<2x16x32xf32, #tpu.memory_space<vmem>>) attributes {dimension_semantics = [], scalar_prefetch = 0 : i64, scratch_operands = 0 : i64, tpu.core_type = #tpu.core_type<tc>} {
    %0 = tpu.iota {dimensions = array<i32: 2>} : vector<2x16x16xi32>
    %c0 = arith.constant 0 : index
    %c0_0 = arith.constant 0 : index
    %c0_1 = arith.constant 0 : index
    %1 = vector.load %arg3[%c0, %c0_0, %c0_1] : memref<2x16x1xi32, #tpu.memory_space<vmem>>, vector<2x16x1xi32>
    %2 = vector.broadcast %1 : vector<2x16x1xi32> to vector<2x16x16xi32>
    %3 = arith.cmpi eq, %0, %2 : vector<2x16x16xi32>
    %cst = arith.constant 1.000000e+00 : f32
    %cst_2 = arith.constant 0.000000e+00 : f32
    %4 = vector.broadcast %cst : f32 to vector<2x16x16xf32>
    %5 = vector.broadcast %cst_2 : f32 to vector<2x16x16xf32>
    %6 = arith.select %3, %4, %5 : vector<2x16x16xi1>, vector<2x16x16xf32>
    %7 = tpu.iota {dimensions = array<i32: 1>} : vector<2x16x16xi32>
    %c0_3 = arith.constant 0 : index
    %c0_4 = arith.constant 0 : index
    %c0_5 = arith.constant 0 : index
    %8 = vector.load %arg4[%c0_3, %c0_4, %c0_5] : memref<2x1x16xi32, #tpu.memory_space<vmem>>, vector<2x1x16xi32>
    %9 = vector.broadcast %8 : vector<2x1x16xi32> to vector<2x16x16xi32>
    %10 = arith.cmpi eq, %7, %9 : vector<2x16x16xi32>
    %cst_6 = arith.constant 1.000000e+00 : f32
    %cst_7 = arith.constant 0.000000e+00 : f32
    %11 = vector.broadcast %cst_6 : f32 to vector<2x16x16xf32>
    %12 = vector.broadcast %cst_7 : f32 to vector<2x16x16xf32>
    %13 = arith.select %10, %11, %12 : vector<2x16x16xi1>, vector<2x16x16xf32>
    %14 = tpu.iota {dimensions = array<i32: 2>} : vector<2x16x16xi32>
    %c0_8 = arith.constant 0 : index
    %c0_9 = arith.constant 0 : index
    %c0_10 = arith.constant 0 : index
    %15 = vector.load %arg5[%c0_8, %c0_9, %c0_10] : memref<2x16x1xi32, #tpu.memory_space<vmem>>, vector<2x16x1xi32>
    %16 = vector.broadcast %15 : vector<2x16x1xi32> to vector<2x16x16xi32>
    %17 = arith.cmpi eq, %14, %16 : vector<2x16x16xi32>
    %cst_11 = arith.constant 1.000000e+00 : f32
    %cst_12 = arith.constant 0.000000e+00 : f32
    %18 = vector.broadcast %cst_11 : f32 to vector<2x16x16xf32>
    %19 = vector.broadcast %cst_12 : f32 to vector<2x16x16xf32>
    %20 = arith.select %17, %18, %19 : vector<2x16x16xi1>, vector<2x16x16xf32>
    %21 = tpu.iota {dimensions = array<i32: 2>} : vector<2x16x16xi32>
    %c0_13 = arith.constant 0 : index
    %c0_14 = arith.constant 0 : index
    %c0_15 = arith.constant 0 : index
    %22 = vector.load %arg6[%c0_13, %c0_14, %c0_15] : memref<2x16x1xi32, #tpu.memory_space<vmem>>, vector<2x16x1xi32>
    %23 = vector.broadcast %22 : vector<2x16x1xi32> to vector<2x16x16xi32>
    %24 = arith.cmpi eq, %21, %23 : vector<2x16x16xi32>
    %cst_16 = arith.constant 1.000000e+00 : f32
    %cst_17 = arith.constant 0.000000e+00 : f32
    %25 = vector.broadcast %cst_16 : f32 to vector<2x16x16xf32>
    %26 = vector.broadcast %cst_17 : f32 to vector<2x16x16xf32>
    %27 = arith.select %24, %25, %26 : vector<2x16x16xi1>, vector<2x16x16xf32>
    %28 = tpu.iota {dimensions = array<i32: 1>} : vector<2x16x16xi32>
    %c0_18 = arith.constant 0 : index
    %c0_19 = arith.constant 0 : index
    %c0_20 = arith.constant 0 : index
    %29 = vector.load %arg7[%c0_18, %c0_19, %c0_20] : memref<2x1x16xi32, #tpu.memory_space<vmem>>, vector<2x1x16xi32>
    %30 = vector.broadcast %29 : vector<2x1x16xi32> to vector<2x16x16xi32>
    %31 = arith.cmpi eq, %28, %30 : vector<2x16x16xi32>
    %cst_21 = arith.constant 1.000000e+00 : f32
    %cst_22 = arith.constant 0.000000e+00 : f32
    %32 = vector.broadcast %cst_21 : f32 to vector<2x16x16xf32>
    %33 = vector.broadcast %cst_22 : f32 to vector<2x16x16xf32>
    %34 = arith.select %31, %32, %33 : vector<2x16x16xi1>, vector<2x16x16xf32>
    %cst_23 = arith.constant 1.000000e+00 : f32
    %35 = vector.broadcast %cst_23 : f32 to vector<2x16x1xf32>
    %c0_24 = arith.constant 0 : index
    %c0_25 = arith.constant 0 : index
    %c0_26 = arith.constant 0 : index
    %36 = vector.load %arg0[%c0_24, %c0_25, %c0_26] : memref<2x16x32xf32, #tpu.memory_space<vmem>>, vector<2x16x32xf32>
    %37 = vector.shape_cast %36 : vector<2x16x32xf32> to vector<32x32xf32>
    %c0_27 = arith.constant 0 : index
    %c0_28 = arith.constant 0 : index
    %38 = vector.load %arg10[%c0_27, %c0_28] : memref<1x32xf32, #tpu.memory_space<vmem>>, vector<1x32xf32>
    %c0_29 = arith.constant 0 : index
    %c0_30 = arith.constant 0 : index
    %39 = vector.load %arg11[%c0_29, %c0_30] : memref<1x32xf32, #tpu.memory_space<vmem>>, vector<1x32xf32>
    %cst_31 = arith.constant dense<0.000000e+00> : vector<32xf32>
    %40 = vector.multi_reduction <add>, %37, %cst_31 [1] : vector<32x32xf32> to vector<32xf32>
    %41 = vector.shape_cast %40 : vector<32xf32> to vector<32x1xf32>
    %cst_32 = arith.constant 3.200000e+01 : f32
    %42 = vector.broadcast %cst_32 : f32 to vector<32x1xf32>
    %43 = arith.divf %41, %42 : vector<32x1xf32>
    %44 = vector.broadcast %43 : vector<32x1xf32> to vector<32x32xf32>
    %45 = arith.subf %37, %44 : vector<32x32xf32>
    %46 = arith.mulf %45, %45 : vector<32x32xf32>
    %cst_33 = arith.constant dense<0.000000e+00> : vector<32xf32>
    %47 = vector.multi_reduction <add>, %46, %cst_33 [1] : vector<32x32xf32> to vector<32xf32>
    %48 = vector.shape_cast %47 : vector<32xf32> to vector<32x1xf32>
    %cst_34 = arith.constant 3.200000e+01 : f32
    %49 = vector.broadcast %cst_34 : f32 to vector<32x1xf32>
    %50 = arith.divf %48, %49 : vector<32x1xf32>
    %51 = vector.broadcast %43 : vector<32x1xf32> to vector<32x32xf32>
    %52 = arith.subf %37, %51 : vector<32x32xf32>
    %cst_35 = arith.constant 9.99999974E-6 : f32
    %53 = vector.broadcast %cst_35 : f32 to vector<32x1xf32>
    %54 = arith.addf %50, %53 : vector<32x1xf32>
    %55 = math.rsqrt %54 : vector<32x1xf32>
    %56 = vector.broadcast %55 : vector<32x1xf32> to vector<32x32xf32>
    %57 = arith.mulf %52, %56 : vector<32x32xf32>
    %58 = vector.broadcast %38 : vector<1x32xf32> to vector<32x32xf32>
    %59 = arith.mulf %57, %58 : vector<32x32xf32>
    %60 = vector.broadcast %39 : vector<1x32xf32> to vector<32x32xf32>
    %61 = arith.addf %59, %60 : vector<32x32xf32>
    %c0_36 = arith.constant 0 : index
    %c0_37 = arith.constant 0 : index
    %62 = vector.load %arg12[%c0_36, %c0_37] : memref<32x64xf32, #tpu.memory_space<vmem>>, vector<32x64xf32>
    %cst_38 = arith.constant dense<0.000000e+00> : vector<32x64xf32>
    %63 = tpu.matmul %61, %62, %cst_38 {dimension_numbers = #tpu.dot_dimension_numbers<[1], [0], [0], [1], [0, 0, 1, 1], [], []>} : vector<32x32xf32>, vector<32x64xf32>, vector<32x64xf32> -> vector<32x64xf32>
    %c0_39 = arith.constant 0 : index
    %c0_40 = arith.constant 0 : index
    %64 = vector.load %arg13[%c0_39, %c0_40] : memref<1x64xf32, #tpu.memory_space<vmem>>, vector<1x64xf32>
    %65 = vector.broadcast %64 : vector<1x64xf32> to vector<32x64xf32>
    %66 = arith.addf %63, %65 : vector<32x64xf32>
    %67 = arith.negf %66 : vector<32x64xf32>
    %68 = math.exp %67 : vector<32x64xf32>
    %cst_41 = arith.constant 1.000000e+00 : f32
    %69 = vector.broadcast %cst_41 : f32 to vector<32x64xf32>
    %70 = arith.addf %69, %68 : vector<32x64xf32>
    %71 = arith.divf %69, %70 : vector<32x64xf32>
    %72 = arith.mulf %66, %71 : vector<32x64xf32>
    %c0_42 = arith.constant 0 : index
    %c0_43 = arith.constant 0 : index
    %73 = vector.load %arg14[%c0_42, %c0_43] : memref<64x32xf32, #tpu.memory_space<vmem>>, vector<64x32xf32>
    %cst_44 = arith.constant dense<0.000000e+00> : vector<32x32xf32>
    %74 = tpu.matmul %72, %73, %cst_44 {dimension_numbers = #tpu.dot_dimension_numbers<[1], [0], [0], [1], [0, 0, 1, 1], [], []>} : vector<32x64xf32>, vector<64x32xf32>, vector<32x32xf32> -> vector<32x32xf32>
    %c0_45 = arith.constant 0 : index
    %c0_46 = arith.constant 0 : index
    %75 = vector.load %arg15[%c0_45, %c0_46] : memref<1x32xf32, #tpu.memory_space<vmem>>, vector<1x32xf32>
    %76 = vector.broadcast %75 : vector<1x32xf32> to vector<32x32xf32>
    %77 = arith.addf %74, %76 : vector<32x32xf32>
    %cst_47 = arith.constant 5.000000e-01 : f32
    %78 = vector.broadcast %cst_47 : f32 to vector<32x32xf32>
    %79 = arith.mulf %77, %78 : vector<32x32xf32>
    %80 = arith.addf %79, %37 : vector<32x32xf32>
    %c0_48 = arith.constant 0 : index
    %c0_49 = arith.constant 0 : index
    %81 = vector.load %arg16[%c0_48, %c0_49] : memref<1x32xf32, #tpu.memory_space<vmem>>, vector<1x32xf32>
    %c0_50 = arith.constant 0 : index
    %c0_51 = arith.constant 0 : index
    %82 = vector.load %arg17[%c0_50, %c0_51] : memref<1x32xf32, #tpu.memory_space<vmem>>, vector<1x32xf32>
    %cst_52 = arith.constant dense<0.000000e+00> : vector<32xf32>
    %83 = vector.multi_reduction <add>, %80, %cst_52 [1] : vector<32x32xf32> to vector<32xf32>
    %84 = vector.shape_cast %83 : vector<32xf32> to vector<32x1xf32>
    %cst_53 = arith.constant 3.200000e+01 : f32
    %85 = vector.broadcast %cst_53 : f32 to vector<32x1xf32>
    %86 = arith.divf %84, %85 : vector<32x1xf32>
    %87 = vector.broadcast %86 : vector<32x1xf32> to vector<32x32xf32>
    %88 = arith.subf %80, %87 : vector<32x32xf32>
    %89 = arith.mulf %88, %88 : vector<32x32xf32>
    %cst_54 = arith.constant dense<0.000000e+00> : vector<32xf32>
    %90 = vector.multi_reduction <add>, %89, %cst_54 [1] : vector<32x32xf32> to vector<32xf32>
    %91 = vector.shape_cast %90 : vector<32xf32> to vector<32x1xf32>
    %cst_55 = arith.constant 3.200000e+01 : f32
    %92 = vector.broadcast %cst_55 : f32 to vector<32x1xf32>
    %93 = arith.divf %91, %92 : vector<32x1xf32>
    %94 = vector.broadcast %86 : vector<32x1xf32> to vector<32x32xf32>
    %95 = arith.subf %80, %94 : vector<32x32xf32>
    %cst_56 = arith.constant 9.99999974E-6 : f32
    %96 = vector.broadcast %cst_56 : f32 to vector<32x1xf32>
    %97 = arith.addf %93, %96 : vector<32x1xf32>
    %98 = math.rsqrt %97 : vector<32x1xf32>
    %99 = vector.broadcast %98 : vector<32x1xf32> to vector<32x32xf32>
    %100 = arith.mulf %95, %99 : vector<32x32xf32>
    %101 = vector.broadcast %81 : vector<1x32xf32> to vector<32x32xf32>
    %102 = arith.mulf %100, %101 : vector<32x32xf32>
    %103 = vector.broadcast %82 : vector<1x32xf32> to vector<32x32xf32>
    %104 = arith.addf %102, %103 : vector<32x32xf32>
    %c0_57 = arith.constant 0 : index
    %c0_58 = arith.constant 0 : index
    %105 = vector.load %arg18[%c0_57, %c0_58] : memref<32x32xf32, #tpu.memory_space<vmem>>, vector<32x32xf32>
    %cst_59 = arith.constant dense<0.000000e+00> : vector<32x32xf32>
    %106 = tpu.matmul %104, %105, %cst_59 {dimension_numbers = #tpu.dot_dimension_numbers<[1], [0], [0], [1], [0, 0, 1, 1], [], []>} : vector<32x32xf32>, vector<32x32xf32>, vector<32x32xf32> -> vector<32x32xf32>
    %c0_60 = arith.constant 0 : index
    %c0_61 = arith.constant 0 : index
    %107 = vector.load %arg19[%c0_60, %c0_61] : memref<1x32xf32, #tpu.memory_space<vmem>>, vector<1x32xf32>
    %108 = vector.broadcast %107 : vector<1x32xf32> to vector<32x32xf32>
    %109 = arith.addf %106, %108 : vector<32x32xf32>
    %110 = vector.shape_cast %109 : vector<32x32xf32> to vector<2x16x32xf32>
    %c0_62 = arith.constant 0 : index
    %c0_63 = arith.constant 0 : index
    %111 = vector.load %arg20[%c0_62, %c0_63] : memref<32x32xf32, #tpu.memory_space<vmem>>, vector<32x32xf32>
    %cst_64 = arith.constant dense<0.000000e+00> : vector<32x32xf32>
    %112 = tpu.matmul %104, %111, %cst_64 {dimension_numbers = #tpu.dot_dimension_numbers<[1], [0], [0], [1], [0, 0, 1, 1], [], []>} : vector<32x32xf32>, vector<32x32xf32>, vector<32x32xf32> -> vector<32x32xf32>
    %c0_65 = arith.constant 0 : index
    %c0_66 = arith.constant 0 : index
    %113 = vector.load %arg21[%c0_65, %c0_66] : memref<1x32xf32, #tpu.memory_space<vmem>>, vector<1x32xf32>
    %114 = vector.broadcast %113 : vector<1x32xf32> to vector<32x32xf32>
    %115 = arith.addf %112, %114 : vector<32x32xf32>
    %116 = vector.shape_cast %115 : vector<32x32xf32> to vector<2x16x32xf32>
    %c0_67 = arith.constant 0 : index
    %c0_68 = arith.constant 0 : index
    %117 = vector.load %arg22[%c0_67, %c0_68] : memref<32x32xf32, #tpu.memory_space<vmem>>, vector<32x32xf32>
    %cst_69 = arith.constant dense<0.000000e+00> : vector<32x32xf32>
    %118 = tpu.matmul %104, %117, %cst_69 {dimension_numbers = #tpu.dot_dimension_numbers<[1], [0], [0], [1], [0, 0, 1, 1], [], []>} : vector<32x32xf32>, vector<32x32xf32>, vector<32x32xf32> -> vector<32x32xf32>
    %c0_70 = arith.constant 0 : index
    %c0_71 = arith.constant 0 : index
    %119 = vector.load %arg23[%c0_70, %c0_71] : memref<1x32xf32, #tpu.memory_space<vmem>>, vector<1x32xf32>
    %120 = vector.broadcast %119 : vector<1x32xf32> to vector<32x32xf32>
    %121 = arith.addf %118, %120 : vector<32x32xf32>
    %122 = vector.shape_cast %121 : vector<32x32xf32> to vector<2x16x32xf32>
    "tpu.trace_start"() <{level = 10 : i32, message = "bjl,blo->bjo"}> : () -> ()
    %cst_72 = arith.constant dense<0.000000e+00> : vector<2x16x1xf32>
    %123 = tpu.matmul %13, %35, %cst_72 {dimension_numbers = #tpu.dot_dimension_numbers<[2], [1], [1], [2], [0, 0, 0, 1, 1, 2], [0], [0]>} : vector<2x16x16xf32>, vector<2x16x1xf32>, vector<2x16x1xf32> -> vector<2x16x1xf32>
    "tpu.trace_stop"() : () -> ()
    %124 = tpu.iota {dimensions = array<i32: 1>} : vector<2x16x1xi32>
    %c0_i32 = arith.constant 0 : i32
    %125 = vector.broadcast %c0_i32 : i32 to vector<2x16x1xi32>
    %126 = arith.cmpi eq, %124, %125 : vector<2x16x1xi32>
    %c0_73 = arith.constant 0 : index
    %c0_74 = arith.constant 0 : index
    %c0_75 = arith.constant 0 : index
    %127 = vector.load %arg9[%c0_73, %c0_74, %c0_75] : memref<2x1x1xf32, #tpu.memory_space<vmem>>, vector<2x1x1xf32>
    %128 = vector.broadcast %127 : vector<2x1x1xf32> to vector<2x16x1xf32>
    %129 = arith.mulf %123, %128 : vector<2x16x1xf32>
    %cst_76 = arith.constant 6.250000e-02 : f32
    %130 = vector.broadcast %cst_76 : f32 to vector<2x16x1xf32>
    %131 = arith.mulf %129, %130 : vector<2x16x1xf32>
    %cst_77 = arith.constant 1.000000e+00 : f32
    %132 = vector.broadcast %cst_77 : f32 to vector<2x16x1xf32>
    %133 = arith.select %126, %132, %131 : vector<2x16x1xi1>, vector<2x16x1xf32>
    %134 = vector.broadcast %133 : vector<2x16x1xf32> to vector<2x16x32xf32>
    %135 = arith.mulf %122, %134 : vector<2x16x32xf32>
    %c0_78 = arith.constant 0 : index
    %c0_79 = arith.constant 0 : index
    %c0_80 = arith.constant 0 : index
    %c0_81 = arith.constant 0 : index
    %136 = vector.load %arg1[%c0_78, %c0_79, %c0_80, %c0_81] : memref<4x2x16x16xf32, #tpu.memory_space<vmem>>, vector<4x2x16x16xf32>
    %137 = tpu.iota {dimensions = array<i32: 2>} : vector<1x1x16xi32>
    %c9_i32 = arith.constant 9 : i32
    %138 = vector.broadcast %c9_i32 : i32 to vector<1x1x16xi32>
    %139 = arith.cmpi slt, %137, %138 : vector<1x1x16xi32>
    %cst_82 = arith.constant 0.000000e+00 : f32
    %cst_83 = arith.constant -1.000000e+30 : f32
    %140 = vector.broadcast %cst_82 : f32 to vector<1x1x16xf32>
    %141 = vector.broadcast %cst_83 : f32 to vector<1x1x16xf32>
    %142 = arith.select %139, %140, %141 : vector<1x1x16xi1>, vector<1x1x16xf32>
    %143 = vector.extract_strided_slice %110 {offsets = [0, 0, 0], sizes = [2, 16, 8], strides = [1, 1, 1]} : vector<2x16x32xf32> to vector<2x16x8xf32>
    %144 = vector.extract_strided_slice %116 {offsets = [0, 0, 0], sizes = [2, 16, 8], strides = [1, 1, 1]} : vector<2x16x32xf32> to vector<2x16x8xf32>
    %145 = vector.extract_strided_slice %135 {offsets = [0, 0, 0], sizes = [2, 16, 8], strides = [1, 1, 1]} : vector<2x16x32xf32> to vector<2x16x8xf32>
    "tpu.trace_start"() <{level = 10 : i32, message = "bqd,bkd->bqk"}> : () -> ()
    %cst_84 = arith.constant dense<0.000000e+00> : vector<2x16x16xf32>
    %146 = tpu.matmul %143, %144, %cst_84 {dimension_numbers = #tpu.dot_dimension_numbers<[2], [2], [1], [1], [0, 0, 0, 1, 1, 1], [0], [0]>} : vector<2x16x8xf32>, vector<2x16x8xf32>, vector<2x16x16xf32> -> vector<2x16x16xf32>
    "tpu.trace_stop"() : () -> ()
    %cst_85 = arith.constant 0.353553385 : f32
    %147 = vector.broadcast %cst_85 : f32 to vector<2x16x16xf32>
    %148 = arith.mulf %146, %147 : vector<2x16x16xf32>
    %149 = vector.extract_strided_slice %136 {offsets = [0, 0, 0, 0], sizes = [1, 2, 16, 16], strides = [1, 1, 1, 1]} : vector<4x2x16x16xf32> to vector<1x2x16x16xf32>
    %150 = vector.shape_cast %149 : vector<1x2x16x16xf32> to vector<2x16x16xf32>
    %151 = arith.addf %148, %150 : vector<2x16x16xf32>
    %152 = vector.broadcast %142 : vector<1x1x16xf32> to vector<2x16x16xf32>
    %153 = arith.addf %151, %152 : vector<2x16x16xf32>
    %cst_86 = arith.constant dense<0xFF800000> : vector<2x16xf32>
    %154 = vector.multi_reduction <maximumf>, %153, %cst_86 [2] : vector<2x16x16xf32> to vector<2x16xf32>
    %155 = vector.shape_cast %154 : vector<2x16xf32> to vector<2x16x1xf32>
    %156 = vector.broadcast %155 : vector<2x16x1xf32> to vector<2x16x16xf32>
    %157 = arith.subf %153, %156 : vector<2x16x16xf32>
    %158 = math.exp %157 : vector<2x16x16xf32>
    %cst_87 = arith.constant dense<0.000000e+00> : vector<2x16xf32>
    %159 = vector.multi_reduction <add>, %158, %cst_87 [2] : vector<2x16x16xf32> to vector<2x16xf32>
    %160 = vector.shape_cast %159 : vector<2x16xf32> to vector<2x16x1xf32>
    %161 = vector.broadcast %160 : vector<2x16x1xf32> to vector<2x16x16xf32>
    %162 = arith.divf %158, %161 : vector<2x16x16xf32>
    "tpu.trace_start"() <{level = 10 : i32, message = "bqk,bkd->bqd"}> : () -> ()
    %cst_88 = arith.constant dense<0.000000e+00> : vector<2x16x8xf32>
    %163 = tpu.matmul %162, %145, %cst_88 {dimension_numbers = #tpu.dot_dimension_numbers<[2], [1], [1], [2], [0, 0, 0, 1, 1, 2], [0], [0]>} : vector<2x16x16xf32>, vector<2x16x8xf32>, vector<2x16x8xf32> -> vector<2x16x8xf32>
    "tpu.trace_stop"() : () -> ()
    %164 = vector.extract_strided_slice %110 {offsets = [0, 0, 8], sizes = [2, 16, 8], strides = [1, 1, 1]} : vector<2x16x32xf32> to vector<2x16x8xf32>
    %165 = vector.extract_strided_slice %116 {offsets = [0, 0, 8], sizes = [2, 16, 8], strides = [1, 1, 1]} : vector<2x16x32xf32> to vector<2x16x8xf32>
    %166 = vector.extract_strided_slice %135 {offsets = [0, 0, 8], sizes = [2, 16, 8], strides = [1, 1, 1]} : vector<2x16x32xf32> to vector<2x16x8xf32>
    "tpu.trace_start"() <{level = 10 : i32, message = "bqd,bkd->bqk"}> : () -> ()
    %cst_89 = arith.constant dense<0.000000e+00> : vector<2x16x16xf32>
    %167 = tpu.matmul %164, %165, %cst_89 {dimension_numbers = #tpu.dot_dimension_numbers<[2], [2], [1], [1], [0, 0, 0, 1, 1, 1], [0], [0]>} : vector<2x16x8xf32>, vector<2x16x8xf32>, vector<2x16x16xf32> -> vector<2x16x16xf32>
    "tpu.trace_stop"() : () -> ()
    %cst_90 = arith.constant 0.353553385 : f32
    %168 = vector.broadcast %cst_90 : f32 to vector<2x16x16xf32>
    %169 = arith.mulf %167, %168 : vector<2x16x16xf32>
    %170 = vector.extract_strided_slice %136 {offsets = [1, 0, 0, 0], sizes = [1, 2, 16, 16], strides = [1, 1, 1, 1]} : vector<4x2x16x16xf32> to vector<1x2x16x16xf32>
    %171 = vector.shape_cast %170 : vector<1x2x16x16xf32> to vector<2x16x16xf32>
    %172 = arith.addf %169, %171 : vector<2x16x16xf32>
    %173 = vector.broadcast %142 : vector<1x1x16xf32> to vector<2x16x16xf32>
    %174 = arith.addf %172, %173 : vector<2x16x16xf32>
    %cst_91 = arith.constant dense<0xFF800000> : vector<2x16xf32>
    %175 = vector.multi_reduction <maximumf>, %174, %cst_91 [2] : vector<2x16x16xf32> to vector<2x16xf32>
    %176 = vector.shape_cast %175 : vector<2x16xf32> to vector<2x16x1xf32>
    %177 = vector.broadcast %176 : vector<2x16x1xf32> to vector<2x16x16xf32>
    %178 = arith.subf %174, %177 : vector<2x16x16xf32>
    %179 = math.exp %178 : vector<2x16x16xf32>
    %cst_92 = arith.constant dense<0.000000e+00> : vector<2x16xf32>
    %180 = vector.multi_reduction <add>, %179, %cst_92 [2] : vector<2x16x16xf32> to vector<2x16xf32>
    %181 = vector.shape_cast %180 : vector<2x16xf32> to vector<2x16x1xf32>
    %182 = vector.broadcast %181 : vector<2x16x1xf32> to vector<2x16x16xf32>
    %183 = arith.divf %179, %182 : vector<2x16x16xf32>
    "tpu.trace_start"() <{level = 10 : i32, message = "bqk,bkd->bqd"}> : () -> ()
    %cst_93 = arith.constant dense<0.000000e+00> : vector<2x16x8xf32>
    %184 = tpu.matmul %183, %166, %cst_93 {dimension_numbers = #tpu.dot_dimension_numbers<[2], [1], [1], [2], [0, 0, 0, 1, 1, 2], [0], [0]>} : vector<2x16x16xf32>, vector<2x16x8xf32>, vector<2x16x8xf32> -> vector<2x16x8xf32>
    "tpu.trace_stop"() : () -> ()
    %185 = vector.extract_strided_slice %110 {offsets = [0, 0, 16], sizes = [2, 16, 8], strides = [1, 1, 1]} : vector<2x16x32xf32> to vector<2x16x8xf32>
    %186 = vector.extract_strided_slice %116 {offsets = [0, 0, 16], sizes = [2, 16, 8], strides = [1, 1, 1]} : vector<2x16x32xf32> to vector<2x16x8xf32>
    %187 = vector.extract_strided_slice %135 {offsets = [0, 0, 16], sizes = [2, 16, 8], strides = [1, 1, 1]} : vector<2x16x32xf32> to vector<2x16x8xf32>
    "tpu.trace_start"() <{level = 10 : i32, message = "bqd,bkd->bqk"}> : () -> ()
    %cst_94 = arith.constant dense<0.000000e+00> : vector<2x16x16xf32>
    %188 = tpu.matmul %185, %186, %cst_94 {dimension_numbers = #tpu.dot_dimension_numbers<[2], [2], [1], [1], [0, 0, 0, 1, 1, 1], [0], [0]>} : vector<2x16x8xf32>, vector<2x16x8xf32>, vector<2x16x16xf32> -> vector<2x16x16xf32>
    "tpu.trace_stop"() : () -> ()
    %cst_95 = arith.constant 0.353553385 : f32
    %189 = vector.broadcast %cst_95 : f32 to vector<2x16x16xf32>
    %190 = arith.mulf %188, %189 : vector<2x16x16xf32>
    %191 = vector.extract_strided_slice %136 {offsets = [2, 0, 0, 0], sizes = [1, 2, 16, 16], strides = [1, 1, 1, 1]} : vector<4x2x16x16xf32> to vector<1x2x16x16xf32>
    %192 = vector.shape_cast %191 : vector<1x2x16x16xf32> to vector<2x16x16xf32>
    %193 = arith.addf %190, %192 : vector<2x16x16xf32>
    %194 = vector.broadcast %142 : vector<1x1x16xf32> to vector<2x16x16xf32>
    %195 = arith.addf %193, %194 : vector<2x16x16xf32>
    %cst_96 = arith.constant dense<0xFF800000> : vector<2x16xf32>
    %196 = vector.multi_reduction <maximumf>, %195, %cst_96 [2] : vector<2x16x16xf32> to vector<2x16xf32>
    %197 = vector.shape_cast %196 : vector<2x16xf32> to vector<2x16x1xf32>
    %198 = vector.broadcast %197 : vector<2x16x1xf32> to vector<2x16x16xf32>
    %199 = arith.subf %195, %198 : vector<2x16x16xf32>
    %200 = math.exp %199 : vector<2x16x16xf32>
    %cst_97 = arith.constant dense<0.000000e+00> : vector<2x16xf32>
    %201 = vector.multi_reduction <add>, %200, %cst_97 [2] : vector<2x16x16xf32> to vector<2x16xf32>
    %202 = vector.shape_cast %201 : vector<2x16xf32> to vector<2x16x1xf32>
    %203 = vector.broadcast %202 : vector<2x16x1xf32> to vector<2x16x16xf32>
    %204 = arith.divf %200, %203 : vector<2x16x16xf32>
    "tpu.trace_start"() <{level = 10 : i32, message = "bqk,bkd->bqd"}> : () -> ()
    %cst_98 = arith.constant dense<0.000000e+00> : vector<2x16x8xf32>
    %205 = tpu.matmul %204, %187, %cst_98 {dimension_numbers = #tpu.dot_dimension_numbers<[2], [1], [1], [2], [0, 0, 0, 1, 1, 2], [0], [0]>} : vector<2x16x16xf32>, vector<2x16x8xf32>, vector<2x16x8xf32> -> vector<2x16x8xf32>
    "tpu.trace_stop"() : () -> ()
    %206 = vector.extract_strided_slice %110 {offsets = [0, 0, 24], sizes = [2, 16, 8], strides = [1, 1, 1]} : vector<2x16x32xf32> to vector<2x16x8xf32>
    %207 = vector.extract_strided_slice %116 {offsets = [0, 0, 24], sizes = [2, 16, 8], strides = [1, 1, 1]} : vector<2x16x32xf32> to vector<2x16x8xf32>
    %208 = vector.extract_strided_slice %135 {offsets = [0, 0, 24], sizes = [2, 16, 8], strides = [1, 1, 1]} : vector<2x16x32xf32> to vector<2x16x8xf32>
    "tpu.trace_start"() <{level = 10 : i32, message = "bqd,bkd->bqk"}> : () -> ()
    %cst_99 = arith.constant dense<0.000000e+00> : vector<2x16x16xf32>
    %209 = tpu.matmul %206, %207, %cst_99 {dimension_numbers = #tpu.dot_dimension_numbers<[2], [2], [1], [1], [0, 0, 0, 1, 1, 1], [0], [0]>} : vector<2x16x8xf32>, vector<2x16x8xf32>, vector<2x16x16xf32> -> vector<2x16x16xf32>
    "tpu.trace_stop"() : () -> ()
    %cst_100 = arith.constant 0.353553385 : f32
    %210 = vector.broadcast %cst_100 : f32 to vector<2x16x16xf32>
    %211 = arith.mulf %209, %210 : vector<2x16x16xf32>
    %212 = vector.extract_strided_slice %136 {offsets = [3, 0, 0, 0], sizes = [1, 2, 16, 16], strides = [1, 1, 1, 1]} : vector<4x2x16x16xf32> to vector<1x2x16x16xf32>
    %213 = vector.shape_cast %212 : vector<1x2x16x16xf32> to vector<2x16x16xf32>
    %214 = arith.addf %211, %213 : vector<2x16x16xf32>
    %215 = vector.broadcast %142 : vector<1x1x16xf32> to vector<2x16x16xf32>
    %216 = arith.addf %214, %215 : vector<2x16x16xf32>
    %cst_101 = arith.constant dense<0xFF800000> : vector<2x16xf32>
    %217 = vector.multi_reduction <maximumf>, %216, %cst_101 [2] : vector<2x16x16xf32> to vector<2x16xf32>
    %218 = vector.shape_cast %217 : vector<2x16xf32> to vector<2x16x1xf32>
    %219 = vector.broadcast %218 : vector<2x16x1xf32> to vector<2x16x16xf32>
    %220 = arith.subf %216, %219 : vector<2x16x16xf32>
    %221 = math.exp %220 : vector<2x16x16xf32>
    %cst_102 = arith.constant dense<0.000000e+00> : vector<2x16xf32>
    %222 = vector.multi_reduction <add>, %221, %cst_102 [2] : vector<2x16x16xf32> to vector<2x16xf32>
    %223 = vector.shape_cast %222 : vector<2x16xf32> to vector<2x16x1xf32>
    %224 = vector.broadcast %223 : vector<2x16x1xf32> to vector<2x16x16xf32>
    %225 = arith.divf %221, %224 : vector<2x16x16xf32>
    "tpu.trace_start"() <{level = 10 : i32, message = "bqk,bkd->bqd"}> : () -> ()
    %cst_103 = arith.constant dense<0.000000e+00> : vector<2x16x8xf32>
    %226 = tpu.matmul %225, %208, %cst_103 {dimension_numbers = #tpu.dot_dimension_numbers<[2], [1], [1], [2], [0, 0, 0, 1, 1, 2], [0], [0]>} : vector<2x16x16xf32>, vector<2x16x8xf32>, vector<2x16x8xf32> -> vector<2x16x8xf32>
    "tpu.trace_stop"() : () -> ()
    %227 = tpu.concatenate %163, %184, %205, %226 in 2 : vector<2x16x8xf32>, vector<2x16x8xf32>, vector<2x16x8xf32>, vector<2x16x8xf32> -> vector<2x16x32xf32>
    %228 = vector.shape_cast %227 : vector<2x16x32xf32> to vector<32x32xf32>
    %c0_104 = arith.constant 0 : index
    %c0_105 = arith.constant 0 : index
    %229 = vector.load %arg24[%c0_104, %c0_105] : memref<32x32xf32, #tpu.memory_space<vmem>>, vector<32x32xf32>
    %cst_106 = arith.constant dense<0.000000e+00> : vector<32x32xf32>
    %230 = tpu.matmul %228, %229, %cst_106 {dimension_numbers = #tpu.dot_dimension_numbers<[1], [0], [0], [1], [0, 0, 1, 1], [], []>} : vector<32x32xf32>, vector<32x32xf32>, vector<32x32xf32> -> vector<32x32xf32>
    %c0_107 = arith.constant 0 : index
    %c0_108 = arith.constant 0 : index
    %231 = vector.load %arg25[%c0_107, %c0_108] : memref<1x32xf32, #tpu.memory_space<vmem>>, vector<1x32xf32>
    %232 = vector.broadcast %231 : vector<1x32xf32> to vector<32x32xf32>
    %233 = arith.addf %230, %232 : vector<32x32xf32>
    %234 = arith.addf %233, %80 : vector<32x32xf32>
    %c0_109 = arith.constant 0 : index
    %c0_110 = arith.constant 0 : index
    %235 = vector.load %arg26[%c0_109, %c0_110] : memref<1x32xf32, #tpu.memory_space<vmem>>, vector<1x32xf32>
    %c0_111 = arith.constant 0 : index
    %c0_112 = arith.constant 0 : index
    %236 = vector.load %arg27[%c0_111, %c0_112] : memref<1x32xf32, #tpu.memory_space<vmem>>, vector<1x32xf32>
    %cst_113 = arith.constant dense<0.000000e+00> : vector<32xf32>
    %237 = vector.multi_reduction <add>, %234, %cst_113 [1] : vector<32x32xf32> to vector<32xf32>
    %238 = vector.shape_cast %237 : vector<32xf32> to vector<32x1xf32>
    %cst_114 = arith.constant 3.200000e+01 : f32
    %239 = vector.broadcast %cst_114 : f32 to vector<32x1xf32>
    %240 = arith.divf %238, %239 : vector<32x1xf32>
    %241 = vector.broadcast %240 : vector<32x1xf32> to vector<32x32xf32>
    %242 = arith.subf %234, %241 : vector<32x32xf32>
    %243 = arith.mulf %242, %242 : vector<32x32xf32>
    %cst_115 = arith.constant dense<0.000000e+00> : vector<32xf32>
    %244 = vector.multi_reduction <add>, %243, %cst_115 [1] : vector<32x32xf32> to vector<32xf32>
    %245 = vector.shape_cast %244 : vector<32xf32> to vector<32x1xf32>
    %cst_116 = arith.constant 3.200000e+01 : f32
    %246 = vector.broadcast %cst_116 : f32 to vector<32x1xf32>
    %247 = arith.divf %245, %246 : vector<32x1xf32>
    %248 = vector.broadcast %240 : vector<32x1xf32> to vector<32x32xf32>
    %249 = arith.subf %234, %248 : vector<32x32xf32>
    %cst_117 = arith.constant 9.99999974E-6 : f32
    %250 = vector.broadcast %cst_117 : f32 to vector<32x1xf32>
    %251 = arith.addf %247, %250 : vector<32x1xf32>
    %252 = math.rsqrt %251 : vector<32x1xf32>
    %253 = vector.broadcast %252 : vector<32x1xf32> to vector<32x32xf32>
    %254 = arith.mulf %249, %253 : vector<32x32xf32>
    %255 = vector.broadcast %235 : vector<1x32xf32> to vector<32x32xf32>
    %256 = arith.mulf %254, %255 : vector<32x32xf32>
    %257 = vector.broadcast %236 : vector<1x32xf32> to vector<32x32xf32>
    %258 = arith.addf %256, %257 : vector<32x32xf32>
    %259 = vector.shape_cast %258 : vector<32x32xf32> to vector<2x16x32xf32>
    %260 = vector.extract_strided_slice %259 {offsets = [0, 0, 0], sizes = [2, 1, 32], strides = [1, 1, 1]} : vector<2x16x32xf32> to vector<2x1x32xf32>
    %261 = vector.shape_cast %260 : vector<2x1x32xf32> to vector<2x32xf32>
    "tpu.trace_start"() <{level = 10 : i32, message = "blj,bjh->blh"}> : () -> ()
    %cst_118 = arith.constant dense<0.000000e+00> : vector<2x16x32xf32>
    %262 = tpu.matmul %6, %259, %cst_118 {dimension_numbers = #tpu.dot_dimension_numbers<[2], [1], [1], [2], [0, 0, 0, 1, 1, 2], [0], [0]>} : vector<2x16x16xf32>, vector<2x16x32xf32>, vector<2x16x32xf32> -> vector<2x16x32xf32>
    "tpu.trace_stop"() : () -> ()
    %c0_119 = arith.constant 0 : index
    %c0_120 = arith.constant 0 : index
    %c0_121 = arith.constant 0 : index
    %263 = vector.load %arg2[%c0_119, %c0_120, %c0_121] : memref<2x16x8xf32, #tpu.memory_space<vmem>>, vector<2x16x8xf32>
    "tpu.trace_start"() <{level = 10 : i32, message = "ble,bef->blf"}> : () -> ()
    %cst_122 = arith.constant dense<0.000000e+00> : vector<2x16x8xf32>
    %264 = tpu.matmul %20, %263, %cst_122 {dimension_numbers = #tpu.dot_dimension_numbers<[2], [1], [1], [2], [0, 0, 0, 1, 1, 2], [0], [0]>} : vector<2x16x16xf32>, vector<2x16x8xf32>, vector<2x16x8xf32> -> vector<2x16x8xf32>
    %cst_123 = arith.constant dense<0.000000e+00> : vector<2x16x8xf32>
    %265 = tpu.matmul %27, %263, %cst_123 {dimension_numbers = #tpu.dot_dimension_numbers<[2], [1], [1], [2], [0, 0, 0, 1, 1, 2], [0], [0]>} : vector<2x16x16xf32>, vector<2x16x8xf32>, vector<2x16x8xf32> -> vector<2x16x8xf32>
    "tpu.trace_stop"() : () -> ()
    %c0_124 = arith.constant 0 : index
    %c0_125 = arith.constant 0 : index
    %c0_126 = arith.constant 0 : index
    %266 = vector.load %arg8[%c0_124, %c0_125, %c0_126] : memref<2x16x8xf32, #tpu.memory_space<vmem>>, vector<2x16x8xf32>
    %c0_127 = arith.constant 0 : index
    %c0_128 = arith.constant 0 : index
    %267 = vector.load %arg28[%c0_127, %c0_128] : memref<56x64xf32, #tpu.memory_space<vmem>>, vector<56x64xf32>
    %268 = vector.extract_strided_slice %267 {offsets = [0, 0], sizes = [32, 64], strides = [1, 1]} : vector<56x64xf32> to vector<32x64xf32>
    %269 = vector.extract_strided_slice %267 {offsets = [32, 0], sizes = [8, 64], strides = [1, 1]} : vector<56x64xf32> to vector<8x64xf32>
    %270 = vector.extract_strided_slice %267 {offsets = [40, 0], sizes = [8, 64], strides = [1, 1]} : vector<56x64xf32> to vector<8x64xf32>
    %271 = vector.extract_strided_slice %267 {offsets = [48, 0], sizes = [8, 64], strides = [1, 1]} : vector<56x64xf32> to vector<8x64xf32>
    %272 = vector.shape_cast %262 : vector<2x16x32xf32> to vector<32x32xf32>
    %cst_129 = arith.constant dense<0.000000e+00> : vector<32x64xf32>
    %273 = tpu.matmul %272, %268, %cst_129 {dimension_numbers = #tpu.dot_dimension_numbers<[1], [0], [0], [1], [0, 0, 1, 1], [], []>} : vector<32x32xf32>, vector<32x64xf32>, vector<32x64xf32> -> vector<32x64xf32>
    %274 = vector.shape_cast %264 : vector<2x16x8xf32> to vector<32x8xf32>
    %cst_130 = arith.constant dense<0.000000e+00> : vector<32x64xf32>
    %275 = tpu.matmul %274, %269, %cst_130 {dimension_numbers = #tpu.dot_dimension_numbers<[1], [0], [0], [1], [0, 0, 1, 1], [], []>} : vector<32x8xf32>, vector<8x64xf32>, vector<32x64xf32> -> vector<32x64xf32>
    %276 = arith.addf %273, %275 : vector<32x64xf32>
    %277 = vector.shape_cast %265 : vector<2x16x8xf32> to vector<32x8xf32>
    %cst_131 = arith.constant dense<0.000000e+00> : vector<32x64xf32>
    %278 = tpu.matmul %277, %270, %cst_131 {dimension_numbers = #tpu.dot_dimension_numbers<[1], [0], [0], [1], [0, 0, 1, 1], [], []>} : vector<32x8xf32>, vector<8x64xf32>, vector<32x64xf32> -> vector<32x64xf32>
    %279 = arith.addf %276, %278 : vector<32x64xf32>
    %280 = vector.shape_cast %266 : vector<2x16x8xf32> to vector<32x8xf32>
    %cst_132 = arith.constant dense<0.000000e+00> : vector<32x64xf32>
    %281 = tpu.matmul %280, %271, %cst_132 {dimension_numbers = #tpu.dot_dimension_numbers<[1], [0], [0], [1], [0, 0, 1, 1], [], []>} : vector<32x8xf32>, vector<8x64xf32>, vector<32x64xf32> -> vector<32x64xf32>
    %282 = arith.addf %279, %281 : vector<32x64xf32>
    %c0_133 = arith.constant 0 : index
    %c0_134 = arith.constant 0 : index
    %283 = vector.load %arg29[%c0_133, %c0_134] : memref<1x64xf32, #tpu.memory_space<vmem>>, vector<1x64xf32>
    %284 = vector.broadcast %283 : vector<1x64xf32> to vector<32x64xf32>
    %285 = arith.addf %282, %284 : vector<32x64xf32>
    %286 = vector.extract_strided_slice %285 {offsets = [0, 0], sizes = [32, 32], strides = [1, 1]} : vector<32x64xf32> to vector<32x32xf32>
    %287 = vector.extract_strided_slice %285 {offsets = [0, 32], sizes = [32, 32], strides = [1, 1]} : vector<32x64xf32> to vector<32x32xf32>
    %288 = arith.negf %287 : vector<32x32xf32>
    %289 = math.exp %288 : vector<32x32xf32>
    %cst_135 = arith.constant 1.000000e+00 : f32
    %290 = vector.broadcast %cst_135 : f32 to vector<32x32xf32>
    %291 = arith.addf %290, %289 : vector<32x32xf32>
    %292 = arith.divf %290, %291 : vector<32x32xf32>
    %293 = arith.mulf %286, %292 : vector<32x32xf32>
    %c0_136 = arith.constant 0 : index
    %c0_137 = arith.constant 0 : index
    %294 = vector.load %arg30[%c0_136, %c0_137] : memref<3x32xf32, #tpu.memory_space<vmem>>, vector<3x32xf32>
    %295 = vector.extract_strided_slice %294 {offsets = [0, 0], sizes = [1, 32], strides = [1, 1]} : vector<3x32xf32> to vector<1x32xf32>
    %296 = vector.broadcast %295 : vector<1x32xf32> to vector<32x32xf32>
    %297 = arith.mulf %293, %296 : vector<32x32xf32>
    %c31_i32 = arith.constant 31 : i32
    %298 = tpu.dynamic_rotate %293 by %c31_i32 dim 0 : vector<32x32xf32>, i32 -> vector<32x32xf32>
    %299 = vector.extract_strided_slice %294 {offsets = [1, 0], sizes = [1, 32], strides = [1, 1]} : vector<3x32xf32> to vector<1x32xf32>
    %300 = vector.broadcast %299 : vector<1x32xf32> to vector<32x32xf32>
    %301 = arith.mulf %298, %300 : vector<32x32xf32>
    %302 = arith.addf %297, %301 : vector<32x32xf32>
    %c30_i32 = arith.constant 30 : i32
    %303 = tpu.dynamic_rotate %293 by %c30_i32 dim 0 : vector<32x32xf32>, i32 -> vector<32x32xf32>
    %304 = vector.extract_strided_slice %294 {offsets = [2, 0], sizes = [1, 32], strides = [1, 1]} : vector<3x32xf32> to vector<1x32xf32>
    %305 = vector.broadcast %304 : vector<1x32xf32> to vector<32x32xf32>
    %306 = arith.mulf %303, %305 : vector<32x32xf32>
    %307 = arith.addf %302, %306 : vector<32x32xf32>
    %308 = tpu.iota {dimensions = array<i32: 1>} : vector<2x16x1xi32>
    %c14_i32 = arith.constant 14 : i32
    %309 = vector.broadcast %c14_i32 : i32 to vector<2x16x1xi32>
    %310 = arith.cmpi slt, %308, %309 : vector<2x16x1xi32>
    %cst_138 = arith.constant 1.000000e+00 : f32
    %cst_139 = arith.constant 0.000000e+00 : f32
    %311 = vector.broadcast %cst_138 : f32 to vector<2x16x1xf32>
    %312 = vector.broadcast %cst_139 : f32 to vector<2x16x1xf32>
    %313 = arith.select %310, %311, %312 : vector<2x16x1xi1>, vector<2x16x1xf32>
    %314 = vector.shape_cast %313 : vector<2x16x1xf32> to vector<32x1xf32>
    %315 = vector.broadcast %314 : vector<32x1xf32> to vector<32x32xf32>
    %316 = arith.mulf %307, %315 : vector<32x32xf32>
    %cst_140 = arith.constant dense<0.000000e+00> : vector<32xf32>
    %317 = vector.multi_reduction <add>, %316, %cst_140 [0] : vector<32x32xf32> to vector<32xf32>
    %318 = vector.shape_cast %317 : vector<32xf32> to vector<1x32xf32>
    %cst_141 = arith.constant 0.0357142873 : f32
    %319 = vector.broadcast %cst_141 : f32 to vector<1x32xf32>
    %320 = arith.mulf %318, %319 : vector<1x32xf32>
    %321 = vector.broadcast %320 : vector<1x32xf32> to vector<32x32xf32>
    %322 = arith.subf %307, %321 : vector<32x32xf32>
    %323 = vector.broadcast %314 : vector<32x1xf32> to vector<32x32xf32>
    %324 = arith.mulf %322, %323 : vector<32x32xf32>
    %325 = arith.mulf %324, %324 : vector<32x32xf32>
    %cst_142 = arith.constant dense<0.000000e+00> : vector<32xf32>
    %326 = vector.multi_reduction <add>, %325, %cst_142 [0] : vector<32x32xf32> to vector<32xf32>
    %327 = vector.shape_cast %326 : vector<32xf32> to vector<1x32xf32>
    %cst_143 = arith.constant 0.0357142873 : f32
    %328 = vector.broadcast %cst_143 : f32 to vector<1x32xf32>
    %329 = arith.mulf %327, %328 : vector<1x32xf32>
    %330 = vector.broadcast %320 : vector<1x32xf32> to vector<32x32xf32>
    %331 = arith.subf %307, %330 : vector<32x32xf32>
    %cst_144 = arith.constant 9.99999974E-6 : f32
    %332 = vector.broadcast %cst_144 : f32 to vector<1x32xf32>
    %333 = arith.addf %329, %332 : vector<1x32xf32>
    %334 = math.rsqrt %333 : vector<1x32xf32>
    %335 = vector.broadcast %334 : vector<1x32xf32> to vector<32x32xf32>
    %336 = arith.mulf %331, %335 : vector<32x32xf32>
    %c0_145 = arith.constant 0 : index
    %c0_146 = arith.constant 0 : index
    %337 = vector.load %arg31[%c0_145, %c0_146] : memref<1x32xf32, #tpu.memory_space<vmem>>, vector<1x32xf32>
    %338 = vector.broadcast %337 : vector<1x32xf32> to vector<32x32xf32>
    %339 = arith.mulf %336, %338 : vector<32x32xf32>
    %c0_147 = arith.constant 0 : index
    %c0_148 = arith.constant 0 : index
    %340 = vector.load %arg32[%c0_147, %c0_148] : memref<1x32xf32, #tpu.memory_space<vmem>>, vector<1x32xf32>
    %341 = vector.broadcast %340 : vector<1x32xf32> to vector<32x32xf32>
    %342 = arith.addf %339, %341 : vector<32x32xf32>
    %343 = arith.negf %342 : vector<32x32xf32>
    %344 = math.exp %343 : vector<32x32xf32>
    %cst_149 = arith.constant 1.000000e+00 : f32
    %345 = vector.broadcast %cst_149 : f32 to vector<32x32xf32>
    %346 = arith.addf %345, %344 : vector<32x32xf32>
    %347 = arith.divf %345, %346 : vector<32x32xf32>
    %348 = arith.mulf %342, %347 : vector<32x32xf32>
    %c0_150 = arith.constant 0 : index
    %c0_151 = arith.constant 0 : index
    %349 = vector.load %arg33[%c0_150, %c0_151] : memref<32x32xf32, #tpu.memory_space<vmem>>, vector<32x32xf32>
    %cst_152 = arith.constant dense<0.000000e+00> : vector<32x32xf32>
    %350 = tpu.matmul %348, %349, %cst_152 {dimension_numbers = #tpu.dot_dimension_numbers<[1], [0], [0], [1], [0, 0, 1, 1], [], []>} : vector<32x32xf32>, vector<32x32xf32>, vector<32x32xf32> -> vector<32x32xf32>
    %c0_153 = arith.constant 0 : index
    %c0_154 = arith.constant 0 : index
    %351 = vector.load %arg34[%c0_153, %c0_154] : memref<1x32xf32, #tpu.memory_space<vmem>>, vector<1x32xf32>
    %352 = vector.broadcast %351 : vector<1x32xf32> to vector<32x32xf32>
    %353 = arith.addf %350, %352 : vector<32x32xf32>
    %354 = vector.shape_cast %353 : vector<32x32xf32> to vector<2x16x32xf32>
    "tpu.trace_start"() <{level = 10 : i32, message = "bjl,blh->bjh"}> : () -> ()
    %cst_155 = arith.constant dense<0.000000e+00> : vector<2x16x32xf32>
    %355 = tpu.matmul %34, %354, %cst_155 {dimension_numbers = #tpu.dot_dimension_numbers<[2], [1], [1], [2], [0, 0, 0, 1, 1, 2], [0], [0]>} : vector<2x16x16xf32>, vector<2x16x32xf32>, vector<2x16x32xf32> -> vector<2x16x32xf32>
    "tpu.trace_stop"() : () -> ()
    "tpu.trace_start"() <{level = 10 : i32, message = "bjl,blo->bjo"}> : () -> ()
    %cst_156 = arith.constant dense<0.000000e+00> : vector<2x16x1xf32>
    %356 = tpu.matmul %34, %35, %cst_156 {dimension_numbers = #tpu.dot_dimension_numbers<[2], [1], [1], [2], [0, 0, 0, 1, 1, 2], [0], [0]>} : vector<2x16x16xf32>, vector<2x16x1xf32>, vector<2x16x1xf32> -> vector<2x16x1xf32>
    "tpu.trace_stop"() : () -> ()
    %cst_157 = arith.constant 1.000000e+00 : f32
    %357 = vector.broadcast %cst_157 : f32 to vector<2x16x1xf32>
    %358 = arith.maximumf %356, %357 : vector<2x16x1xf32>
    %359 = vector.broadcast %358 : vector<2x16x1xf32> to vector<2x16x32xf32>
    %360 = arith.divf %355, %359 : vector<2x16x32xf32>
    %cst_158 = arith.constant dense<0.000000e+00> : vector<2x32xf32>
    %361 = vector.multi_reduction <add>, %360, %cst_158 [1] : vector<2x16x32xf32> to vector<2x32xf32>
    %362 = arith.addf %261, %361 : vector<2x32xf32>
    %c0_159 = arith.constant 0 : index
    %c0_160 = arith.constant 0 : index
    %363 = vector.load %arg35[%c0_159, %c0_160] : memref<32x32xf32, #tpu.memory_space<vmem>>, vector<32x32xf32>
    %cst_161 = arith.constant dense<0.000000e+00> : vector<2x32xf32>
    %364 = tpu.matmul %362, %363, %cst_161 {dimension_numbers = #tpu.dot_dimension_numbers<[1], [0], [0], [1], [0, 0, 1, 1], [], []>} : vector<2x32xf32>, vector<32x32xf32>, vector<2x32xf32> -> vector<2x32xf32>
    %cst_162 = arith.constant dense<0.000000e+00> : vector<32xf32>
    %365 = vector.multi_reduction <add>, %364, %cst_162 [0] : vector<2x32xf32> to vector<32xf32>
    %366 = vector.shape_cast %365 : vector<32xf32> to vector<1x32xf32>
    %cst_163 = arith.constant 2.000000e+00 : f32
    %367 = vector.broadcast %cst_163 : f32 to vector<1x32xf32>
    %368 = arith.divf %366, %367 : vector<1x32xf32>
    %369 = vector.broadcast %368 : vector<1x32xf32> to vector<2x32xf32>
    %370 = arith.subf %364, %369 : vector<2x32xf32>
    %371 = arith.mulf %370, %370 : vector<2x32xf32>
    %cst_164 = arith.constant dense<0.000000e+00> : vector<32xf32>
    %372 = vector.multi_reduction <add>, %371, %cst_164 [0] : vector<2x32xf32> to vector<32xf32>
    %373 = vector.shape_cast %372 : vector<32xf32> to vector<1x32xf32>
    %cst_165 = arith.constant 2.000000e+00 : f32
    %374 = vector.broadcast %cst_165 : f32 to vector<1x32xf32>
    %375 = arith.divf %373, %374 : vector<1x32xf32>
    %376 = vector.broadcast %368 : vector<1x32xf32> to vector<2x32xf32>
    %377 = arith.subf %364, %376 : vector<2x32xf32>
    %cst_166 = arith.constant 9.99999974E-6 : f32
    %378 = vector.broadcast %cst_166 : f32 to vector<1x32xf32>
    %379 = arith.addf %375, %378 : vector<1x32xf32>
    %380 = math.rsqrt %379 : vector<1x32xf32>
    %381 = vector.broadcast %380 : vector<1x32xf32> to vector<2x32xf32>
    %382 = arith.mulf %377, %381 : vector<2x32xf32>
    %c0_167 = arith.constant 0 : index
    %c0_168 = arith.constant 0 : index
    %383 = vector.load %arg36[%c0_167, %c0_168] : memref<1x32xf32, #tpu.memory_space<vmem>>, vector<1x32xf32>
    %384 = vector.broadcast %383 : vector<1x32xf32> to vector<2x32xf32>
    %385 = arith.mulf %382, %384 : vector<2x32xf32>
    %c0_169 = arith.constant 0 : index
    %c0_170 = arith.constant 0 : index
    %386 = vector.load %arg37[%c0_169, %c0_170] : memref<1x32xf32, #tpu.memory_space<vmem>>, vector<1x32xf32>
    %387 = vector.broadcast %386 : vector<1x32xf32> to vector<2x32xf32>
    %388 = arith.addf %385, %387 : vector<2x32xf32>
    %cst_171 = arith.constant 0.000000e+00 : f32
    %389 = vector.broadcast %cst_171 : f32 to vector<2x32xf32>
    %390 = arith.maximumf %388, %389 : vector<2x32xf32>
    %c0_172 = arith.constant 0 : index
    %c0_173 = arith.constant 0 : index
    %391 = vector.load %arg38[%c0_172, %c0_173] : memref<32x32xf32, #tpu.memory_space<vmem>>, vector<32x32xf32>
    %cst_174 = arith.constant dense<0.000000e+00> : vector<2x32xf32>
    %392 = tpu.matmul %390, %391, %cst_174 {dimension_numbers = #tpu.dot_dimension_numbers<[1], [0], [0], [1], [0, 0, 1, 1], [], []>} : vector<2x32xf32>, vector<32x32xf32>, vector<2x32xf32> -> vector<2x32xf32>
    %393 = vector.shape_cast %392 : vector<2x32xf32> to vector<2x1x32xf32>
    %394 = vector.broadcast %393 : vector<2x1x32xf32> to vector<2x16x32xf32>
    %395 = arith.addf %360, %394 : vector<2x16x32xf32>
    %396 = vector.shape_cast %395 : vector<2x16x32xf32> to vector<32x32xf32>
    %397 = arith.addf %234, %396 : vector<32x32xf32>
    %c0_175 = arith.constant 0 : index
    %c0_176 = arith.constant 0 : index
    %398 = vector.load %arg39[%c0_175, %c0_176] : memref<1x32xf32, #tpu.memory_space<vmem>>, vector<1x32xf32>
    %c0_177 = arith.constant 0 : index
    %c0_178 = arith.constant 0 : index
    %399 = vector.load %arg40[%c0_177, %c0_178] : memref<1x32xf32, #tpu.memory_space<vmem>>, vector<1x32xf32>
    %cst_179 = arith.constant dense<0.000000e+00> : vector<32xf32>
    %400 = vector.multi_reduction <add>, %397, %cst_179 [1] : vector<32x32xf32> to vector<32xf32>
    %401 = vector.shape_cast %400 : vector<32xf32> to vector<32x1xf32>
    %cst_180 = arith.constant 3.200000e+01 : f32
    %402 = vector.broadcast %cst_180 : f32 to vector<32x1xf32>
    %403 = arith.divf %401, %402 : vector<32x1xf32>
    %404 = vector.broadcast %403 : vector<32x1xf32> to vector<32x32xf32>
    %405 = arith.subf %397, %404 : vector<32x32xf32>
    %406 = arith.mulf %405, %405 : vector<32x32xf32>
    %cst_181 = arith.constant dense<0.000000e+00> : vector<32xf32>
    %407 = vector.multi_reduction <add>, %406, %cst_181 [1] : vector<32x32xf32> to vector<32xf32>
    %408 = vector.shape_cast %407 : vector<32xf32> to vector<32x1xf32>
    %cst_182 = arith.constant 3.200000e+01 : f32
    %409 = vector.broadcast %cst_182 : f32 to vector<32x1xf32>
    %410 = arith.divf %408, %409 : vector<32x1xf32>
    %411 = vector.broadcast %403 : vector<32x1xf32> to vector<32x32xf32>
    %412 = arith.subf %397, %411 : vector<32x32xf32>
    %cst_183 = arith.constant 9.99999974E-6 : f32
    %413 = vector.broadcast %cst_183 : f32 to vector<32x1xf32>
    %414 = arith.addf %410, %413 : vector<32x1xf32>
    %415 = math.rsqrt %414 : vector<32x1xf32>
    %416 = vector.broadcast %415 : vector<32x1xf32> to vector<32x32xf32>
    %417 = arith.mulf %412, %416 : vector<32x32xf32>
    %418 = vector.broadcast %398 : vector<1x32xf32> to vector<32x32xf32>
    %419 = arith.mulf %417, %418 : vector<32x32xf32>
    %420 = vector.broadcast %399 : vector<1x32xf32> to vector<32x32xf32>
    %421 = arith.addf %419, %420 : vector<32x32xf32>
    %c0_184 = arith.constant 0 : index
    %c0_185 = arith.constant 0 : index
    %422 = vector.load %arg41[%c0_184, %c0_185] : memref<32x64xf32, #tpu.memory_space<vmem>>, vector<32x64xf32>
    %cst_186 = arith.constant dense<0.000000e+00> : vector<32x64xf32>
    %423 = tpu.matmul %421, %422, %cst_186 {dimension_numbers = #tpu.dot_dimension_numbers<[1], [0], [0], [1], [0, 0, 1, 1], [], []>} : vector<32x32xf32>, vector<32x64xf32>, vector<32x64xf32> -> vector<32x64xf32>
    %c0_187 = arith.constant 0 : index
    %c0_188 = arith.constant 0 : index
    %424 = vector.load %arg42[%c0_187, %c0_188] : memref<1x64xf32, #tpu.memory_space<vmem>>, vector<1x64xf32>
    %425 = vector.broadcast %424 : vector<1x64xf32> to vector<32x64xf32>
    %426 = arith.addf %423, %425 : vector<32x64xf32>
    %427 = arith.negf %426 : vector<32x64xf32>
    %428 = math.exp %427 : vector<32x64xf32>
    %cst_189 = arith.constant 1.000000e+00 : f32
    %429 = vector.broadcast %cst_189 : f32 to vector<32x64xf32>
    %430 = arith.addf %429, %428 : vector<32x64xf32>
    %431 = arith.divf %429, %430 : vector<32x64xf32>
    %432 = arith.mulf %426, %431 : vector<32x64xf32>
    %c0_190 = arith.constant 0 : index
    %c0_191 = arith.constant 0 : index
    %433 = vector.load %arg43[%c0_190, %c0_191] : memref<64x32xf32, #tpu.memory_space<vmem>>, vector<64x32xf32>
    %cst_192 = arith.constant dense<0.000000e+00> : vector<32x32xf32>
    %434 = tpu.matmul %432, %433, %cst_192 {dimension_numbers = #tpu.dot_dimension_numbers<[1], [0], [0], [1], [0, 0, 1, 1], [], []>} : vector<32x64xf32>, vector<64x32xf32>, vector<32x32xf32> -> vector<32x32xf32>
    %c0_193 = arith.constant 0 : index
    %c0_194 = arith.constant 0 : index
    %435 = vector.load %arg44[%c0_193, %c0_194] : memref<1x32xf32, #tpu.memory_space<vmem>>, vector<1x32xf32>
    %436 = vector.broadcast %435 : vector<1x32xf32> to vector<32x32xf32>
    %437 = arith.addf %434, %436 : vector<32x32xf32>
    %cst_195 = arith.constant 5.000000e-01 : f32
    %438 = vector.broadcast %cst_195 : f32 to vector<32x32xf32>
    %439 = arith.mulf %437, %438 : vector<32x32xf32>
    %440 = arith.addf %439, %397 : vector<32x32xf32>
    %c0_196 = arith.constant 0 : index
    %c0_197 = arith.constant 0 : index
    %441 = vector.load %arg45[%c0_196, %c0_197] : memref<1x32xf32, #tpu.memory_space<vmem>>, vector<1x32xf32>
    %c0_198 = arith.constant 0 : index
    %c0_199 = arith.constant 0 : index
    %442 = vector.load %arg46[%c0_198, %c0_199] : memref<1x32xf32, #tpu.memory_space<vmem>>, vector<1x32xf32>
    %cst_200 = arith.constant dense<0.000000e+00> : vector<32xf32>
    %443 = vector.multi_reduction <add>, %440, %cst_200 [1] : vector<32x32xf32> to vector<32xf32>
    %444 = vector.shape_cast %443 : vector<32xf32> to vector<32x1xf32>
    %cst_201 = arith.constant 3.200000e+01 : f32
    %445 = vector.broadcast %cst_201 : f32 to vector<32x1xf32>
    %446 = arith.divf %444, %445 : vector<32x1xf32>
    %447 = vector.broadcast %446 : vector<32x1xf32> to vector<32x32xf32>
    %448 = arith.subf %440, %447 : vector<32x32xf32>
    %449 = arith.mulf %448, %448 : vector<32x32xf32>
    %cst_202 = arith.constant dense<0.000000e+00> : vector<32xf32>
    %450 = vector.multi_reduction <add>, %449, %cst_202 [1] : vector<32x32xf32> to vector<32xf32>
    %451 = vector.shape_cast %450 : vector<32xf32> to vector<32x1xf32>
    %cst_203 = arith.constant 3.200000e+01 : f32
    %452 = vector.broadcast %cst_203 : f32 to vector<32x1xf32>
    %453 = arith.divf %451, %452 : vector<32x1xf32>
    %454 = vector.broadcast %446 : vector<32x1xf32> to vector<32x32xf32>
    %455 = arith.subf %440, %454 : vector<32x32xf32>
    %cst_204 = arith.constant 9.99999974E-6 : f32
    %456 = vector.broadcast %cst_204 : f32 to vector<32x1xf32>
    %457 = arith.addf %453, %456 : vector<32x1xf32>
    %458 = math.rsqrt %457 : vector<32x1xf32>
    %459 = vector.broadcast %458 : vector<32x1xf32> to vector<32x32xf32>
    %460 = arith.mulf %455, %459 : vector<32x32xf32>
    %461 = vector.broadcast %441 : vector<1x32xf32> to vector<32x32xf32>
    %462 = arith.mulf %460, %461 : vector<32x32xf32>
    %463 = vector.broadcast %442 : vector<1x32xf32> to vector<32x32xf32>
    %464 = arith.addf %462, %463 : vector<32x32xf32>
    %465 = vector.shape_cast %464 : vector<32x32xf32> to vector<2x16x32xf32>
    %c0_205 = arith.constant 0 : index
    %c0_206 = arith.constant 0 : index
    %c0_207 = arith.constant 0 : index
    %466 = vector.load %arg47[%c0_205, %c0_206, %c0_207] : memref<2x16x32xf32, #tpu.memory_space<vmem>>, vector<2x16x32xf32>
    tpu.vector_store %arg47[%c0_205, %c0_206, %c0_207], %465 {strides = array<i32>} : memref<2x16x32xf32, #tpu.memory_space<vmem>>, vector<2x16x32xf32>,
    return
  }
}

</mosaic_0001>

<llo_original>
// kernel: conformer_block.1
$region0: #{conformer_block.1}
  #allocation0 [shape = 'u32[]', space=smem, size = 0x4, offset = 0x4, fixed_abs, tag = 'smem constant byte address 0x4 - core index']
  #allocation1 [shape = 'u32[72,128]{1,0:T(1,128)}', space=vmem, size = 0x9000, scoped, tag = 'internal scratch']
  %s0 = inlined_call_operand.smem [shape: u32[48], index: -1, kind: input, shape index: {}]
  %s1 = sld [smem:[%s0]]
  %s2 = scalar_lea.smem %s0, 1
  %s3 = sld [smem:[%s2]]
  %s4 = scalar_lea.smem %s0, 2
  %s5 = sld [smem:[%s4]]
  %s6 = scalar_lea.smem %s0, 3
  %s7 = sld [smem:[%s6]]
  %s8 = scalar_lea.smem %s0, 4
  %s9 = sld [smem:[%s8]]
  %s10 = scalar_lea.smem %s0, 5
  %s11 = sld [smem:[%s10]]
  %s12 = scalar_lea.smem %s0, 6
  %s13 = sld [smem:[%s12]]
  %s14 = scalar_lea.smem %s0, 7
  %s15 = sld [smem:[%s14]]
  %s16 = scalar_lea.smem %s0, 8
  %s17 = sld [smem:[%s16]]
  %s18 = scalar_lea.smem %s0, 9
  %s19 = sld [smem:[%s18]]
  %s20 = scalar_lea.smem %s0, 10
  %s21 = sld [smem:[%s20]]
  %s22 = scalar_lea.smem %s0, 11
  %s23 = sld [smem:[%s22]]
  %s24 = scalar_lea.smem %s0, 12
  %s25 = sld [smem:[%s24]]
  %s26 = scalar_lea.smem %s0, 13
  %s27 = sld [smem:[%s26]]
  %s28 = scalar_lea.smem %s0, 14
  %s29 = sld [smem:[%s28]]
  %s30 = scalar_lea.smem %s0, 15
  %s31 = sld [smem:[%s30]]
  %s32 = scalar_lea.smem %s0, 16
  %s33 = sld [smem:[%s32]]
  %s34 = scalar_lea.smem %s0, 17
  %s35 = sld [smem:[%s34]]
  %s36 = scalar_lea.smem %s0, 18
  %s37 = sld [smem:[%s36]]
  %s38 = scalar_lea.smem %s0, 19
  %s39 = sld [smem:[%s38]]
  %s40 = scalar_lea.smem %s0, 20
  %s41 = sld [smem:[%s40]]
  %s42 = scalar_lea.smem %s0, 21
  %s43 = sld [smem:[%s42]]
  %s44 = scalar_lea.smem %s0, 22
  %s45 = sld [smem:[%s44]]
  %s46 = scalar_lea.smem %s0, 23
  %s47 = sld [smem:[%s46]]
  %s48 = scalar_lea.smem %s0, 24
  %s49 = sld [smem:[%s48]]
  %s50 = scalar_lea.smem %s0, 25
  %s51 = sld [smem:[%s50]]
  %s52 = scalar_lea.smem %s0, 26
  %s53 = sld [smem:[%s52]]
  %s54 = scalar_lea.smem %s0, 27
  %s55 = sld [smem:[%s54]]
  %s56 = scalar_lea.smem %s0, 28
  %s57 = sld [smem:[%s56]]
  %s58 = scalar_lea.smem %s0, 29
  %s59 = sld [smem:[%s58]]
  %s60 = scalar_lea.smem %s0, 30
  %s61 = sld [smem:[%s60]]
  %s62 = scalar_lea.smem %s0, 31
  %s63 = sld [smem:[%s62]]
  %s64 = scalar_lea.smem %s0, 32
  %s65 = sld [smem:[%s64]]
  %s66 = scalar_lea.smem %s0, 33
  %s67 = sld [smem:[%s66]]
  %s68 = scalar_lea.smem %s0, 34
  %s69 = sld [smem:[%s68]]
  %s70 = scalar_lea.smem %s0, 35
  %s71 = sld [smem:[%s70]]
  %s72 = scalar_lea.smem %s0, 36
  %s73 = sld [smem:[%s72]]
  %s74 = scalar_lea.smem %s0, 37
  %s75 = sld [smem:[%s74]]
  %s76 = scalar_lea.smem %s0, 38
  %s77 = sld [smem:[%s76]]
  %s78 = scalar_lea.smem %s0, 39
  %s79 = sld [smem:[%s78]]
  %s80 = scalar_lea.smem %s0, 40
  %s81 = sld [smem:[%s80]]
  %s82 = scalar_lea.smem %s0, 41
  %s83 = sld [smem:[%s82]]
  %s84 = scalar_lea.smem %s0, 42
  %s85 = sld [smem:[%s84]]
  %s86 = scalar_lea.smem %s0, 43
  %s87 = sld [smem:[%s86]]
  %s88 = scalar_lea.smem %s0, 44
  %s89 = sld [smem:[%s88]]
  %s90 = scalar_lea.smem %s0, 45
  %s91 = sld [smem:[%s90]]
  %s92 = scalar_lea.smem %s0, 46
  %s93 = sld [smem:[%s92]]
  %s94 = scalar_lea.smem %s0, 47
  %s95 = sld [smem:[%s94]]
  %s96 = sld [smem:[#allocation0]]
  $region202: #{conformer_block.1} parent=0
    _
  %s98 = ssub.s32 1, %s96
  %s99 = scalar_select 0, %s98, %s96
  $region1: #{conformer_block.1} parent=0
    #allocation2 [shape = 'u8[512]{0}', space=vmem, size = 0x400, scoped, tag = 'input window, operand 46, single buffered']
    #allocation3 [shape = 's32[1]{0}', space=sflag, size = 0x4, scoped, tag = 'scoped memory for conformer_block.1']
    %100 = vsyncpa [#allocation3], 0
    // Predicated region
    $region2: #{conformer_block.1} parent=1 // pred_check
      _
    $region3: #{conformer_block.1} parent=1 // pred_check_branch
      %102 = sbr.rel (0) target = $region5
    $region4: #{conformer_block.1} parent=1 // pred_region
      _
    $region5: #{conformer_block.1} parent=1 // pred_fallthru
      _
    // Predicated region
    $region6: #{conformer_block.1} parent=1 // pred_check
      _
    $region7: #{conformer_block.1} parent=1 // pred_check_branch
      %104 = sbr.rel (0) target = $region9
    $region8: #{conformer_block.1} parent=1 // pred_region
      _
    $region9: #{conformer_block.1} parent=1 // pred_fallthru
      _
    // Predicated region
    $region10: #{conformer_block.1} parent=1 // pred_check
      _
    $region11: #{conformer_block.1} parent=1 // pred_check_branch
      %106 = sbr.rel (0) target = $region13
    $region12: #{conformer_block.1} parent=1 // pred_region
      _
    $region13: #{conformer_block.1} parent=1 // pred_fallthru
      _
    // Predicated region
    $region14: #{conformer_block.1} parent=1 // pred_check
      _
    $region15: #{conformer_block.1} parent=1 // pred_check_branch
      %108 = sbr.rel (0) target = $region17
    $region16: #{conformer_block.1} parent=1 // pred_region
      _
    $region17: #{conformer_block.1} parent=1 // pred_fallthru
      _
    // Predicated region
    $region18: #{conformer_block.1} parent=1 // pred_check
      _
    $region19: #{conformer_block.1} parent=1 // pred_check_branch
      %110 = sbr.rel (0) target = $region21
    $region20: #{conformer_block.1} parent=1 // pred_region
      _
    $region21: #{conformer_block.1} parent=1 // pred_fallthru
      _
    // Predicated region
    $region22: #{conformer_block.1} parent=1 // pred_check
      _
    $region23: #{conformer_block.1} parent=1 // pred_check_branch
      %112 = sbr.rel (0) target = $region25
    $region24: #{conformer_block.1} parent=1 // pred_region
      _
    $region25: #{conformer_block.1} parent=1 // pred_fallthru
      _
    // Predicated region
    $region26: #{conformer_block.1} parent=1 // pred_check
      _
    $region27: #{conformer_block.1} parent=1 // pred_check_branch
      %114 = sbr.rel (0) target = $region29
    $region28: #{conformer_block.1} parent=1 // pred_region
      _
    $region29: #{conformer_block.1} parent=1 // pred_fallthru
      _
    // Predicated region
    $region30: #{conformer_block.1} parent=1 // pred_check
      _
    $region31: #{conformer_block.1} parent=1 // pred_check_branch
      %116 = sbr.rel (0) target = $region33
    $region32: #{conformer_block.1} parent=1 // pred_region
      _
    $region33: #{conformer_block.1} parent=1 // pred_fallthru
      _
    // Predicated region
    $region34: #{conformer_block.1} parent=1 // pred_check
      _
    $region35: #{conformer_block.1} parent=1 // pred_check_branch
      %118 = sbr.rel (0) target = $region37
    $region36: #{conformer_block.1} parent=1 // pred_region
      _
    $region37: #{conformer_block.1} parent=1 // pred_fallthru
      _
    // Predicated region
    $region38: #{conformer_block.1} parent=1 // pred_check
      _
    $region39: #{conformer_block.1} parent=1 // pred_check_branch
      %120 = sbr.rel (0) target = $region41
    $region40: #{conformer_block.1} parent=1 // pred_region
      _
    $region41: #{conformer_block.1} parent=1 // pred_fallthru
      _
    // Predicated region
    $region42: #{conformer_block.1} parent=1 // pred_check
      _
    $region43: #{conformer_block.1} parent=1 // pred_check_branch
      %122 = sbr.rel (0) target = $region45
    $region44: #{conformer_block.1} parent=1 // pred_region
      _
    $region45: #{conformer_block.1} parent=1 // pred_fallthru
      _
    // Predicated region
    $region46: #{conformer_block.1} parent=1 // pred_check
      _
    $region47: #{conformer_block.1} parent=1 // pred_check_branch
      %124 = sbr.rel (0) target = $region49
    $region48: #{conformer_block.1} parent=1 // pred_region
      _
    $region49: #{conformer_block.1} parent=1 // pred_fallthru
      _
    // Predicated region
    $region50: #{conformer_block.1} parent=1 // pred_check
      _
    $region51: #{conformer_block.1} parent=1 // pred_check_branch
      %126 = sbr.rel (0) target = $region53
    $region52: #{conformer_block.1} parent=1 // pred_region
      _
    $region53: #{conformer_block.1} parent=1 // pred_fallthru
      _
    // Predicated region
    $region54: #{conformer_block.1} parent=1 // pred_check
      _
    $region55: #{conformer_block.1} parent=1 // pred_check_branch
      %128 = sbr.rel (0) target = $region57
    $region56: #{conformer_block.1} parent=1 // pred_region
      _
    $region57: #{conformer_block.1} parent=1 // pred_fallthru
      _
    // Predicated region
    $region58: #{conformer_block.1} parent=1 // pred_check
      _
    $region59: #{conformer_block.1} parent=1 // pred_check_branch
      %130 = sbr.rel (0) target = $region61
    $region60: #{conformer_block.1} parent=1 // pred_region
      _
    $region61: #{conformer_block.1} parent=1 // pred_fallthru
      _
    // Predicated region
    $region62: #{conformer_block.1} parent=1 // pred_check
      _
    $region63: #{conformer_block.1} parent=1 // pred_check_branch
      %132 = sbr.rel (0) target = $region65
    $region64: #{conformer_block.1} parent=1 // pred_region
      _
    $region65: #{conformer_block.1} parent=1 // pred_fallthru
      _
    // Predicated region
    $region66: #{conformer_block.1} parent=1 // pred_check
      _
    $region67: #{conformer_block.1} parent=1 // pred_check_branch
      %134 = sbr.rel (0) target = $region69
    $region68: #{conformer_block.1} parent=1 // pred_region
      _
    $region69: #{conformer_block.1} parent=1 // pred_fallthru
      _
    // Predicated region
    $region70: #{conformer_block.1} parent=1 // pred_check
      _
    $region71: #{conformer_block.1} parent=1 // pred_check_branch
      %136 = sbr.rel (0) target = $region73
    $region72: #{conformer_block.1} parent=1 // pred_region
      _
    $region73: #{conformer_block.1} parent=1 // pred_fallthru
      _
    // Predicated region
    $region74: #{conformer_block.1} parent=1 // pred_check
      _
    $region75: #{conformer_block.1} parent=1 // pred_check_branch
      %138 = sbr.rel (0) target = $region77
    $region76: #{conformer_block.1} parent=1 // pred_region
      _
    $region77: #{conformer_block.1} parent=1 // pred_fallthru
      _
    // Predicated region
    $region78: #{conformer_block.1} parent=1 // pred_check
      _
    $region79: #{conformer_block.1} parent=1 // pred_check_branch
      %140 = sbr.rel (0) target = $region81
    $region80: #{conformer_block.1} parent=1 // pred_region
      _
    $region81: #{conformer_block.1} parent=1 // pred_fallthru
      _
    // Predicated region
    $region82: #{conformer_block.1} parent=1 // pred_check
      _
    $region83: #{conformer_block.1} parent=1 // pred_check_branch
      %142 = sbr.rel (0) target = $region85
    $region84: #{conformer_block.1} parent=1 // pred_region
      _
    $region85: #{conformer_block.1} parent=1 // pred_fallthru
      _
    // Predicated region
    $region86: #{conformer_block.1} parent=1 // pred_check
      _
    $region87: #{conformer_block.1} parent=1 // pred_check_branch
      %144 = sbr.rel (0) target = $region89
    $region88: #{conformer_block.1} parent=1 // pred_region
      _
    $region89: #{conformer_block.1} parent=1 // pred_fallthru
      _
    // Predicated region
    $region90: #{conformer_block.1} parent=1 // pred_check
      _
    $region91: #{conformer_block.1} parent=1 // pred_check_branch
      %146 = sbr.rel (0) target = $region93
    $region92: #{conformer_block.1} parent=1 // pred_region
      _
    $region93: #{conformer_block.1} parent=1 // pred_fallthru
      _
    // Predicated region
    $region94: #{conformer_block.1} parent=1 // pred_check
      _
    $region95: #{conformer_block.1} parent=1 // pred_check_branch
      %148 = sbr.rel (0) target = $region97
    $region96: #{conformer_block.1} parent=1 // pred_region
      _
    $region97: #{conformer_block.1} parent=1 // pred_fallthru
      _
    // Predicated region
    $region98: #{conformer_block.1} parent=1 // pred_check
      _
    $region99: #{conformer_block.1} parent=1 // pred_check_branch
      %150 = sbr.rel (0) target = $region101
    $region100: #{conformer_block.1} parent=1 // pred_region
      _
    $region101: #{conformer_block.1} parent=1 // pred_fallthru
      _
    // Predicated region
    $region102: #{conformer_block.1} parent=1 // pred_check
      _
    $region103: #{conformer_block.1} parent=1 // pred_check_branch
      %152 = sbr.rel (0) target = $region105
    $region104: #{conformer_block.1} parent=1 // pred_region
      _
    $region105: #{conformer_block.1} parent=1 // pred_fallthru
      _
    // Predicated region
    $region106: #{conformer_block.1} parent=1 // pred_check
      _
    $region107: #{conformer_block.1} parent=1 // pred_check_branch
      %154 = sbr.rel (0) target = $region109
    $region108: #{conformer_block.1} parent=1 // pred_region
      _
    $region109: #{conformer_block.1} parent=1 // pred_fallthru
      _
    // Predicated region
    $region110: #{conformer_block.1} parent=1 // pred_check
      _
    $region111: #{conformer_block.1} parent=1 // pred_check_branch
      %156 = sbr.rel (0) target = $region113
    $region112: #{conformer_block.1} parent=1 // pred_region
      _
    $region113: #{conformer_block.1} parent=1 // pred_fallthru
      _
    // Predicated region
    $region114: #{conformer_block.1} parent=1 // pred_check
      _
    $region115: #{conformer_block.1} parent=1 // pred_check_branch
      %158 = sbr.rel (0) target = $region117
    $region116: #{conformer_block.1} parent=1 // pred_region
      _
    $region117: #{conformer_block.1} parent=1 // pred_fallthru
      _
    // Predicated region
    $region118: #{conformer_block.1} parent=1 // pred_check
      _
    $region119: #{conformer_block.1} parent=1 // pred_check_branch
      %160 = sbr.rel (0) target = $region121
    $region120: #{conformer_block.1} parent=1 // pred_region
      _
    $region121: #{conformer_block.1} parent=1 // pred_fallthru
      _
    // Predicated region
    $region122: #{conformer_block.1} parent=1 // pred_check
      _
    $region123: #{conformer_block.1} parent=1 // pred_check_branch
      %162 = sbr.rel (0) target = $region125
    $region124: #{conformer_block.1} parent=1 // pred_region
      _
    $region125: #{conformer_block.1} parent=1 // pred_fallthru
      _
    // Predicated region
    $region126: #{conformer_block.1} parent=1 // pred_check
      _
    $region127: #{conformer_block.1} parent=1 // pred_check_branch
      %164 = sbr.rel (0) target = $region129
    $region128: #{conformer_block.1} parent=1 // pred_region
      _
    $region129: #{conformer_block.1} parent=1 // pred_fallthru
      _
    // Predicated region
    $region130: #{conformer_block.1} parent=1 // pred_check
      _
    $region131: #{conformer_block.1} parent=1 // pred_check_branch
      %166 = sbr.rel (0) target = $region133
    $region132: #{conformer_block.1} parent=1 // pred_region
      _
    $region133: #{conformer_block.1} parent=1 // pred_fallthru
      _
    // Predicated region
    $region134: #{conformer_block.1} parent=1 // pred_check
      _
    $region135: #{conformer_block.1} parent=1 // pred_check_branch
      %168 = sbr.rel (0) target = $region137
    $region136: #{conformer_block.1} parent=1 // pred_region
      _
    $region137: #{conformer_block.1} parent=1 // pred_fallthru
      _
    // Predicated region
    $region138: #{conformer_block.1} parent=1 // pred_check
      _
    $region139: #{conformer_block.1} parent=1 // pred_check_branch
      %170 = sbr.rel (0) target = $region141
    $region140: #{conformer_block.1} parent=1 // pred_region
      _
    $region141: #{conformer_block.1} parent=1 // pred_fallthru
      _
    // Predicated region
    $region142: #{conformer_block.1} parent=1 // pred_check
      _
    $region143: #{conformer_block.1} parent=1 // pred_check_branch
      %172 = sbr.rel (0) target = $region145
    $region144: #{conformer_block.1} parent=1 // pred_region
      _
    $region145: #{conformer_block.1} parent=1 // pred_fallthru
      _
    // Predicated region
    $region146: #{conformer_block.1} parent=1 // pred_check
      _
    $region147: #{conformer_block.1} parent=1 // pred_check_branch
      %174 = sbr.rel (0) target = $region149
    $region148: #{conformer_block.1} parent=1 // pred_region
      _
    $region149: #{conformer_block.1} parent=1 // pred_fallthru
      _
    // Predicated region
    $region150: #{conformer_block.1} parent=1 // pred_check
      _
    $region151: #{conformer_block.1} parent=1 // pred_check_branch
      %176 = sbr.rel (0) target = $region153
    $region152: #{conformer_block.1} parent=1 // pred_region
      _
    $region153: #{conformer_block.1} parent=1 // pred_fallthru
      _
    // Predicated region
    $region154: #{conformer_block.1} parent=1 // pred_check
      _
    $region155: #{conformer_block.1} parent=1 // pred_check_branch
      %178 = sbr.rel (0) target = $region157
    $region156: #{conformer_block.1} parent=1 // pred_region
      _
    $region157: #{conformer_block.1} parent=1 // pred_fallthru
      _
    // Predicated region
    $region158: #{conformer_block.1} parent=1 // pred_check
      _
    $region159: #{conformer_block.1} parent=1 // pred_check_branch
      %180 = sbr.rel (0) target = $region161
    $region160: #{conformer_block.1} parent=1 // pred_region
      _
    $region161: #{conformer_block.1} parent=1 // pred_fallthru
      _
    // Predicated region
    $region162: #{conformer_block.1} parent=1 // pred_check
      _
    $region163: #{conformer_block.1} parent=1 // pred_check_branch
      %182 = sbr.rel (0) target = $region165
    $region164: #{conformer_block.1} parent=1 // pred_region
      _
    $region165: #{conformer_block.1} parent=1 // pred_fallthru
      _
    // Predicated region
    $region166: #{conformer_block.1} parent=1 // pred_check
      _
    $region167: #{conformer_block.1} parent=1 // pred_check_branch
      %184 = sbr.rel (0) target = $region169
    $region168: #{conformer_block.1} parent=1 // pred_region
      _
    $region169: #{conformer_block.1} parent=1 // pred_fallthru
      _
    // Predicated region
    $region170: #{conformer_block.1} parent=1 // pred_check
      _
    $region171: #{conformer_block.1} parent=1 // pred_check_branch
      %186 = sbr.rel (0) target = $region173
    $region172: #{conformer_block.1} parent=1 // pred_region
      _
    $region173: #{conformer_block.1} parent=1 // pred_fallthru
      _
    // Predicated region
    $region174: #{conformer_block.1} parent=1 // pred_check
      _
    $region175: #{conformer_block.1} parent=1 // pred_check_branch
      %188 = sbr.rel (0) target = $region177
    $region176: #{conformer_block.1} parent=1 // pred_region
      _
    $region177: #{conformer_block.1} parent=1 // pred_fallthru
      _
    // Predicated region
    $region178: #{conformer_block.1} parent=1 // pred_check
      _
    $region179: #{conformer_block.1} parent=1 // pred_check_branch
      %190 = sbr.rel (0) target = $region181
    $region180: #{conformer_block.1} parent=1 // pred_region
      _
    $region181: #{conformer_block.1} parent=1 // pred_fallthru
      _
    // Predicated region
    $region182: #{conformer_block.1} parent=1 // pred_check
      _
    $region183: #{conformer_block.1} parent=1 // pred_check_branch
      %192 = sbr.rel (0) target = $region185
    $region184: #{conformer_block.1} parent=1 // pred_region
      _
    $region185: #{conformer_block.1} parent=1 // pred_fallthru
      _
    // Predicated region
    $region186: #{conformer_block.1} parent=1 // pred_check
      _
    $region187: #{conformer_block.1} parent=1 // pred_check_branch
      %194 = sbr.rel (0) target = $region189
    $region188: #{conformer_block.1} parent=1 // pred_region
      %196 = vsyncadd [#allocation3], 0
      %s198 = sshll.u32 %s93, 4
      %s199 = int_to_ptr.hbm [resolvable:$true] %s198
      %s200 = sshll.u32 [#allocation2], 4
      %s201 = int_to_ptr.vmem [resolvable:$true] %s200
      %203 = dma.hbm_to_vmem [thread:$0]  %s199, 16, %s201, [#allocation3]
    $region189: #{conformer_block.1} parent=1 // pred_fallthru
      _
    // Predicated region
    $region190: #{conformer_block.1} parent=1 // pred_check
      _
    $region191: #{conformer_block.1} parent=1 // pred_check_branch
      %205 = sbr.rel (0) target = $region193
    $region192: #{conformer_block.1} parent=1 // pred_region
      %207 = dma.done [#allocation3], 16
    $region193: #{conformer_block.1} parent=1 // pred_fallthru
      _
    %v208 = vlaneseq
    %v209 = vand.u32 %v208, 127
    %v210 = vld [vmem:[%s7] sm:$0xff]
    %v211 = vld [vmem:[%s7 + $0x8] sm:$0xff]
    %v212 = vld [vmem:[%s7 + $0x10] sm:$0xff]
    %v213 = vld [vmem:[%s7 + $0x18] sm:$0xff]
    %214 = vset.pattern.permute.xlu0 0
    %215 = vperm.xlu0 %214, %v210
    %v216 = vpop.permute.xlu0 %215
    %217 = vset.pattern.permute.xlu0 0
    %218 = vperm.xlu0 %217, %v211
    %v219 = vpop.permute.xlu0 %218
    %220 = vset.pattern.permute.xlu0 0
    %221 = vperm.xlu0 %220, %v212
    %v222 = vpop.permute.xlu0 %221
    %223 = vset.pattern.permute.xlu0 0
    %224 = vperm.xlu0 %223, %v213
    %v225 = vpop.permute.xlu0 %224
    %vm226 = vcmp.eq.s32.totalorder %v209, %v216
    %vm227 = vcmp.eq.s32.totalorder %v209, %v219
    %vm228 = vcmp.eq.s32.totalorder %v209, %v222
    %vm229 = vcmp.eq.s32.totalorder %v209, %v225
    %v230 = vsel %vm226, 1.0, 0.0
    %v231 = vsel %vm227, 1.0, 0.0
    %v232 = vsel %vm228, 1.0, 0.0
    %v233 = vsel %vm229, 1.0, 0.0
    %v234 = vlaneseq
    %v235 = vshrl.u32 %v234, 7
    %v236 = vadd.s32 %v235, 8
    %v237 = vld [vmem:[%s9] sm:$0x1]
    %v238 = vld [vmem:[%s9 + $0x1] sm:$0x1]
    %v239 = vperm.slane %v237, 0
    %v240 = vperm.slane %v238, 0
    %vm241 = vcmp.eq.s32.totalorder %v235, %v239
    %vm242 = vcmp.eq.s32.totalorder %v236, %v239
    %vm243 = vcmp.eq.s32.totalorder %v235, %v240
    %vm244 = vcmp.eq.s32.totalorder %v236, %v240
    %v245 = vsel %vm241, 1.0, 0.0
    %v246 = vsel %vm242, 1.0, 0.0
    %v247 = vsel %vm243, 1.0, 0.0
    %v248 = vsel %vm244, 1.0, 0.0
    %v249 = vld [vmem:[%s11] sm:$0xff]
    %v250 = vld [vmem:[%s11 + $0x8] sm:$0xff]
    %v251 = vld [vmem:[%s11 + $0x10] sm:$0xff]
    %v252 = vld [vmem:[%s11 + $0x18] sm:$0xff]
    %253 = vset.pattern.permute.xlu0 0
    %254 = vperm.xlu0 %253, %v249
    %v255 = vpop.permute.xlu0 %254
    %256 = vset.pattern.permute.xlu0 0
    %257 = vperm.xlu0 %256, %v250
    %v258 = vpop.permute.xlu0 %257
    %259 = vset.pattern.permute.xlu0 0
    %260 = vperm.xlu0 %259, %v251
    %v261 = vpop.permute.xlu0 %260
    %262 = vset.pattern.permute.xlu0 0
    %263 = vperm.xlu0 %262, %v252
    %v264 = vpop.permute.xlu0 %263
    %vm265 = vcmp.eq.s32.totalorder %v209, %v255
    %vm266 = vcmp.eq.s32.totalorder %v209, %v258
    %vm267 = vcmp.eq.s32.totalorder %v209, %v261
    %vm268 = vcmp.eq.s32.totalorder %v209, %v264
    %v269 = vsel %vm265, 1.0, 0.0
    %v270 = vsel %vm266, 1.0, 0.0
    %v271 = vsel %vm267, 1.0, 0.0
    %v272 = vsel %vm268, 1.0, 0.0
    %v273 = vld [vmem:[%s13] sm:$0xff]
    %v274 = vld [vmem:[%s13 + $0x8] sm:$0xff]
    %v275 = vld [vmem:[%s13 + $0x10] sm:$0xff]
    %v276 = vld [vmem:[%s13 + $0x18] sm:$0xff]
    %277 = vset.pattern.permute.xlu0 0
    %278 = vperm.xlu0 %277, %v273
    %v279 = vpop.permute.xlu0 %278
    %280 = vset.pattern.permute.xlu0 0
    %281 = vperm.xlu0 %280, %v274
    %v282 = vpop.permute.xlu0 %281
    %283 = vset.pattern.permute.xlu0 0
    %284 = vperm.xlu0 %283, %v275
    %v285 = vpop.permute.xlu0 %284
    %286 = vset.pattern.permute.xlu0 0
    %287 = vperm.xlu0 %286, %v276
    %v288 = vpop.permute.xlu0 %287
    %vm289 = vcmp.eq.s32.totalorder %v209, %v279
    %vm290 = vcmp.eq.s32.totalorder %v209, %v282
    %vm291 = vcmp.eq.s32.totalorder %v209, %v285
    %vm292 = vcmp.eq.s32.totalorder %v209, %v288
    %v293 = vsel %vm289, 1.0, 0.0
    %v294 = vsel %vm290, 1.0, 0.0
    %v295 = vsel %vm291, 1.0, 0.0
    %v296 = vsel %vm292, 1.0, 0.0
    %v297 = vld [vmem:[%s15] sm:$0x1]
    %v298 = vld [vmem:[%s15 + $0x1] sm:$0x1]
    %v299 = vperm.slane %v297, 0
    %v300 = vperm.slane %v298, 0
    %vm301 = vcmp.eq.s32.totalorder %v235, %v299
    %vm302 = vcmp.eq.s32.totalorder %v236, %v299
    %vm303 = vcmp.eq.s32.totalorder %v235, %v300
    %vm304 = vcmp.eq.s32.totalorder %v236, %v300
    %v305 = vsel %vm301, 1.0, 0.0
    %v306 = vsel %vm302, 1.0, 0.0
    %v307 = vsel %vm303, 1.0, 0.0
    %v308 = vsel %vm304, 1.0, 0.0
    %v309 = vld [vmem:[%s1] sm:$0xff]
    %v310 = vld [vmem:[%s1 + $0x8] sm:$0xff]
    %v311 = vld [vmem:[%s1 + $0x10] sm:$0xff]
    %v312 = vld [vmem:[%s1 + $0x18] sm:$0xff]
    %v313 = vld [vmem:[%s21] sm:$0x1]
    %v314 = vld [vmem:[%s23] sm:$0x1]
    %vm315 = vcmask 261120
    %v316 = vsel %vm315, %v309, 0.0
    %317 = vadd.xlane.f32.xlu0 %v316
    %v318 = vpop.xlane.xlu0 %317
    %v319 = vsel %vm315, %v310, 0.0
    %320 = vadd.xlane.f32.xlu0 %v319
    %v321 = vpop.xlane.xlu0 %320
    %v322 = vsel %vm315, %v311, 0.0
    %323 = vadd.xlane.f32.xlu0 %v322
    %v324 = vpop.xlane.xlu0 %323
    %v325 = vsel %vm315, %v312, 0.0
    %326 = vadd.xlane.f32.xlu0 %v325
    %v327 = vpop.xlane.xlu0 %326
    %v328 = vrcp.pop 32.0
    %v329 = vmul.f32 32.0, %v328
    %v330 = vsub.f32 1.0, %v329
    %v331 = vmul.f32 %v328, %v330
    %v332 = vadd.f32 %v328, %v331
    %vm333 = vweird.f32 %v328
    %v334 = vsel %vm333, %v328, %v332
    %v335 = vmul.f32 %v318, %v334
    %v336 = vmul.f32 %v321, %v334
    %v337 = vmul.f32 %v324, %v334
    %v338 = vmul.f32 %v327, %v334
    %v339 = vsub.f32 %v309, %v335
    %v340 = vsub.f32 %v310, %v336
    %v341 = vsub.f32 %v311, %v337
    %v342 = vsub.f32 %v312, %v338
    %v343 = vmul.f32 %v339, %v339
    %v344 = vmul.f32 %v340, %v340
    %v345 = vmul.f32 %v341, %v341
    %v346 = vmul.f32 %v342, %v342
    %v347 = vsel %vm315, %v343, 0.0
    %348 = vadd.xlane.f32.xlu0 %v347
    %v349 = vpop.xlane.xlu0 %348
    %v350 = vsel %vm315, %v344, 0.0
    %351 = vadd.xlane.f32.xlu0 %v350
    %v352 = vpop.xlane.xlu0 %351
    %v353 = vsel %vm315, %v345, 0.0
    %354 = vadd.xlane.f32.xlu0 %v353
    %v355 = vpop.xlane.xlu0 %354
    %v356 = vsel %vm315, %v346, 0.0
    %357 = vadd.xlane.f32.xlu0 %v356
    %v358 = vpop.xlane.xlu0 %357
    %v359 = vmul.f32 %v349, %v334
    %v360 = vmul.f32 %v352, %v334
    %v361 = vmul.f32 %v355, %v334
    %v362 = vmul.f32 %v358, %v334
    %v363 = vadd.f32 %v359, 1e-05
    %v364 = vadd.f32 %v360, 1e-05
    %v365 = vadd.f32 %v361, 1e-05
    %v366 = vadd.f32 %v362, 1e-05
    %v367 = vrsqrt.pop %v363
    %v368 = vmul.f32 %v367, %v363
    %v369 = vmul.f32 %v368, %v367
    %v370 = vmul.f32 0.5, %v369
    %v371 = vsub.f32 1.5, %v370
    %v372 = vmul.f32 %v367, %v371
    %vm373 = vweird.f32 %v363
    %vm374 = vweird.f32 %v367
    %vm375 = vmor %vm373, %vm374
    %v376 = vsel %vm375, %v367, %v372
    %v377 = vrsqrt.pop %v364
    %v378 = vmul.f32 %v377, %v364
    %v379 = vmul.f32 %v378, %v377
    %v380 = vmul.f32 0.5, %v379
    %v381 = vsub.f32 1.5, %v380
    %v382 = vmul.f32 %v377, %v381
    %vm383 = vweird.f32 %v364
    %vm384 = vweird.f32 %v377
    %vm385 = vmor %vm383, %vm384
    %v386 = vsel %vm385, %v377, %v382
    %v387 = vrsqrt.pop %v365
    %v388 = vmul.f32 %v387, %v365
    %v389 = vmul.f32 %v388, %v387
    %v390 = vmul.f32 0.5, %v389
    %v391 = vsub.f32 1.5, %v390
    %v392 = vmul.f32 %v387, %v391
    %vm393 = vweird.f32 %v365
    %vm394 = vweird.f32 %v387
    %vm395 = vmor %vm393, %vm394
    %v396 = vsel %vm395, %v387, %v392
    %v397 = vrsqrt.pop %v366
    %v398 = vmul.f32 %v397, %v366
    %v399 = vmul.f32 %v398, %v397
    %v400 = vmul.f32 0.5, %v399
    %v401 = vsub.f32 1.5, %v400
    %v402 = vmul.f32 %v397, %v401
    %vm403 = vweird.f32 %v366
    %vm404 = vweird.f32 %v397
    %vm405 = vmor %vm403, %vm404
    %v406 = vsel %vm405, %v397, %v402
    %v407 = vmul.f32 %v339, %v376
    %v408 = vmul.f32 %v340, %v386
    %v409 = vmul.f32 %v341, %v396
    %v410 = vmul.f32 %v342, %v406
    %v412 = vperm.slane %v313, 0
    %v414 = vmul.f32 %v407, %v412
    %v415 = vmul.f32 %v408, %v412
    %v416 = vmul.f32 %v409, %v412
    %v417 = vmul.f32 %v410, %v412
    %v419 = vperm.slane %v314, 0
    %v421 = vadd.f32 %v414, %v419
    %v422 = vadd.f32 %v415, %v419
    %v423 = vadd.f32 %v416, %v419
    %v424 = vadd.f32 %v417, %v419
    %v425 = vld [vmem:[%s25] sm:$0xff]
    %v426 = vld [vmem:[%s25 + $0x8] sm:$0xff]
    %v427 = vld [vmem:[%s25 + $0x10] sm:$0xff]
    %v428 = vld [vmem:[%s25 + $0x18] sm:$0xff]
    %v429 = vld [vmem:[%s27] sm:$0x1]
    %v431 = vperm.slane %v429, 0
    %v434 = vsel %vm315, %v421, 0
    %v437 = vsel %vm315, %v422, 0
    %v440 = vsel %vm315, %v423, 0
    %v443 = vsel %vm315, %v424, 0
    %445 = vmatpush.msra.mxu0 0.0
    %446 = vmatpush.msra.mxu0 0.0
    %447 = vmatpush.msra.mxu0 0.0
    %448 = vmatpush.msra.mxu0 0.0
    %449 = vmatpush.msra.mxu0 0.0
    %450 = vmatpush.msra.mxu0 0.0
    %451 = vmatpush.msra.mxu0 0.0
    %452 = vmatpush.msra.mxu0 0.0
    %453 = vmatpush.msra.mxu0 0.0
    %454 = vmatpush.msra.mxu0 0.0
    %455 = vmatpush.msra.mxu0 0.0
    %456 = vmatpush.msra.mxu0 0.0
    %457 = vmatpush.msra.mxu0 %v428
    %458 = vmatpush.msra.mxu0 %v427
    %459 = vmatpush.msra.mxu0 %v426
    %460 = vmatpush.msra.mxu0 %v425
    %461 = vmatmul.f32.gmra.mxu0 %v434
    %v462 = vpop.f32.mrf.mxu0
    %v463 = vadd.f32 %v431, %v462
    %464 = vmatmul.f32.gmra.mxu0 %v437
    %v465 = vpop.f32.mrf.mxu0
    %v466 = vadd.f32 %v431, %v465
    %467 = vmatmul.f32.gmra.mxu0 %v440
    %v468 = vpop.f32.mrf.mxu0
    %v469 = vadd.f32 %v431, %v468
    %470 = vmatmul.f32.gmra.mxu0 %v443
    %v471 = vpop.f32.mrf.mxu0
    %v472 = vadd.f32 %v431, %v471
    %473 = vdwg.mxu0
    %v474 = vxor.u32 %v463, 2147483648
    %v475 = vxor.u32 %v466, 2147483648
    %v476 = vxor.u32 %v469, 2147483648
    %v477 = vxor.u32 %v472, 2147483648
    %v478 = vmul.f32 %v474, 1.442695
    %v479 = vpow.pop %v478
    %v480 = vmul.f32 %v475, 1.442695
    %v481 = vpow.pop %v480
    %v482 = vmul.f32 %v476, 1.442695
    %v483 = vpow.pop %v482
    %v484 = vmul.f32 %v477, 1.442695
    %v485 = vpow.pop %v484
    %v486 = vadd.f32 %v479, 1.0
    %v487 = vadd.f32 %v481, 1.0
    %v488 = vadd.f32 %v483, 1.0
    %v489 = vadd.f32 %v485, 1.0
    %v490 = vrcp.pop %v486
    %v491 = vmul.f32 %v486, %v490
    %v492 = vsub.f32 1.0, %v491
    %v493 = vmul.f32 %v490, %v492
    %v494 = vadd.f32 %v490, %v493
    %vm495 = vweird.f32 %v486
    %vm496 = vweird.f32 %v490
    %vm497 = vmor %vm495, %vm496
    %v498 = vsel %vm497, %v490, %v494
    %v499 = vand.u32 2147483647, %v486
    %vm500 = vcmp.eq.f32.partialorder %v499, 8.507059e+37
    %v501 = vand.u32 %v486, 2147483648
    %v502 = vor.u32 1.1754944e-38, %v501
    %v503 = vsel %vm500, %v502, %v498
    %v504 = vmul.f32 1.0, %v503
    %v505 = vrcp.pop %v487
    %v506 = vmul.f32 %v487, %v505
    %v507 = vsub.f32 1.0, %v506
    %v508 = vmul.f32 %v505, %v507
    %v509 = vadd.f32 %v505, %v508
    %vm510 = vweird.f32 %v487
    %vm511 = vweird.f32 %v505
    %vm512 = vmor %vm510, %vm511
    %v513 = vsel %vm512, %v505, %v509
    %v514 = vand.u32 2147483647, %v487
    %vm515 = vcmp.eq.f32.partialorder %v514, 8.507059e+37
    %v516 = vand.u32 %v487, 2147483648
    %v517 = vor.u32 1.1754944e-38, %v516
    %v518 = vsel %vm515, %v517, %v513
    %v519 = vmul.f32 1.0, %v518
    %v520 = vrcp.pop %v488
    %v521 = vmul.f32 %v488, %v520
    %v522 = vsub.f32 1.0, %v521
    %v523 = vmul.f32 %v520, %v522
    %v524 = vadd.f32 %v520, %v523
    %vm525 = vweird.f32 %v488
    %vm526 = vweird.f32 %v520
    %vm527 = vmor %vm525, %vm526
    %v528 = vsel %vm527, %v520, %v524
    %v529 = vand.u32 2147483647, %v488
    %vm530 = vcmp.eq.f32.partialorder %v529, 8.507059e+37
    %v531 = vand.u32 %v488, 2147483648
    %v532 = vor.u32 1.1754944e-38, %v531
    %v533 = vsel %vm530, %v532, %v528
    %v534 = vmul.f32 1.0, %v533
    %v535 = vrcp.pop %v489
    %v536 = vmul.f32 %v489, %v535
    %v537 = vsub.f32 1.0, %v536
    %v538 = vmul.f32 %v535, %v537
    %v539 = vadd.f32 %v535, %v538
    %vm540 = vweird.f32 %v489
    %vm541 = vweird.f32 %v535
    %vm542 = vmor %vm540, %vm541
    %v543 = vsel %vm542, %v535, %v539
    %v544 = vand.u32 2147483647, %v489
    %vm545 = vcmp.eq.f32.partialorder %v544, 8.507059e+37
    %v546 = vand.u32 %v489, 2147483648
    %v547 = vor.u32 1.1754944e-38, %v546
    %v548 = vsel %vm545, %v547, %v543
    %v549 = vmul.f32 1.0, %v548
    %v550 = vmul.f32 %v463, %v504
    %v551 = vmul.f32 %v466, %v519
    %v552 = vmul.f32 %v469, %v534
    %v553 = vmul.f32 %v472, %v549
    %v554 = vld [vmem:[%s29] sm:$0xff]
    %v555 = vld [vmem:[%s29 + $0x8] sm:$0xff]
    %v556 = vld [vmem:[%s29 + $0x10] sm:$0xff]
    %v557 = vld [vmem:[%s29 + $0x18] sm:$0xff]
    %v558 = vld [vmem:[%s29 + $0x20] sm:$0xff]
    %v559 = vld [vmem:[%s29 + $0x28] sm:$0xff]
    %v560 = vld [vmem:[%s29 + $0x30] sm:$0xff]
    %v561 = vld [vmem:[%s29 + $0x38] sm:$0xff]
    %v562 = vld [vmem:[%s31] sm:$0x1]
    %v564 = vperm.slane %v562, 0
    %vm566 = vcmask 523264
    %v568 = vsel %vm566, %v550, 0
    %v571 = vsel %vm566, %v551, 0
    %v574 = vsel %vm566, %v552, 0
    %v577 = vsel %vm566, %v553, 0
    %579 = vmatpush.msra.mxu0 0.0
    %580 = vmatpush.msra.mxu0 0.0
    %581 = vmatpush.msra.mxu0 0.0
    %582 = vmatpush.msra.mxu0 0.0
    %583 = vmatpush.msra.mxu0 0.0
    %584 = vmatpush.msra.mxu0 0.0
    %585 = vmatpush.msra.mxu0 0.0
    %586 = vmatpush.msra.mxu0 0.0
    %587 = vmatpush.msra.mxu0 %v561
    %588 = vmatpush.msra.mxu0 %v560
    %589 = vmatpush.msra.mxu0 %v559
    %590 = vmatpush.msra.mxu0 %v558
    %591 = vmatpush.msra.mxu0 %v557
    %592 = vmatpush.msra.mxu0 %v556
    %593 = vmatpush.msra.mxu0 %v555
    %594 = vmatpush.msra.mxu0 %v554
    %595 = vmatmul.f32.gmra.mxu0 %v568
    %v596 = vpop.f32.mrf.mxu0
    %v597 = vadd.f32 %v564, %v596
    %598 = vmatmul.f32.gmra.mxu0 %v571
    %v599 = vpop.f32.mrf.mxu0
    %v600 = vadd.f32 %v564, %v599
    %601 = vmatmul.f32.gmra.mxu0 %v574
    %v602 = vpop.f32.mrf.mxu0
    %v603 = vadd.f32 %v564, %v602
    %604 = vmatmul.f32.gmra.mxu0 %v577
    %v605 = vpop.f32.mrf.mxu0
    %v606 = vadd.f32 %v564, %v605
    %607 = vdwg.mxu0
    %v608 = vmul.f32 %v597, 0.5
    %v609 = vmul.f32 %v600, 0.5
    %v610 = vmul.f32 %v603, 0.5
    %v611 = vmul.f32 %v606, 0.5
    %v612 = vadd.f32 %v608, %v309
    %v613 = vadd.f32 %v609, %v310
    %v614 = vadd.f32 %v610, %v311
    %v615 = vadd.f32 %v611, %v312
    %v616 = vld [vmem:[%s33] sm:$0x1]
    %v617 = vld [vmem:[%s35] sm:$0x1]
    %v618 = vsel %vm315, %v612, 0.0
    %619 = vadd.xlane.f32.xlu0 %v618
    %v620 = vpop.xlane.xlu0 %619
    %v621 = vsel %vm315, %v613, 0.0
    %622 = vadd.xlane.f32.xlu0 %v621
    %v623 = vpop.xlane.xlu0 %622
    %v624 = vsel %vm315, %v614, 0.0
    %625 = vadd.xlane.f32.xlu0 %v624
    %v626 = vpop.xlane.xlu0 %625
    %v627 = vsel %vm315, %v615, 0.0
    %628 = vadd.xlane.f32.xlu0 %v627
    %v629 = vpop.xlane.xlu0 %628
    %v630 = vmul.f32 %v620, %v334
    %v631 = vmul.f32 %v623, %v334
    %v632 = vmul.f32 %v626, %v334
    %v633 = vmul.f32 %v629, %v334
    %v634 = vsub.f32 %v612, %v630
    %v635 = vsub.f32 %v613, %v631
    %v636 = vsub.f32 %v614, %v632
    %v637 = vsub.f32 %v615, %v633
    %v638 = vmul.f32 %v634, %v634
    %v639 = vmul.f32 %v635, %v635
    %v640 = vmul.f32 %v636, %v636
    %v641 = vmul.f32 %v637, %v637
    %v642 = vsel %vm315, %v638, 0.0
    %643 = vadd.xlane.f32.xlu0 %v642
    %v644 = vpop.xlane.xlu0 %643
    %v645 = vsel %vm315, %v639, 0.0
    %646 = vadd.xlane.f32.xlu0 %v645
    %v647 = vpop.xlane.xlu0 %646
    %v648 = vsel %vm315, %v640, 0.0
    %649 = vadd.xlane.f32.xlu0 %v648
    %v650 = vpop.xlane.xlu0 %649
    %v651 = vsel %vm315, %v641, 0.0
    %652 = vadd.xlane.f32.xlu0 %v651
    %v653 = vpop.xlane.xlu0 %652
    %v654 = vmul.f32 %v644, %v334
    %v655 = vmul.f32 %v647, %v334
    %v656 = vmul.f32 %v650, %v334
    %v657 = vmul.f32 %v653, %v334
    %v658 = vadd.f32 %v654, 1e-05
    %v659 = vadd.f32 %v655, 1e-05
    %v660 = vadd.f32 %v656, 1e-05
    %v661 = vadd.f32 %v657, 1e-05
    %v662 = vrsqrt.pop %v658
    %v663 = vmul.f32 %v662, %v658
    %v664 = vmul.f32 %v663, %v662
    %v665 = vmul.f32 0.5, %v664
    %v666 = vsub.f32 1.5, %v665
    %v667 = vmul.f32 %v662, %v666
    %vm668 = vweird.f32 %v658
    %vm669 = vweird.f32 %v662
    %vm670 = vmor %vm668, %vm669
    %v671 = vsel %vm670, %v662, %v667
    %v672 = vrsqrt.pop %v659
    %v673 = vmul.f32 %v672, %v659
    %v674 = vmul.f32 %v673, %v672
    %v675 = vmul.f32 0.5, %v674
    %v676 = vsub.f32 1.5, %v675
    %v677 = vmul.f32 %v672, %v676
    %vm678 = vweird.f32 %v659
    %vm679 = vweird.f32 %v672
    %vm680 = vmor %vm678, %vm679
    %v681 = vsel %vm680, %v672, %v677
    %v682 = vrsqrt.pop %v660
    %v683 = vmul.f32 %v682, %v660
    %v684 = vmul.f32 %v683, %v682
    %v685 = vmul.f32 0.5, %v684
    %v686 = vsub.f32 1.5, %v685
    %v687 = vmul.f32 %v682, %v686
    %vm688 = vweird.f32 %v660
    %vm689 = vweird.f32 %v682
    %vm690 = vmor %vm688, %vm689
    %v691 = vsel %vm690, %v682, %v687
    %v692 = vrsqrt.pop %v661
    %v693 = vmul.f32 %v692, %v661
    %v694 = vmul.f32 %v693, %v692
    %v695 = vmul.f32 0.5, %v694
    %v696 = vsub.f32 1.5, %v695
    %v697 = vmul.f32 %v692, %v696
    %vm698 = vweird.f32 %v661
    %vm699 = vweird.f32 %v692
    %vm700 = vmor %vm698, %vm699
    %v701 = vsel %vm700, %v692, %v697
    %v702 = vmul.f32 %v634, %v671
    %v703 = vmul.f32 %v635, %v681
    %v704 = vmul.f32 %v636, %v691
    %v705 = vmul.f32 %v637, %v701
    %v707 = vperm.slane %v616, 0
    %v709 = vmul.f32 %v702, %v707
    %v710 = vmul.f32 %v703, %v707
    %v711 = vmul.f32 %v704, %v707
    %v712 = vmul.f32 %v705, %v707
    %v714 = vperm.slane %v617, 0
    %v716 = vadd.f32 %v709, %v714
    %v717 = vadd.f32 %v710, %v714
    %v718 = vadd.f32 %v711, %v714
    %v719 = vadd.f32 %v712, %v714
    %v720 = vld [vmem:[%s37] sm:$0xff]
    %v721 = vld [vmem:[%s37 + $0x8] sm:$0xff]
    %v722 = vld [vmem:[%s37 + $0x10] sm:$0xff]
    %v723 = vld [vmem:[%s37 + $0x18] sm:$0xff]
    %v724 = vld [vmem:[%s39] sm:$0x1]
    %v726 = vperm.slane %v724, 0
    %v729 = vsel %vm315, %v716, 0
    %v732 = vsel %vm315, %v717, 0
    %v735 = vsel %vm315, %v718, 0
    %v738 = vsel %vm315, %v719, 0
    %740 = vmatpush.msra.mxu0 0.0
    %741 = vmatpush.msra.mxu0 0.0
    %742 = vmatpush.msra.mxu0 0.0
    %743 = vmatpush.msra.mxu0 0.0
    %744 = vmatpush.msra.mxu0 0.0
    %745 = vmatpush.msra.mxu0 0.0
    %746 = vmatpush.msra.mxu0 0.0
    %747 = vmatpush.msra.mxu0 0.0
    %748 = vmatpush.msra.mxu0 0.0
    %749 = vmatpush.msra.mxu0 0.0
    %750 = vmatpush.msra.mxu0 0.0
    %751 = vmatpush.msra.mxu0 0.0
    %752 = vmatpush.msra.mxu0 %v723
    %753 = vmatpush.msra.mxu0 %v722
    %754 = vmatpush.msra.mxu0 %v721
    %755 = vmatpush.msra.mxu0 %v720
    %756 = vmatmul.f32.gmra.mxu0 %v729
    %v757 = vpop.f32.mrf.mxu0
    %v758 = vadd.f32 %v726, %v757
    %759 = vmatmul.f32.gmra.mxu0 %v732
    %v760 = vpop.f32.mrf.mxu0
    %v761 = vadd.f32 %v726, %v760
    %762 = vmatmul.f32.gmra.mxu0 %v735
    %v763 = vpop.f32.mrf.mxu0
    %v764 = vadd.f32 %v726, %v763
    %765 = vmatmul.f32.gmra.mxu0 %v738
    %v766 = vpop.f32.mrf.mxu0
    %v767 = vadd.f32 %v726, %v766
    %768 = vdwg.mxu0
    %v769 = vld [vmem:[%s41] sm:$0xff]
    %v770 = vld [vmem:[%s41 + $0x8] sm:$0xff]
    %v771 = vld [vmem:[%s41 + $0x10] sm:$0xff]
    %v772 = vld [vmem:[%s41 + $0x18] sm:$0xff]
    %v773 = vld [vmem:[%s43] sm:$0x1]
    %v775 = vperm.slane %v773, 0
    %777 = vmatpush.msra.mxu0 0.0
    %778 = vmatpush.msra.mxu0 0.0
    %779 = vmatpush.msra.mxu0 0.0
    %780 = vmatpush.msra.mxu0 0.0
    %781 = vmatpush.msra.mxu0 0.0
    %782 = vmatpush.msra.mxu0 0.0
    %783 = vmatpush.msra.mxu0 0.0
    %784 = vmatpush.msra.mxu0 0.0
    %785 = vmatpush.msra.mxu0 0.0
    %786 = vmatpush.msra.mxu0 0.0
    %787 = vmatpush.msra.mxu0 0.0
    %788 = vmatpush.msra.mxu0 0.0
    %789 = vmatpush.msra.mxu0 %v772
    %790 = vmatpush.msra.mxu0 %v771
    %791 = vmatpush.msra.mxu0 %v770
    %792 = vmatpush.msra.mxu0 %v769
    %793 = vmatmul.f32.gmra.mxu0 %v729
    %v794 = vpop.f32.mrf.mxu0
    %v795 = vadd.f32 %v775, %v794
    %796 = vmatmul.f32.gmra.mxu0 %v732
    %v797 = vpop.f32.mrf.mxu0
    %v798 = vadd.f32 %v775, %v797
    %799 = vmatmul.f32.gmra.mxu0 %v735
    %v800 = vpop.f32.mrf.mxu0
    %v801 = vadd.f32 %v775, %v800
    %802 = vmatmul.f32.gmra.mxu0 %v738
    %v803 = vpop.f32.mrf.mxu0
    %v804 = vadd.f32 %v775, %v803
    %805 = vdwg.mxu0
    %v806 = vld [vmem:[%s45] sm:$0xff]
    %v807 = vld [vmem:[%s45 + $0x8] sm:$0xff]
    %v808 = vld [vmem:[%s45 + $0x10] sm:$0xff]
    %v809 = vld [vmem:[%s45 + $0x18] sm:$0xff]
    %v810 = vld [vmem:[%s47] sm:$0x1]
    %v812 = vperm.slane %v810, 0
    %814 = vmatpush.msra.mxu0 0.0
    %815 = vmatpush.msra.mxu0 0.0
    %816 = vmatpush.msra.mxu0 0.0
    %817 = vmatpush.msra.mxu0 0.0
    %818 = vmatpush.msra.mxu0 0.0
    %819 = vmatpush.msra.mxu0 0.0
    %820 = vmatpush.msra.mxu0 0.0
    %821 = vmatpush.msra.mxu0 0.0
    %822 = vmatpush.msra.mxu0 0.0
    %823 = vmatpush.msra.mxu0 0.0
    %824 = vmatpush.msra.mxu0 0.0
    %825 = vmatpush.msra.mxu0 0.0
    %826 = vmatpush.msra.mxu0 %v809
    %827 = vmatpush.msra.mxu0 %v808
    %828 = vmatpush.msra.mxu0 %v807
    %829 = vmatpush.msra.mxu0 %v806
    %830 = vmatmul.f32.gmra.mxu0 %v729
    %v831 = vpop.f32.mrf.mxu0
    %v832 = vadd.f32 %v812, %v831
    %833 = vmatmul.f32.gmra.mxu0 %v732
    %v834 = vpop.f32.mrf.mxu0
    %v835 = vadd.f32 %v812, %v834
    %836 = vmatmul.f32.gmra.mxu0 %v735
    %v837 = vpop.f32.mrf.mxu0
    %v838 = vadd.f32 %v812, %v837
    %839 = vmatmul.f32.gmra.mxu0 %v738
    %v840 = vpop.f32.mrf.mxu0
    %v841 = vadd.f32 %v812, %v840
    %842 = vdwg.mxu0
    %vm843 = vcmask 130048
    %v845 = vsel %vm843, %v245, 0
    %v848 = vsel %vm843, %v246, 0
    %850 = vmatpush.msra.mxu0 0.0
    %851 = vmatpush.msra.mxu0 0.0
    %852 = vmatpush.msra.mxu0 0.0
    %853 = vmatpush.msra.mxu0 0.0
    %854 = vmatpush.msra.mxu0 0.0
    %855 = vmatpush.msra.mxu0 0.0
    %856 = vmatpush.msra.mxu0 0.0
    %857 = vmatpush.msra.mxu0 0.0
    %858 = vmatpush.msra.mxu0 0.0
    %859 = vmatpush.msra.mxu0 0.0
    %860 = vmatpush.msra.mxu0 0.0
    %861 = vmatpush.msra.mxu0 0.0
    %862 = vmatpush.msra.mxu0 0.0
    %863 = vmatpush.msra.mxu0 0.0
    %864 = vmatpush.msra.mxu0 1.0
    %865 = vmatpush.msra.mxu0 1.0
    %866 = vmatmul.f32.gmra.mxu0 %v845
    %v867 = vpop.f32.mrf.mxu0
    %v868 = vadd.f32 0.0, %v867
    %869 = vmatmul.f32.gmra.mxu0 %v848
    %v870 = vpop.f32.mrf.mxu0
    %v871 = vadd.f32 0.0, %v870
    %872 = vdwg.mxu0
    %v874 = vsel %vm843, %v247, 0
    %v877 = vsel %vm843, %v248, 0
    %879 = vmatpush.msra.mxu0 0.0
    %880 = vmatpush.msra.mxu0 0.0
    %881 = vmatpush.msra.mxu0 0.0
    %882 = vmatpush.msra.mxu0 0.0
    %883 = vmatpush.msra.mxu0 0.0
    %884 = vmatpush.msra.mxu0 0.0
    %885 = vmatpush.msra.mxu0 0.0
    %886 = vmatpush.msra.mxu0 0.0
    %887 = vmatpush.msra.mxu0 0.0
    %888 = vmatpush.msra.mxu0 0.0
    %889 = vmatpush.msra.mxu0 0.0
    %890 = vmatpush.msra.mxu0 0.0
    %891 = vmatpush.msra.mxu0 0.0
    %892 = vmatpush.msra.mxu0 0.0
    %893 = vmatpush.msra.mxu0 1.0
    %894 = vmatpush.msra.mxu0 1.0
    %895 = vmatmul.f32.gmra.mxu0 %v874
    %v896 = vpop.f32.mrf.mxu0
    %v897 = vadd.f32 0.0, %v896
    %898 = vmatmul.f32.gmra.mxu0 %v877
    %v899 = vpop.f32.mrf.mxu0
    %v900 = vadd.f32 0.0, %v899
    %901 = vdwg.mxu0
    %vm902 = vcmp.eq.s32.totalorder %v235, 0
    %vm903 = vcmp.eq.s32.totalorder %v236, 0
    %v904 = vld [vmem:[%s19] sm:$0x1]
    %v905 = vld [vmem:[%s19 + $0x1] sm:$0x1]
    %v908 = vperm.slane %v904, 0
    %v909 = vperm.slane %v905, 0
    %v912 = vmul.f32 %v868, %v908
    %v913 = vmul.f32 %v871, %v908
    %v914 = vmul.f32 %v897, %v909
    %v915 = vmul.f32 %v900, %v909
    %v916 = vmul.f32 %v912, 0.0625
    %v917 = vmul.f32 %v913, 0.0625
    %v918 = vmul.f32 %v914, 0.0625
    %v919 = vmul.f32 %v915, 0.0625
    %v920 = vsel %vm902, 1.0, %v916
    %v921 = vsel %vm903, 1.0, %v917
    %v922 = vsel %vm902, 1.0, %v918
    %v923 = vsel %vm903, 1.0, %v919
    %925 = vset.pattern.permute.xlu0 0
    %926 = vperm.xlu0 %925, %v920
    %v927 = vpop.permute.xlu0 %926
    %930 = vset.pattern.permute.xlu0 0
    %931 = vperm.xlu0 %930, %v921
    %v932 = vpop.permute.xlu0 %931
    %935 = vset.pattern.permute.xlu0 0
    %936 = vperm.xlu0 %935, %v922
    %v937 = vpop.permute.xlu0 %936
    %940 = vset.pattern.permute.xlu0 0
    %941 = vperm.xlu0 %940, %v923
    %v942 = vpop.permute.xlu0 %941
    %v944 = vmul.f32 %v832, %v927
    %v945 = vmul.f32 %v835, %v932
    %v946 = vmul.f32 %v838, %v937
    %v947 = vmul.f32 %v841, %v942
    %v948 = vld [vmem:[%s3] sm:$0xff]
    %v949 = vld [vmem:[%s3 + $0x8] sm:$0xff]
    %v950 = vld [vmem:[%s3 + $0x10] sm:$0xff]
    %v951 = vld [vmem:[%s3 + $0x18] sm:$0xff]
    %v952 = vld [vmem:[%s3 + $0x20] sm:$0xff]
    %v953 = vld [vmem:[%s3 + $0x28] sm:$0xff]
    %v954 = vld [vmem:[%s3 + $0x30] sm:$0xff]
    %v955 = vld [vmem:[%s3 + $0x38] sm:$0xff]
    %v956 = vld [vmem:[%s3 + $0x40] sm:$0xff]
    %v957 = vld [vmem:[%s3 + $0x48] sm:$0xff]
    %v958 = vld [vmem:[%s3 + $0x50] sm:$0xff]
    %v959 = vld [vmem:[%s3 + $0x58] sm:$0xff]
    %v960 = vld [vmem:[%s3 + $0x60] sm:$0xff]
    %v961 = vld [vmem:[%s3 + $0x68] sm:$0xff]
    %v962 = vld [vmem:[%s3 + $0x70] sm:$0xff]
    %v963 = vld [vmem:[%s3 + $0x78] sm:$0xff]
    %vm964 = vcmp.lt.s32.totalorder %v209, 9
    %v965 = vsel %vm964, 0.0, -1e+30
    %vm966 = vcmask 64512
    %v968 = vsel %vm966, %v758, 0
    %v971 = vsel %vm966, %v761, 0
    %v974 = vsel %vm966, %v795, 0
    %v977 = vsel %vm966, %v798, 0
    %979 = vmatpush.xpose.msra.mxu0 0.0
    %980 = vmatpush.xpose.msra.mxu0 0.0
    %981 = vmatpush.xpose.msra.mxu0 0.0
    %982 = vmatpush.xpose.msra.mxu0 0.0
    %983 = vmatpush.xpose.msra.mxu0 0.0
    %984 = vmatpush.xpose.msra.mxu0 0.0
    %985 = vmatpush.xpose.msra.mxu0 0.0
    %986 = vmatpush.xpose.msra.mxu0 0.0
    %987 = vmatpush.xpose.msra.mxu0 0.0
    %988 = vmatpush.xpose.msra.mxu0 0.0
    %989 = vmatpush.xpose.msra.mxu0 0.0
    %990 = vmatpush.xpose.msra.mxu0 0.0
    %991 = vmatpush.xpose.msra.mxu0 0.0
    %992 = vmatpush.xpose.msra.mxu0 0.0
    %993 = vmatpush.xpose.msra.mxu0 %v977
    %994 = vmatpush.xpose.msra.mxu0 %v974
    %995 = vmatmul.f32.gmra.mxu0 %v968
    %v996 = vpop.f32.mrf.mxu0
    %v997 = vadd.f32 0.0, %v996
    %998 = vmatmul.f32.gmra.mxu0 %v971
    %v999 = vpop.f32.mrf.mxu0
    %v1000 = vadd.f32 0.0, %v999
    %1001 = vdwg.mxu0
    %v1003 = vsel %vm966, %v764, 0
    %v1006 = vsel %vm966, %v767, 0
    %v1009 = vsel %vm966, %v801, 0
    %v1012 = vsel %vm966, %v804, 0
    %1014 = vmatpush.xpose.msra.mxu0 0.0
    %1015 = vmatpush.xpose.msra.mxu0 0.0
    %1016 = vmatpush.xpose.msra.mxu0 0.0
    %1017 = vmatpush.xpose.msra.mxu0 0.0
    %1018 = vmatpush.xpose.msra.mxu0 0.0
    %1019 = vmatpush.xpose.msra.mxu0 0.0
    %1020 = vmatpush.xpose.msra.mxu0 0.0
    %1021 = vmatpush.xpose.msra.mxu0 0.0
    %1022 = vmatpush.xpose.msra.mxu0 0.0
    %1023 = vmatpush.xpose.msra.mxu0 0.0
    %1024 = vmatpush.xpose.msra.mxu0 0.0
    %1025 = vmatpush.xpose.msra.mxu0 0.0
    %1026 = vmatpush.xpose.msra.mxu0 0.0
    %1027 = vmatpush.xpose.msra.mxu0 0.0
    %1028 = vmatpush.xpose.msra.mxu0 %v1012
    %1029 = vmatpush.xpose.msra.mxu0 %v1009
    %1030 = vmatmul.f32.gmra.mxu0 %v1003
    %v1031 = vpop.f32.mrf.mxu0
    %v1032 = vadd.f32 0.0, %v1031
    %1033 = vmatmul.f32.gmra.mxu0 %v1006
    %v1034 = vpop.f32.mrf.mxu0
    %v1035 = vadd.f32 0.0, %v1034
    %1036 = vdwg.mxu0
    %v1037 = vmul.f32 %v997, 0.35355338
    %v1038 = vmul.f32 %v1000, 0.35355338
    %v1039 = vmul.f32 %v1032, 0.35355338
    %v1040 = vmul.f32 %v1035, 0.35355338
    %v1041 = vadd.f32 %v1037, %v948
    %v1042 = vadd.f32 %v1038, %v949
    %v1043 = vadd.f32 %v1039, %v950
    %v1044 = vadd.f32 %v1040, %v951
    %v1045 = vadd.f32 %v1041, %v965
    %v1046 = vadd.f32 %v1042, %v965
    %v1047 = vadd.f32 %v1043, %v965
    %v1048 = vadd.f32 %v1044, %v965
    %v1049 = vsel %vm843, %v1045, -inf
    %1050 = vmax.xlane.f32.xlu0 %v1049
    %v1051 = vpop.xlane.xlu0 %1050
    %v1052 = vsel %vm843, %v1046, -inf
    %1053 = vmax.xlane.f32.xlu0 %v1052
    %v1054 = vpop.xlane.xlu0 %1053
    %v1055 = vsel %vm843, %v1047, -inf
    %1056 = vmax.xlane.f32.xlu0 %v1055
    %v1057 = vpop.xlane.xlu0 %1056
    %v1058 = vsel %vm843, %v1048, -inf
    %1059 = vmax.xlane.f32.xlu0 %v1058
    %v1060 = vpop.xlane.xlu0 %1059
    %v1061 = vsub.f32 %v1045, %v1051
    %v1062 = vsub.f32 %v1046, %v1054
    %v1063 = vsub.f32 %v1047, %v1057
    %v1064 = vsub.f32 %v1048, %v1060
    %v1065 = vmul.f32 %v1061, 1.442695
    %v1066 = vpow.pop %v1065
    %v1067 = vmul.f32 %v1062, 1.442695
    %v1068 = vpow.pop %v1067
    %v1069 = vmul.f32 %v1063, 1.442695
    %v1070 = vpow.pop %v1069
    %v1071 = vmul.f32 %v1064, 1.442695
    %v1072 = vpow.pop %v1071
    %v1073 = vsel %vm843, %v1066, 0.0
    %1074 = vadd.xlane.f32.xlu0 %v1073
    %v1075 = vpop.xlane.xlu0 %1074
    %v1076 = vsel %vm843, %v1068, 0.0
    %1077 = vadd.xlane.f32.xlu0 %v1076
    %v1078 = vpop.xlane.xlu0 %1077
    %v1079 = vsel %vm843, %v1070, 0.0
    %1080 = vadd.xlane.f32.xlu0 %v1079
    %v1081 = vpop.xlane.xlu0 %1080
    %v1082 = vsel %vm843, %v1072, 0.0
    %1083 = vadd.xlane.f32.xlu0 %v1082
    %v1084 = vpop.xlane.xlu0 %1083
    %v1085 = vrcp.pop %v1075
    %v1086 = vmul.f32 %v1075, %v1085
    %v1087 = vsub.f32 1.0, %v1086
    %v1088 = vmul.f32 %v1085, %v1087
    %v1089 = vadd.f32 %v1085, %v1088
    %vm1090 = vweird.f32 %v1075
    %vm1091 = vweird.f32 %v1085
    %vm1092 = vmor %vm1090, %vm1091
    %v1093 = vsel %vm1092, %v1085, %v1089
    %v1094 = vand.u32 2147483647, %v1075
    %vm1095 = vcmp.eq.f32.partialorder %v1094, 8.507059e+37
    %v1096 = vand.u32 %v1075, 2147483648
    %v1097 = vor.u32 1.1754944e-38, %v1096
    %v1098 = vsel %vm1095, %v1097, %v1093
    %v1099 = vmul.f32 %v1066, %v1098
    %v1100 = vrcp.pop %v1078
    %v1101 = vmul.f32 %v1078, %v1100
    %v1102 = vsub.f32 1.0, %v1101
    %v1103 = vmul.f32 %v1100, %v1102
    %v1104 = vadd.f32 %v1100, %v1103
    %vm1105 = vweird.f32 %v1078
    %vm1106 = vweird.f32 %v1100
    %vm1107 = vmor %vm1105, %vm1106
    %v1108 = vsel %vm1107, %v1100, %v1104
    %v1109 = vand.u32 2147483647, %v1078
    %vm1110 = vcmp.eq.f32.partialorder %v1109, 8.507059e+37
    %v1111 = vand.u32 %v1078, 2147483648
    %v1112 = vor.u32 1.1754944e-38, %v1111
    %v1113 = vsel %vm1110, %v1112, %v1108
    %v1114 = vmul.f32 %v1068, %v1113
    %v1115 = vrcp.pop %v1081
    %v1116 = vmul.f32 %v1081, %v1115
    %v1117 = vsub.f32 1.0, %v1116
    %v1118 = vmul.f32 %v1115, %v1117
    %v1119 = vadd.f32 %v1115, %v1118
    %vm1120 = vweird.f32 %v1081
    %vm1121 = vweird.f32 %v1115
    %vm1122 = vmor %vm1120, %vm1121
    %v1123 = vsel %vm1122, %v1115, %v1119
    %v1124 = vand.u32 2147483647, %v1081
    %vm1125 = vcmp.eq.f32.partialorder %v1124, 8.507059e+37
    %v1126 = vand.u32 %v1081, 2147483648
    %v1127 = vor.u32 1.1754944e-38, %v1126
    %v1128 = vsel %vm1125, %v1127, %v1123
    %v1129 = vmul.f32 %v1070, %v1128
    %v1130 = vrcp.pop %v1084
    %v1131 = vmul.f32 %v1084, %v1130
    %v1132 = vsub.f32 1.0, %v1131
    %v1133 = vmul.f32 %v1130, %v1132
    %v1134 = vadd.f32 %v1130, %v1133
    %vm1135 = vweird.f32 %v1084
    %vm1136 = vweird.f32 %v1130
    %vm1137 = vmor %vm1135, %vm1136
    %v1138 = vsel %vm1137, %v1130, %v1134
    %v1139 = vand.u32 2147483647, %v1084
    %vm1140 = vcmp.eq.f32.partialorder %v1139, 8.507059e+37
    %v1141 = vand.u32 %v1084, 2147483648
    %v1142 = vor.u32 1.1754944e-38, %v1141
    %v1143 = vsel %vm1140, %v1142, %v1138
    %v1144 = vmul.f32 %v1072, %v1143
    %v1146 = vsel %vm843, %v1099, 0
    %v1149 = vsel %vm843, %v1114, 0
    %1151 = vmatpush.msra.mxu0 0.0
    %1152 = vmatpush.msra.mxu0 0.0
    %1153 = vmatpush.msra.mxu0 0.0
    %1154 = vmatpush.msra.mxu0 0.0
    %1155 = vmatpush.msra.mxu0 0.0
    %1156 = vmatpush.msra.mxu0 0.0
    %1157 = vmatpush.msra.mxu0 0.0
    %1158 = vmatpush.msra.mxu0 0.0
    %1159 = vmatpush.msra.mxu0 0.0
    %1160 = vmatpush.msra.mxu0 0.0
    %1161 = vmatpush.msra.mxu0 0.0
    %1162 = vmatpush.msra.mxu0 0.0
    %1163 = vmatpush.msra.mxu0 0.0
    %1164 = vmatpush.msra.mxu0 0.0
    %1165 = vmatpush.msra.mxu0 %v945
    %1166 = vmatpush.msra.mxu0 %v944
    %1167 = vmatmul.f32.gmra.mxu0 %v1146
    %v1168 = vpop.f32.mrf.mxu0
    %v1169 = vadd.f32 0.0, %v1168
    %1170 = vmatmul.f32.gmra.mxu0 %v1149
    %v1171 = vpop.f32.mrf.mxu0
    %v1172 = vadd.f32 0.0, %v1171
    %1173 = vdwg.mxu0
    %v1175 = vsel %vm843, %v1129, 0
    %v1178 = vsel %vm843, %v1144, 0
    %1180 = vmatpush.msra.mxu0 0.0
    %1181 = vmatpush.msra.mxu0 0.0
    %1182 = vmatpush.msra.mxu0 0.0
    %1183 = vmatpush.msra.mxu0 0.0
    %1184 = vmatpush.msra.mxu0 0.0
    %1185 = vmatpush.msra.mxu0 0.0
    %1186 = vmatpush.msra.mxu0 0.0
    %1187 = vmatpush.msra.mxu0 0.0
    %1188 = vmatpush.msra.mxu0 0.0
    %1189 = vmatpush.msra.mxu0 0.0
    %1190 = vmatpush.msra.mxu0 0.0
    %1191 = vmatpush.msra.mxu0 0.0
    %1192 = vmatpush.msra.mxu0 0.0
    %1193 = vmatpush.msra.mxu0 0.0
    %1194 = vmatpush.msra.mxu0 %v947
    %1195 = vmatpush.msra.mxu0 %v946
    %1196 = vmatmul.f32.gmra.mxu0 %v1175
    %v1197 = vpop.f32.mrf.mxu0
    %v1198 = vadd.f32 0.0, %v1197
    %1199 = vmatmul.f32.gmra.mxu0 %v1178
    %v1200 = vpop.f32.mrf.mxu0
    %v1201 = vadd.f32 0.0, %v1200
    %1202 = vdwg.mxu0
    %1203 = vrot.lane.b32.xlu0 %v758, 120
    %v1204 = vpop.permute.xlu0 %1203
    %1205 = vrot.lane.b32.xlu0 %v761, 120
    %v1206 = vpop.permute.xlu0 %1205
    %1207 = vrot.lane.b32.xlu0 %v795, 120
    %v1208 = vpop.permute.xlu0 %1207
    %1209 = vrot.lane.b32.xlu0 %v798, 120
    %v1210 = vpop.permute.xlu0 %1209
    %v1211 = vsel %vm966, %v1204, 0
    %v1213 = vsel %vm966, %v1206, 0
    %v1215 = vsel %vm966, %v1208, 0
    %v1217 = vsel %vm966, %v1210, 0
    %1219 = vmatpush.xpose.msra.mxu0 0.0
    %1220 = vmatpush.xpose.msra.mxu0 0.0
    %1221 = vmatpush.xpose.msra.mxu0 0.0
    %1222 = vmatpush.xpose.msra.mxu0 0.0
    %1223 = vmatpush.xpose.msra.mxu0 0.0
    %1224 = vmatpush.xpose.msra.mxu0 0.0
    %1225 = vmatpush.xpose.msra.mxu0 0.0
    %1226 = vmatpush.xpose.msra.mxu0 0.0
    %1227 = vmatpush.xpose.msra.mxu0 0.0
    %1228 = vmatpush.xpose.msra.mxu0 0.0
    %1229 = vmatpush.xpose.msra.mxu0 0.0
    %1230 = vmatpush.xpose.msra.mxu0 0.0
    %1231 = vmatpush.xpose.msra.mxu0 0.0
    %1232 = vmatpush.xpose.msra.mxu0 0.0
    %1233 = vmatpush.xpose.msra.mxu0 %v1217
    %1234 = vmatpush.xpose.msra.mxu0 %v1215
    %1235 = vmatmul.f32.gmra.mxu0 %v1211
    %v1236 = vpop.f32.mrf.mxu0
    %v1237 = vadd.f32 0.0, %v1236
    %1238 = vmatmul.f32.gmra.mxu0 %v1213
    %v1239 = vpop.f32.mrf.mxu0
    %v1240 = vadd.f32 0.0, %v1239
    %1241 = vdwg.mxu0
    %1242 = vrot.lane.b32.xlu0 %v764, 120
    %v1243 = vpop.permute.xlu0 %1242
    %1244 = vrot.lane.b32.xlu0 %v767, 120
    %v1245 = vpop.permute.xlu0 %1244
    %1246 = vrot.lane.b32.xlu0 %v801, 120
    %v1247 = vpop.permute.xlu0 %1246
    %1248 = vrot.lane.b32.xlu0 %v804, 120
    %v1249 = vpop.permute.xlu0 %1248
    %v1250 = vsel %vm966, %v1243, 0
    %v1252 = vsel %vm966, %v1245, 0
    %v1254 = vsel %vm966, %v1247, 0
    %v1256 = vsel %vm966, %v1249, 0
    %1258 = vmatpush.xpose.msra.mxu0 0.0
    %1259 = vmatpush.xpose.msra.mxu0 0.0
    %1260 = vmatpush.xpose.msra.mxu0 0.0
    %1261 = vmatpush.xpose.msra.mxu0 0.0
    %1262 = vmatpush.xpose.msra.mxu0 0.0
    %1263 = vmatpush.xpose.msra.mxu0 0.0
    %1264 = vmatpush.xpose.msra.mxu0 0.0
    %1265 = vmatpush.xpose.msra.mxu0 0.0
    %1266 = vmatpush.xpose.msra.mxu0 0.0
    %1267 = vmatpush.xpose.msra.mxu0 0.0
    %1268 = vmatpush.xpose.msra.mxu0 0.0
    %1269 = vmatpush.xpose.msra.mxu0 0.0
    %1270 = vmatpush.xpose.msra.mxu0 0.0
    %1271 = vmatpush.xpose.msra.mxu0 0.0
    %1272 = vmatpush.xpose.msra.mxu0 %v1256
    %1273 = vmatpush.xpose.msra.mxu0 %v1254
    %1274 = vmatmul.f32.gmra.mxu0 %v1250
    %v1275 = vpop.f32.mrf.mxu0
    %v1276 = vadd.f32 0.0, %v1275
    %1277 = vmatmul.f32.gmra.mxu0 %v1252
    %v1278 = vpop.f32.mrf.mxu0
    %v1279 = vadd.f32 0.0, %v1278
    %1280 = vdwg.mxu0
    %v1281 = vmul.f32 %v1237, 0.35355338
    %v1282 = vmul.f32 %v1240, 0.35355338
    %v1283 = vmul.f32 %v1276, 0.35355338
    %v1284 = vmul.f32 %v1279, 0.35355338
    %v1285 = vadd.f32 %v1281, %v952
    %v1286 = vadd.f32 %v1282, %v953
    %v1287 = vadd.f32 %v1283, %v954
    %v1288 = vadd.f32 %v1284, %v955
    %v1289 = vadd.f32 %v1285, %v965
    %v1290 = vadd.f32 %v1286, %v965
    %v1291 = vadd.f32 %v1287, %v965
    %v1292 = vadd.f32 %v1288, %v965
    %v1293 = vsel %vm843, %v1289, -inf
    %1294 = vmax.xlane.f32.xlu0 %v1293
    %v1295 = vpop.xlane.xlu0 %1294
    %v1296 = vsel %vm843, %v1290, -inf
    %1297 = vmax.xlane.f32.xlu0 %v1296
    %v1298 = vpop.xlane.xlu0 %1297
    %v1299 = vsel %vm843, %v1291, -inf
    %1300 = vmax.xlane.f32.xlu0 %v1299
    %v1301 = vpop.xlane.xlu0 %1300
    %v1302 = vsel %vm843, %v1292, -inf
    %1303 = vmax.xlane.f32.xlu0 %v1302
    %v1304 = vpop.xlane.xlu0 %1303
    %v1305 = vsub.f32 %v1289, %v1295
    %v1306 = vsub.f32 %v1290, %v1298
    %v1307 = vsub.f32 %v1291, %v1301
    %v1308 = vsub.f32 %v1292, %v1304
    %v1309 = vmul.f32 %v1305, 1.442695
    %v1310 = vpow.pop %v1309
    %v1311 = vmul.f32 %v1306, 1.442695
    %v1312 = vpow.pop %v1311
    %v1313 = vmul.f32 %v1307, 1.442695
    %v1314 = vpow.pop %v1313
    %v1315 = vmul.f32 %v1308, 1.442695
    %v1316 = vpow.pop %v1315
    %v1317 = vsel %vm843, %v1310, 0.0
    %1318 = vadd.xlane.f32.xlu0 %v1317
    %v1319 = vpop.xlane.xlu0 %1318
    %v1320 = vsel %vm843, %v1312, 0.0
    %1321 = vadd.xlane.f32.xlu0 %v1320
    %v1322 = vpop.xlane.xlu0 %1321
    %v1323 = vsel %vm843, %v1314, 0.0
    %1324 = vadd.xlane.f32.xlu0 %v1323
    %v1325 = vpop.xlane.xlu0 %1324
    %v1326 = vsel %vm843, %v1316, 0.0
    %1327 = vadd.xlane.f32.xlu0 %v1326
    %v1328 = vpop.xlane.xlu0 %1327
    %v1329 = vrcp.pop %v1319
    %v1330 = vmul.f32 %v1319, %v1329
    %v1331 = vsub.f32 1.0, %v1330
    %v1332 = vmul.f32 %v1329, %v1331
    %v1333 = vadd.f32 %v1329, %v1332
    %vm1334 = vweird.f32 %v1319
    %vm1335 = vweird.f32 %v1329
    %vm1336 = vmor %vm1334, %vm1335
    %v1337 = vsel %vm1336, %v1329, %v1333
    %v1338 = vand.u32 2147483647, %v1319
    %vm1339 = vcmp.eq.f32.partialorder %v1338, 8.507059e+37
    %v1340 = vand.u32 %v1319, 2147483648
    %v1341 = vor.u32 1.1754944e-38, %v1340
    %v1342 = vsel %vm1339, %v1341, %v1337
    %v1343 = vmul.f32 %v1310, %v1342
    %v1344 = vrcp.pop %v1322
    %v1345 = vmul.f32 %v1322, %v1344
    %v1346 = vsub.f32 1.0, %v1345
    %v1347 = vmul.f32 %v1344, %v1346
    %v1348 = vadd.f32 %v1344, %v1347
    %vm1349 = vweird.f32 %v1322
    %vm1350 = vweird.f32 %v1344
    %vm1351 = vmor %vm1349, %vm1350
    %v1352 = vsel %vm1351, %v1344, %v1348
    %v1353 = vand.u32 2147483647, %v1322
    %vm1354 = vcmp.eq.f32.partialorder %v1353, 8.507059e+37
    %v1355 = vand.u32 %v1322, 2147483648
    %v1356 = vor.u32 1.1754944e-38, %v1355
    %v1357 = vsel %vm1354, %v1356, %v1352
    %v1358 = vmul.f32 %v1312, %v1357
    %v1359 = vrcp.pop %v1325
    %v1360 = vmul.f32 %v1325, %v1359
    %v1361 = vsub.f32 1.0, %v1360
    %v1362 = vmul.f32 %v1359, %v1361
    %v1363 = vadd.f32 %v1359, %v1362
    %vm1364 = vweird.f32 %v1325
    %vm1365 = vweird.f32 %v1359
    %vm1366 = vmor %vm1364, %vm1365
    %v1367 = vsel %vm1366, %v1359, %v1363
    %v1368 = vand.u32 2147483647, %v1325
    %vm1369 = vcmp.eq.f32.partialorder %v1368, 8.507059e+37
    %v1370 = vand.u32 %v1325, 2147483648
    %v1371 = vor.u32 1.1754944e-38, %v1370
    %v1372 = vsel %vm1369, %v1371, %v1367
    %v1373 = vmul.f32 %v1314, %v1372
    %v1374 = vrcp.pop %v1328
    %v1375 = vmul.f32 %v1328, %v1374
    %v1376 = vsub.f32 1.0, %v1375
    %v1377 = vmul.f32 %v1374, %v1376
    %v1378 = vadd.f32 %v1374, %v1377
    %vm1379 = vweird.f32 %v1328
    %vm1380 = vweird.f32 %v1374
    %vm1381 = vmor %vm1379, %vm1380
    %v1382 = vsel %vm1381, %v1374, %v1378
    %v1383 = vand.u32 2147483647, %v1328
    %vm1384 = vcmp.eq.f32.partialorder %v1383, 8.507059e+37
    %v1385 = vand.u32 %v1328, 2147483648
    %v1386 = vor.u32 1.1754944e-38, %v1385
    %v1387 = vsel %vm1384, %v1386, %v1382
    %v1388 = vmul.f32 %v1316, %v1387
    %1391 = vrot.lane.b32.xlu0 %v944, 120
    %v1392 = vpop.permute.xlu0 %1391
    %1393 = vrot.lane.b32.xlu0 %v945, 120
    %v1394 = vpop.permute.xlu0 %1393
    %v1398 = vsel %vm843, %v1343, 0
    %v1401 = vsel %vm843, %v1358, 0
    %1403 = vmatpush.msra.mxu0 0.0
    %1404 = vmatpush.msra.mxu0 0.0
    %1405 = vmatpush.msra.mxu0 0.0
    %1406 = vmatpush.msra.mxu0 0.0
    %1407 = vmatpush.msra.mxu0 0.0
    %1408 = vmatpush.msra.mxu0 0.0
    %1409 = vmatpush.msra.mxu0 0.0
    %1410 = vmatpush.msra.mxu0 0.0
    %1411 = vmatpush.msra.mxu0 0.0
    %1412 = vmatpush.msra.mxu0 0.0
    %1413 = vmatpush.msra.mxu0 0.0
    %1414 = vmatpush.msra.mxu0 0.0
    %1415 = vmatpush.msra.mxu0 0.0
    %1416 = vmatpush.msra.mxu0 0.0
    %1417 = vmatpush.msra.mxu0 %v1394
    %1418 = vmatpush.msra.mxu0 %v1392
    %1419 = vmatmul.f32.gmra.mxu0 %v1398
    %v1420 = vpop.f32.mrf.mxu0
    %v1421 = vadd.f32 0.0, %v1420
    %1422 = vmatmul.f32.gmra.mxu0 %v1401
    %v1423 = vpop.f32.mrf.mxu0
    %v1424 = vadd.f32 0.0, %v1423
    %1425 = vdwg.mxu0
    %1428 = vrot.lane.b32.xlu0 %v946, 120
    %v1429 = vpop.permute.xlu0 %1428
    %1430 = vrot.lane.b32.xlu0 %v947, 120
    %v1431 = vpop.permute.xlu0 %1430
    %v1435 = vsel %vm843, %v1373, 0
    %v1438 = vsel %vm843, %v1388, 0
    %1440 = vmatpush.msra.mxu0 0.0
    %1441 = vmatpush.msra.mxu0 0.0
    %1442 = vmatpush.msra.mxu0 0.0
    %1443 = vmatpush.msra.mxu0 0.0
    %1444 = vmatpush.msra.mxu0 0.0
    %1445 = vmatpush.msra.mxu0 0.0
    %1446 = vmatpush.msra.mxu0 0.0
    %1447 = vmatpush.msra.mxu0 0.0
    %1448 = vmatpush.msra.mxu0 0.0
    %1449 = vmatpush.msra.mxu0 0.0
    %1450 = vmatpush.msra.mxu0 0.0
    %1451 = vmatpush.msra.mxu0 0.0
    %1452 = vmatpush.msra.mxu0 0.0
    %1453 = vmatpush.msra.mxu0 0.0
    %1454 = vmatpush.msra.mxu0 %v1431
    %1455 = vmatpush.msra.mxu0 %v1429
    %1456 = vmatmul.f32.gmra.mxu0 %v1435
    %v1457 = vpop.f32.mrf.mxu0
    %v1458 = vadd.f32 0.0, %v1457
    %1459 = vmatmul.f32.gmra.mxu0 %v1438
    %v1460 = vpop.f32.mrf.mxu0
    %v1461 = vadd.f32 0.0, %v1460
    %1462 = vdwg.mxu0
    %1463 = vrot.lane.b32.xlu0 %v758, 112
    %v1464 = vpop.permute.xlu0 %1463
    %1465 = vrot.lane.b32.xlu0 %v761, 112
    %v1466 = vpop.permute.xlu0 %1465
    %1467 = vrot.lane.b32.xlu0 %v795, 112
    %v1468 = vpop.permute.xlu0 %1467
    %1469 = vrot.lane.b32.xlu0 %v798, 112
    %v1470 = vpop.permute.xlu0 %1469
    %v1471 = vsel %vm966, %v1464, 0
    %v1473 = vsel %vm966, %v1466, 0
    %v1475 = vsel %vm966, %v1468, 0
    %v1477 = vsel %vm966, %v1470, 0
    %1479 = vmatpush.xpose.msra.mxu0 0.0
    %1480 = vmatpush.xpose.msra.mxu0 0.0
    %1481 = vmatpush.xpose.msra.mxu0 0.0
    %1482 = vmatpush.xpose.msra.mxu0 0.0
    %1483 = vmatpush.xpose.msra.mxu0 0.0
    %1484 = vmatpush.xpose.msra.mxu0 0.0
    %1485 = vmatpush.xpose.msra.mxu0 0.0
    %1486 = vmatpush.xpose.msra.mxu0 0.0
    %1487 = vmatpush.xpose.msra.mxu0 0.0
    %1488 = vmatpush.xpose.msra.mxu0 0.0
    %1489 = vmatpush.xpose.msra.mxu0 0.0
    %1490 = vmatpush.xpose.msra.mxu0 0.0
    %1491 = vmatpush.xpose.msra.mxu0 0.0
    %1492 = vmatpush.xpose.msra.mxu0 0.0
    %1493 = vmatpush.xpose.msra.mxu0 %v1477
    %1494 = vmatpush.xpose.msra.mxu0 %v1475
    %1495 = vmatmul.f32.gmra.mxu0 %v1471
    %v1496 = vpop.f32.mrf.mxu0
    %v1497 = vadd.f32 0.0, %v1496
    %1498 = vmatmul.f32.gmra.mxu0 %v1473
    %v1499 = vpop.f32.mrf.mxu0
    %v1500 = vadd.f32 0.0, %v1499
    %1501 = vdwg.mxu0
    %1502 = vrot.lane.b32.xlu0 %v764, 112
    %v1503 = vpop.permute.xlu0 %1502
    %1504 = vrot.lane.b32.xlu0 %v767, 112
    %v1505 = vpop.permute.xlu0 %1504
    %1506 = vrot.lane.b32.xlu0 %v801, 112
    %v1507 = vpop.permute.xlu0 %1506
    %1508 = vrot.lane.b32.xlu0 %v804, 112
    %v1509 = vpop.permute.xlu0 %1508
    %v1510 = vsel %vm966, %v1503, 0
    %v1512 = vsel %vm966, %v1505, 0
    %v1514 = vsel %vm966, %v1507, 0
    %v1516 = vsel %vm966, %v1509, 0
    %1518 = vmatpush.xpose.msra.mxu0 0.0
    %1519 = vmatpush.xpose.msra.mxu0 0.0
    %1520 = vmatpush.xpose.msra.mxu0 0.0
    %1521 = vmatpush.xpose.msra.mxu0 0.0
    %1522 = vmatpush.xpose.msra.mxu0 0.0
    %1523 = vmatpush.xpose.msra.mxu0 0.0
    %1524 = vmatpush.xpose.msra.mxu0 0.0
    %1525 = vmatpush.xpose.msra.mxu0 0.0
    %1526 = vmatpush.xpose.msra.mxu0 0.0
    %1527 = vmatpush.xpose.msra.mxu0 0.0
    %1528 = vmatpush.xpose.msra.mxu0 0.0
    %1529 = vmatpush.xpose.msra.mxu0 0.0
    %1530 = vmatpush.xpose.msra.mxu0 0.0
    %1531 = vmatpush.xpose.msra.mxu0 0.0
    %1532 = vmatpush.xpose.msra.mxu0 %v1516
    %1533 = vmatpush.xpose.msra.mxu0 %v1514
    %1534 = vmatmul.f32.gmra.mxu0 %v1510
    %v1535 = vpop.f32.mrf.mxu0
    %v1536 = vadd.f32 0.0, %v1535
    %1537 = vmatmul.f32.gmra.mxu0 %v1512
    %v1538 = vpop.f32.mrf.mxu0
    %v1539 = vadd.f32 0.0, %v1538
    %1540 = vdwg.mxu0
    %v1541 = vmul.f32 %v1497, 0.35355338
    %v1542 = vmul.f32 %v1500, 0.35355338
    %v1543 = vmul.f32 %v1536, 0.35355338
    %v1544 = vmul.f32 %v1539, 0.35355338
    %v1545 = vadd.f32 %v1541, %v956
    %v1546 = vadd.f32 %v1542, %v957
    %v1547 = vadd.f32 %v1543, %v958
    %v1548 = vadd.f32 %v1544, %v959
    %v1549 = vadd.f32 %v1545, %v965
    %v1550 = vadd.f32 %v1546, %v965
    %v1551 = vadd.f32 %v1547, %v965
    %v1552 = vadd.f32 %v1548, %v965
    %v1553 = vsel %vm843, %v1549, -inf
    %1554 = vmax.xlane.f32.xlu0 %v1553
    %v1555 = vpop.xlane.xlu0 %1554
    %v1556 = vsel %vm843, %v1550, -inf
    %1557 = vmax.xlane.f32.xlu0 %v1556
    %v1558 = vpop.xlane.xlu0 %1557
    %v1559 = vsel %vm843, %v1551, -inf
    %1560 = vmax.xlane.f32.xlu0 %v1559
    %v1561 = vpop.xlane.xlu0 %1560
    %v1562 = vsel %vm843, %v1552, -inf
    %1563 = vmax.xlane.f32.xlu0 %v1562
    %v1564 = vpop.xlane.xlu0 %1563
    %v1565 = vsub.f32 %v1549, %v1555
    %v1566 = vsub.f32 %v1550, %v1558
    %v1567 = vsub.f32 %v1551, %v1561
    %v1568 = vsub.f32 %v1552, %v1564
    %v1569 = vmul.f32 %v1565, 1.442695
    %v1570 = vpow.pop %v1569
    %v1571 = vmul.f32 %v1566, 1.442695
    %v1572 = vpow.pop %v1571
    %v1573 = vmul.f32 %v1567, 1.442695
    %v1574 = vpow.pop %v1573
    %v1575 = vmul.f32 %v1568, 1.442695
    %v1576 = vpow.pop %v1575
    %v1577 = vsel %vm843, %v1570, 0.0
    %1578 = vadd.xlane.f32.xlu0 %v1577
    %v1579 = vpop.xlane.xlu0 %1578
    %v1580 = vsel %vm843, %v1572, 0.0
    %1581 = vadd.xlane.f32.xlu0 %v1580
    %v1582 = vpop.xlane.xlu0 %1581
    %v1583 = vsel %vm843, %v1574, 0.0
    %1584 = vadd.xlane.f32.xlu0 %v1583
    %v1585 = vpop.xlane.xlu0 %1584
    %v1586 = vsel %vm843, %v1576, 0.0
    %1587 = vadd.xlane.f32.xlu0 %v1586
    %v1588 = vpop.xlane.xlu0 %1587
    %v1589 = vrcp.pop %v1579
    %v1590 = vmul.f32 %v1579, %v1589
    %v1591 = vsub.f32 1.0, %v1590
    %v1592 = vmul.f32 %v1589, %v1591
    %v1593 = vadd.f32 %v1589, %v1592
    %vm1594 = vweird.f32 %v1579
    %vm1595 = vweird.f32 %v1589
    %vm1596 = vmor %vm1594, %vm1595
    %v1597 = vsel %vm1596, %v1589, %v1593
    %v1598 = vand.u32 2147483647, %v1579
    %vm1599 = vcmp.eq.f32.partialorder %v1598, 8.507059e+37
    %v1600 = vand.u32 %v1579, 2147483648
    %v1601 = vor.u32 1.1754944e-38, %v1600
    %v1602 = vsel %vm1599, %v1601, %v1597
    %v1603 = vmul.f32 %v1570, %v1602
    %v1604 = vrcp.pop %v1582
    %v1605 = vmul.f32 %v1582, %v1604
    %v1606 = vsub.f32 1.0, %v1605
    %v1607 = vmul.f32 %v1604, %v1606
    %v1608 = vadd.f32 %v1604, %v1607
    %vm1609 = vweird.f32 %v1582
    %vm1610 = vweird.f32 %v1604
    %vm1611 = vmor %vm1609, %vm1610
    %v1612 = vsel %vm1611, %v1604, %v1608
    %v1613 = vand.u32 2147483647, %v1582
    %vm1614 = vcmp.eq.f32.partialorder %v1613, 8.507059e+37
    %v1615 = vand.u32 %v1582, 2147483648
    %v1616 = vor.u32 1.1754944e-38, %v1615
    %v1617 = vsel %vm1614, %v1616, %v1612
    %v1618 = vmul.f32 %v1572, %v1617
    %v1619 = vrcp.pop %v1585
    %v1620 = vmul.f32 %v1585, %v1619
    %v1621 = vsub.f32 1.0, %v1620
    %v1622 = vmul.f32 %v1619, %v1621
    %v1623 = vadd.f32 %v1619, %v1622
    %vm1624 = vweird.f32 %v1585
    %vm1625 = vweird.f32 %v1619
    %vm1626 = vmor %vm1624, %vm1625
    %v1627 = vsel %vm1626, %v1619, %v1623
    %v1628 = vand.u32 2147483647, %v1585
    %vm1629 = vcmp.eq.f32.partialorder %v1628, 8.507059e+37
    %v1630 = vand.u32 %v1585, 2147483648
    %v1631 = vor.u32 1.1754944e-38, %v1630
    %v1632 = vsel %vm1629, %v1631, %v1627
    %v1633 = vmul.f32 %v1574, %v1632
    %v1634 = vrcp.pop %v1588
    %v1635 = vmul.f32 %v1588, %v1634
    %v1636 = vsub.f32 1.0, %v1635
    %v1637 = vmul.f32 %v1634, %v1636
    %v1638 = vadd.f32 %v1634, %v1637
    %vm1639 = vweird.f32 %v1588
    %vm1640 = vweird.f32 %v1634
    %vm1641 = vmor %vm1639, %vm1640
    %v1642 = vsel %vm1641, %v1634, %v1638
    %v1643 = vand.u32 2147483647, %v1588
    %vm1644 = vcmp.eq.f32.partialorder %v1643, 8.507059e+37
    %v1645 = vand.u32 %v1588, 2147483648
    %v1646 = vor.u32 1.1754944e-38, %v1645
    %v1647 = vsel %vm1644, %v1646, %v1642
    %v1648 = vmul.f32 %v1576, %v1647
    %1649 = vrot.lane.b32.xlu0 %v944, 112
    %v1650 = vpop.permute.xlu0 %1649
    %1651 = vrot.lane.b32.xlu0 %v945, 112
    %v1652 = vpop.permute.xlu0 %1651
    %v1656 = vsel %vm843, %v1603, 0
    %v1659 = vsel %vm843, %v1618, 0
    %1661 = vmatpush.msra.mxu0 0.0
    %1662 = vmatpush.msra.mxu0 0.0
    %1663 = vmatpush.msra.mxu0 0.0
    %1664 = vmatpush.msra.mxu0 0.0
    %1665 = vmatpush.msra.mxu0 0.0
    %1666 = vmatpush.msra.mxu0 0.0
    %1667 = vmatpush.msra.mxu0 0.0
    %1668 = vmatpush.msra.mxu0 0.0
    %1669 = vmatpush.msra.mxu0 0.0
    %1670 = vmatpush.msra.mxu0 0.0
    %1671 = vmatpush.msra.mxu0 0.0
    %1672 = vmatpush.msra.mxu0 0.0
    %1673 = vmatpush.msra.mxu0 0.0
    %1674 = vmatpush.msra.mxu0 0.0
    %1675 = vmatpush.msra.mxu0 %v1652
    %1676 = vmatpush.msra.mxu0 %v1650
    %1677 = vmatmul.f32.gmra.mxu0 %v1656
    %v1678 = vpop.f32.mrf.mxu0
    %v1679 = vadd.f32 0.0, %v1678
    %1680 = vmatmul.f32.gmra.mxu0 %v1659
    %v1681 = vpop.f32.mrf.mxu0
    %v1682 = vadd.f32 0.0, %v1681
    %1683 = vdwg.mxu0
    %1684 = vrot.lane.b32.xlu0 %v946, 112
    %v1685 = vpop.permute.xlu0 %1684
    %1686 = vrot.lane.b32.xlu0 %v947, 112
    %v1687 = vpop.permute.xlu0 %1686
    %v1691 = vsel %vm843, %v1633, 0
    %v1694 = vsel %vm843, %v1648, 0
    %1696 = vmatpush.msra.mxu0 0.0
    %1697 = vmatpush.msra.mxu0 0.0
    %1698 = vmatpush.msra.mxu0 0.0
    %1699 = vmatpush.msra.mxu0 0.0
    %1700 = vmatpush.msra.mxu0 0.0
    %1701 = vmatpush.msra.mxu0 0.0
    %1702 = vmatpush.msra.mxu0 0.0
    %1703 = vmatpush.msra.mxu0 0.0
    %1704 = vmatpush.msra.mxu0 0.0
    %1705 = vmatpush.msra.mxu0 0.0
    %1706 = vmatpush.msra.mxu0 0.0
    %1707 = vmatpush.msra.mxu0 0.0
    %1708 = vmatpush.msra.mxu0 0.0
    %1709 = vmatpush.msra.mxu0 0.0
    %1710 = vmatpush.msra.mxu0 %v1687
    %1711 = vmatpush.msra.mxu0 %v1685
    %1712 = vmatmul.f32.gmra.mxu0 %v1691
    %v1713 = vpop.f32.mrf.mxu0
    %v1714 = vadd.f32 0.0, %v1713
    %1715 = vmatmul.f32.gmra.mxu0 %v1694
    %v1716 = vpop.f32.mrf.mxu0
    %v1717 = vadd.f32 0.0, %v1716
    %1718 = vdwg.mxu0
    %1719 = vrot.lane.b32.xlu0 %v758, 104
    %v1720 = vpop.permute.xlu0 %1719
    %1721 = vrot.lane.b32.xlu0 %v761, 104
    %v1722 = vpop.permute.xlu0 %1721
    %1723 = vrot.lane.b32.xlu0 %v795, 104
    %v1724 = vpop.permute.xlu0 %1723
    %1725 = vrot.lane.b32.xlu0 %v798, 104
    %v1726 = vpop.permute.xlu0 %1725
    %v1727 = vsel %vm966, %v1720, 0
    %v1729 = vsel %vm966, %v1722, 0
    %v1731 = vsel %vm966, %v1724, 0
    %v1733 = vsel %vm966, %v1726, 0
    %1735 = vmatpush.xpose.msra.mxu0 0.0
    %1736 = vmatpush.xpose.msra.mxu0 0.0
    %1737 = vmatpush.xpose.msra.mxu0 0.0
    %1738 = vmatpush.xpose.msra.mxu0 0.0
    %1739 = vmatpush.xpose.msra.mxu0 0.0
    %1740 = vmatpush.xpose.msra.mxu0 0.0
    %1741 = vmatpush.xpose.msra.mxu0 0.0
    %1742 = vmatpush.xpose.msra.mxu0 0.0
    %1743 = vmatpush.xpose.msra.mxu0 0.0
    %1744 = vmatpush.xpose.msra.mxu0 0.0
    %1745 = vmatpush.xpose.msra.mxu0 0.0
    %1746 = vmatpush.xpose.msra.mxu0 0.0
    %1747 = vmatpush.xpose.msra.mxu0 0.0
    %1748 = vmatpush.xpose.msra.mxu0 0.0
    %1749 = vmatpush.xpose.msra.mxu0 %v1733
    %1750 = vmatpush.xpose.msra.mxu0 %v1731
    %1751 = vmatmul.f32.gmra.mxu0 %v1727
    %v1752 = vpop.f32.mrf.mxu0
    %v1753 = vadd.f32 0.0, %v1752
    %1754 = vmatmul.f32.gmra.mxu0 %v1729
    %v1755 = vpop.f32.mrf.mxu0
    %v1756 = vadd.f32 0.0, %v1755
    %1757 = vdwg.mxu0
    %1758 = vrot.lane.b32.xlu0 %v764, 104
    %v1759 = vpop.permute.xlu0 %1758
    %1760 = vrot.lane.b32.xlu0 %v767, 104
    %v1761 = vpop.permute.xlu0 %1760
    %1762 = vrot.lane.b32.xlu0 %v801, 104
    %v1763 = vpop.permute.xlu0 %1762
    %1764 = vrot.lane.b32.xlu0 %v804, 104
    %v1765 = vpop.permute.xlu0 %1764
    %v1766 = vsel %vm966, %v1759, 0
    %v1768 = vsel %vm966, %v1761, 0
    %v1770 = vsel %vm966, %v1763, 0
    %v1772 = vsel %vm966, %v1765, 0
    %1774 = vmatpush.xpose.msra.mxu0 0.0
    %1775 = vmatpush.xpose.msra.mxu0 0.0
    %1776 = vmatpush.xpose.msra.mxu0 0.0
    %1777 = vmatpush.xpose.msra.mxu0 0.0
    %1778 = vmatpush.xpose.msra.mxu0 0.0
    %1779 = vmatpush.xpose.msra.mxu0 0.0
    %1780 = vmatpush.xpose.msra.mxu0 0.0
    %1781 = vmatpush.xpose.msra.mxu0 0.0
    %1782 = vmatpush.xpose.msra.mxu0 0.0
    %1783 = vmatpush.xpose.msra.mxu0 0.0
    %1784 = vmatpush.xpose.msra.mxu0 0.0
    %1785 = vmatpush.xpose.msra.mxu0 0.0
    %1786 = vmatpush.xpose.msra.mxu0 0.0
    %1787 = vmatpush.xpose.msra.mxu0 0.0
    %1788 = vmatpush.xpose.msra.mxu0 %v1772
    %1789 = vmatpush.xpose.msra.mxu0 %v1770
    %1790 = vmatmul.f32.gmra.mxu0 %v1766
    %v1791 = vpop.f32.mrf.mxu0
    %v1792 = vadd.f32 0.0, %v1791
    %1793 = vmatmul.f32.gmra.mxu0 %v1768
    %v1794 = vpop.f32.mrf.mxu0
    %v1795 = vadd.f32 0.0, %v1794
    %1796 = vdwg.mxu0
    %v1797 = vmul.f32 %v1753, 0.35355338
    %v1798 = vmul.f32 %v1756, 0.35355338
    %v1799 = vmul.f32 %v1792, 0.35355338
    %v1800 = vmul.f32 %v1795, 0.35355338
    %v1801 = vadd.f32 %v1797, %v960
    %v1802 = vadd.f32 %v1798, %v961
    %v1803 = vadd.f32 %v1799, %v962
    %v1804 = vadd.f32 %v1800, %v963
    %v1805 = vadd.f32 %v1801, %v965
    %v1806 = vadd.f32 %v1802, %v965
    %v1807 = vadd.f32 %v1803, %v965
    %v1808 = vadd.f32 %v1804, %v965
    %v1809 = vsel %vm843, %v1805, -inf
    %1810 = vmax.xlane.f32.xlu0 %v1809
    %v1811 = vpop.xlane.xlu0 %1810
    %v1812 = vsel %vm843, %v1806, -inf
    %1813 = vmax.xlane.f32.xlu0 %v1812
    %v1814 = vpop.xlane.xlu0 %1813
    %v1815 = vsel %vm843, %v1807, -inf
    %1816 = vmax.xlane.f32.xlu0 %v1815
    %v1817 = vpop.xlane.xlu0 %1816
    %v1818 = vsel %vm843, %v1808, -inf
    %1819 = vmax.xlane.f32.xlu0 %v1818
    %v1820 = vpop.xlane.xlu0 %1819
    %v1821 = vsub.f32 %v1805, %v1811
    %v1822 = vsub.f32 %v1806, %v1814
    %v1823 = vsub.f32 %v1807, %v1817
    %v1824 = vsub.f32 %v1808, %v1820
    %v1825 = vmul.f32 %v1821, 1.442695
    %v1826 = vpow.pop %v1825
    %v1827 = vmul.f32 %v1822, 1.442695
    %v1828 = vpow.pop %v1827
    %v1829 = vmul.f32 %v1823, 1.442695
    %v1830 = vpow.pop %v1829
    %v1831 = vmul.f32 %v1824, 1.442695
    %v1832 = vpow.pop %v1831
    %v1833 = vsel %vm843, %v1826, 0.0
    %1834 = vadd.xlane.f32.xlu0 %v1833
    %v1835 = vpop.xlane.xlu0 %1834
    %v1836 = vsel %vm843, %v1828, 0.0
    %1837 = vadd.xlane.f32.xlu0 %v1836
    %v1838 = vpop.xlane.xlu0 %1837
    %v1839 = vsel %vm843, %v1830, 0.0
    %1840 = vadd.xlane.f32.xlu0 %v1839
    %v1841 = vpop.xlane.xlu0 %1840
    %v1842 = vsel %vm843, %v1832, 0.0
    %1843 = vadd.xlane.f32.xlu0 %v1842
    %v1844 = vpop.xlane.xlu0 %1843
    %v1845 = vrcp.pop %v1835
    %v1846 = vmul.f32 %v1835, %v1845
    %v1847 = vsub.f32 1.0, %v1846
    %v1848 = vmul.f32 %v1845, %v1847
    %v1849 = vadd.f32 %v1845, %v1848
    %vm1850 = vweird.f32 %v1835
    %vm1851 = vweird.f32 %v1845
    %vm1852 = vmor %vm1850, %vm1851
    %v1853 = vsel %vm1852, %v1845, %v1849
    %v1854 = vand.u32 2147483647, %v1835
    %vm1855 = vcmp.eq.f32.partialorder %v1854, 8.507059e+37
    %v1856 = vand.u32 %v1835, 2147483648
    %v1857 = vor.u32 1.1754944e-38, %v1856
    %v1858 = vsel %vm1855, %v1857, %v1853
    %v1859 = vmul.f32 %v1826, %v1858
    %v1860 = vrcp.pop %v1838
    %v1861 = vmul.f32 %v1838, %v1860
    %v1862 = vsub.f32 1.0, %v1861
    %v1863 = vmul.f32 %v1860, %v1862
    %v1864 = vadd.f32 %v1860, %v1863
    %vm1865 = vweird.f32 %v1838
    %vm1866 = vweird.f32 %v1860
    %vm1867 = vmor %vm1865, %vm1866
    %v1868 = vsel %vm1867, %v1860, %v1864
    %v1869 = vand.u32 2147483647, %v1838
    %vm1870 = vcmp.eq.f32.partialorder %v1869, 8.507059e+37
    %v1871 = vand.u32 %v1838, 2147483648
    %v1872 = vor.u32 1.1754944e-38, %v1871
    %v1873 = vsel %vm1870, %v1872, %v1868
    %v1874 = vmul.f32 %v1828, %v1873
    %v1875 = vrcp.pop %v1841
    %v1876 = vmul.f32 %v1841, %v1875
    %v1877 = vsub.f32 1.0, %v1876
    %v1878 = vmul.f32 %v1875, %v1877
    %v1879 = vadd.f32 %v1875, %v1878
    %vm1880 = vweird.f32 %v1841
    %vm1881 = vweird.f32 %v1875
    %vm1882 = vmor %vm1880, %vm1881
    %v1883 = vsel %vm1882, %v1875, %v1879
    %v1884 = vand.u32 2147483647, %v1841
    %vm1885 = vcmp.eq.f32.partialorder %v1884, 8.507059e+37
    %v1886 = vand.u32 %v1841, 2147483648
    %v1887 = vor.u32 1.1754944e-38, %v1886
    %v1888 = vsel %vm1885, %v1887, %v1883
    %v1889 = vmul.f32 %v1830, %v1888
    %v1890 = vrcp.pop %v1844
    %v1891 = vmul.f32 %v1844, %v1890
    %v1892 = vsub.f32 1.0, %v1891
    %v1893 = vmul.f32 %v1890, %v1892
    %v1894 = vadd.f32 %v1890, %v1893
    %vm1895 = vweird.f32 %v1844
    %vm1896 = vweird.f32 %v1890
    %vm1897 = vmor %vm1895, %vm1896
    %v1898 = vsel %vm1897, %v1890, %v1894
    %v1899 = vand.u32 2147483647, %v1844
    %vm1900 = vcmp.eq.f32.partialorder %v1899, 8.507059e+37
    %v1901 = vand.u32 %v1844, 2147483648
    %v1902 = vor.u32 1.1754944e-38, %v1901
    %v1903 = vsel %vm1900, %v1902, %v1898
    %v1904 = vmul.f32 %v1832, %v1903
    %1905 = vrot.lane.b32.xlu0 %v944, 104
    %v1906 = vpop.permute.xlu0 %1905
    %1907 = vrot.lane.b32.xlu0 %v945, 104
    %v1908 = vpop.permute.xlu0 %1907
    %v1912 = vsel %vm843, %v1859, 0
    %v1915 = vsel %vm843, %v1874, 0
    %1917 = vmatpush.msra.mxu0 0.0
    %1918 = vmatpush.msra.mxu0 0.0
    %1919 = vmatpush.msra.mxu0 0.0
    %1920 = vmatpush.msra.mxu0 0.0
    %1921 = vmatpush.msra.mxu0 0.0
    %1922 = vmatpush.msra.mxu0 0.0
    %1923 = vmatpush.msra.mxu0 0.0
    %1924 = vmatpush.msra.mxu0 0.0
    %1925 = vmatpush.msra.mxu0 0.0
    %1926 = vmatpush.msra.mxu0 0.0
    %1927 = vmatpush.msra.mxu0 0.0
    %1928 = vmatpush.msra.mxu0 0.0
    %1929 = vmatpush.msra.mxu0 0.0
    %1930 = vmatpush.msra.mxu0 0.0
    %1931 = vmatpush.msra.mxu0 %v1908
    %1932 = vmatpush.msra.mxu0 %v1906
    %1933 = vmatmul.f32.gmra.mxu0 %v1912
    %v1934 = vpop.f32.mrf.mxu0
    %v1935 = vadd.f32 0.0, %v1934
    %1936 = vmatmul.f32.gmra.mxu0 %v1915
    %v1937 = vpop.f32.mrf.mxu0
    %v1938 = vadd.f32 0.0, %v1937
    %1939 = vdwg.mxu0
    %1940 = vrot.lane.b32.xlu0 %v946, 104
    %v1941 = vpop.permute.xlu0 %1940
    %1942 = vrot.lane.b32.xlu0 %v947, 104
    %v1943 = vpop.permute.xlu0 %1942
    %v1947 = vsel %vm843, %v1889, 0
    %v1950 = vsel %vm843, %v1904, 0
    %1952 = vmatpush.msra.mxu0 0.0
    %1953 = vmatpush.msra.mxu0 0.0
    %1954 = vmatpush.msra.mxu0 0.0
    %1955 = vmatpush.msra.mxu0 0.0
    %1956 = vmatpush.msra.mxu0 0.0
    %1957 = vmatpush.msra.mxu0 0.0
    %1958 = vmatpush.msra.mxu0 0.0
    %1959 = vmatpush.msra.mxu0 0.0
    %1960 = vmatpush.msra.mxu0 0.0
    %1961 = vmatpush.msra.mxu0 0.0
    %1962 = vmatpush.msra.mxu0 0.0
    %1963 = vmatpush.msra.mxu0 0.0
    %1964 = vmatpush.msra.mxu0 0.0
    %1965 = vmatpush.msra.mxu0 0.0
    %1966 = vmatpush.msra.mxu0 %v1943
    %1967 = vmatpush.msra.mxu0 %v1941
    %1968 = vmatmul.f32.gmra.mxu0 %v1947
    %v1969 = vpop.f32.mrf.mxu0
    %v1970 = vadd.f32 0.0, %v1969
    %1971 = vmatmul.f32.gmra.mxu0 %v1950
    %v1972 = vpop.f32.mrf.mxu0
    %v1973 = vadd.f32 0.0, %v1972
    %1974 = vdwg.mxu0
    %1979 = vrot.lane.b32.xlu0 %v1421, 8
    %v1980 = vpop.permute.xlu0 %1979
    %1981 = vrot.lane.b32.xlu0 %v1424, 8
    %v1982 = vpop.permute.xlu0 %1981
    %1983 = vrot.lane.b32.xlu0 %v1458, 8
    %v1984 = vpop.permute.xlu0 %1983
    %1985 = vrot.lane.b32.xlu0 %v1461, 8
    %v1986 = vpop.permute.xlu0 %1985
    %1995 = vrot.lane.b32.xlu0 %v1679, 16
    %v1996 = vpop.permute.xlu0 %1995
    %1997 = vrot.lane.b32.xlu0 %v1682, 16
    %v1998 = vpop.permute.xlu0 %1997
    %1999 = vrot.lane.b32.xlu0 %v1714, 16
    %v2000 = vpop.permute.xlu0 %1999
    %2001 = vrot.lane.b32.xlu0 %v1717, 16
    %v2002 = vpop.permute.xlu0 %2001
    %2011 = vrot.lane.b32.xlu0 %v1935, 24
    %v2012 = vpop.permute.xlu0 %2011
    %2013 = vrot.lane.b32.xlu0 %v1938, 24
    %v2014 = vpop.permute.xlu0 %2013
    %2015 = vrot.lane.b32.xlu0 %v1970, 24
    %v2016 = vpop.permute.xlu0 %2015
    %2017 = vrot.lane.b32.xlu0 %v1973, 24
    %v2018 = vpop.permute.xlu0 %2017
    %v2023 = vsel %vm966, %v1169, %v1980
    %v2024 = vsel %vm966, %v1172, %v1982
    %v2025 = vsel %vm966, %v1198, %v1984
    %v2026 = vsel %vm966, %v1201, %v1986
    %v2027 = vsel %vm843, %v2023, %v1996
    %v2028 = vsel %vm843, %v2024, %v1998
    %v2029 = vsel %vm843, %v2025, %v2000
    %v2030 = vsel %vm843, %v2026, %v2002
    %vm2031 = vcmask 195584
    %v2032 = vsel %vm2031, %v2027, %v2012
    %v2033 = vsel %vm2031, %v2028, %v2014
    %v2034 = vsel %vm2031, %v2029, %v2016
    %v2035 = vsel %vm2031, %v2030, %v2018
    %v2036 = vld [vmem:[%s49] sm:$0xff]
    %v2037 = vld [vmem:[%s49 + $0x8] sm:$0xff]
    %v2038 = vld [vmem:[%s49 + $0x10] sm:$0xff]
    %v2039 = vld [vmem:[%s49 + $0x18] sm:$0xff]
    %v2040 = vld [vmem:[%s51] sm:$0x1]
    %v2042 = vperm.slane %v2040, 0
    %v2045 = vsel %vm315, %v2032, 0
    %v2048 = vsel %vm315, %v2033, 0
    %v2051 = vsel %vm315, %v2034, 0
    %v2054 = vsel %vm315, %v2035, 0
    %2056 = vmatpush.msra.mxu0 0.0
    %2057 = vmatpush.msra.mxu0 0.0
    %2058 = vmatpush.msra.mxu0 0.0
    %2059 = vmatpush.msra.mxu0 0.0
    %2060 = vmatpush.msra.mxu0 0.0
    %2061 = vmatpush.msra.mxu0 0.0
    %2062 = vmatpush.msra.mxu0 0.0
    %2063 = vmatpush.msra.mxu0 0.0
    %2064 = vmatpush.msra.mxu0 0.0
    %2065 = vmatpush.msra.mxu0 0.0
    %2066 = vmatpush.msra.mxu0 0.0
    %2067 = vmatpush.msra.mxu0 0.0
    %2068 = vmatpush.msra.mxu0 %v2039
    %2069 = vmatpush.msra.mxu0 %v2038
    %2070 = vmatpush.msra.mxu0 %v2037
    %2071 = vmatpush.msra.mxu0 %v2036
    %2072 = vmatmul.f32.gmra.mxu0 %v2045
    %v2073 = vpop.f32.mrf.mxu0
    %v2074 = vadd.f32 %v2042, %v2073
    %2075 = vmatmul.f32.gmra.mxu0 %v2048
    %v2076 = vpop.f32.mrf.mxu0
    %v2077 = vadd.f32 %v2042, %v2076
    %2078 = vmatmul.f32.gmra.mxu0 %v2051
    %v2079 = vpop.f32.mrf.mxu0
    %v2080 = vadd.f32 %v2042, %v2079
    %2081 = vmatmul.f32.gmra.mxu0 %v2054
    %v2082 = vpop.f32.mrf.mxu0
    %v2083 = vadd.f32 %v2042, %v2082
    %2084 = vdwg.mxu0
    %v2085 = vadd.f32 %v2074, %v612
    %v2086 = vadd.f32 %v2077, %v613
    %v2087 = vadd.f32 %v2080, %v614
    %v2088 = vadd.f32 %v2083, %v615
    %v2089 = vld [vmem:[%s53] sm:$0x1]
    %v2090 = vld [vmem:[%s55] sm:$0x1]
    %v2091 = vsel %vm315, %v2085, 0.0
    %2092 = vadd.xlane.f32.xlu0 %v2091
    %v2093 = vpop.xlane.xlu0 %2092
    %v2094 = vsel %vm315, %v2086, 0.0
    %2095 = vadd.xlane.f32.xlu0 %v2094
    %v2096 = vpop.xlane.xlu0 %2095
    %v2097 = vsel %vm315, %v2087, 0.0
    %2098 = vadd.xlane.f32.xlu0 %v2097
    %v2099 = vpop.xlane.xlu0 %2098
    %v2100 = vsel %vm315, %v2088, 0.0
    %2101 = vadd.xlane.f32.xlu0 %v2100
    %v2102 = vpop.xlane.xlu0 %2101
    %v2103 = vmul.f32 %v2093, %v334
    %v2104 = vmul.f32 %v2096, %v334
    %v2105 = vmul.f32 %v2099, %v334
    %v2106 = vmul.f32 %v2102, %v334
    %v2107 = vsub.f32 %v2085, %v2103
    %v2108 = vsub.f32 %v2086, %v2104
    %v2109 = vsub.f32 %v2087, %v2105
    %v2110 = vsub.f32 %v2088, %v2106
    %v2111 = vmul.f32 %v2107, %v2107
    %v2112 = vmul.f32 %v2108, %v2108
    %v2113 = vmul.f32 %v2109, %v2109
    %v2114 = vmul.f32 %v2110, %v2110
    %v2115 = vsel %vm315, %v2111, 0.0
    %2116 = vadd.xlane.f32.xlu0 %v2115
    %v2117 = vpop.xlane.xlu0 %2116
    %v2118 = vsel %vm315, %v2112, 0.0
    %2119 = vadd.xlane.f32.xlu0 %v2118
    %v2120 = vpop.xlane.xlu0 %2119
    %v2121 = vsel %vm315, %v2113, 0.0
    %2122 = vadd.xlane.f32.xlu0 %v2121
    %v2123 = vpop.xlane.xlu0 %2122
    %v2124 = vsel %vm315, %v2114, 0.0
    %2125 = vadd.xlane.f32.xlu0 %v2124
    %v2126 = vpop.xlane.xlu0 %2125
    %v2127 = vmul.f32 %v2117, %v334
    %v2128 = vmul.f32 %v2120, %v334
    %v2129 = vmul.f32 %v2123, %v334
    %v2130 = vmul.f32 %v2126, %v334
    %v2131 = vadd.f32 %v2127, 1e-05
    %v2132 = vadd.f32 %v2128, 1e-05
    %v2133 = vadd.f32 %v2129, 1e-05
    %v2134 = vadd.f32 %v2130, 1e-05
    %v2135 = vrsqrt.pop %v2131
    %v2136 = vmul.f32 %v2135, %v2131
    %v2137 = vmul.f32 %v2136, %v2135
    %v2138 = vmul.f32 0.5, %v2137
    %v2139 = vsub.f32 1.5, %v2138
    %v2140 = vmul.f32 %v2135, %v2139
    %vm2141 = vweird.f32 %v2131
    %vm2142 = vweird.f32 %v2135
    %vm2143 = vmor %vm2141, %vm2142
    %v2144 = vsel %vm2143, %v2135, %v2140
    %v2145 = vrsqrt.pop %v2132
    %v2146 = vmul.f32 %v2145, %v2132
    %v2147 = vmul.f32 %v2146, %v2145
    %v2148 = vmul.f32 0.5, %v2147
    %v2149 = vsub.f32 1.5, %v2148
    %v2150 = vmul.f32 %v2145, %v2149
    %vm2151 = vweird.f32 %v2132
    %vm2152 = vweird.f32 %v2145
    %vm2153 = vmor %vm2151, %vm2152
    %v2154 = vsel %vm2153, %v2145, %v2150
    %v2155 = vrsqrt.pop %v2133
    %v2156 = vmul.f32 %v2155, %v2133
    %v2157 = vmul.f32 %v2156, %v2155
    %v2158 = vmul.f32 0.5, %v2157
    %v2159 = vsub.f32 1.5, %v2158
    %v2160 = vmul.f32 %v2155, %v2159
    %vm2161 = vweird.f32 %v2133
    %vm2162 = vweird.f32 %v2155
    %vm2163 = vmor %vm2161, %vm2162
    %v2164 = vsel %vm2163, %v2155, %v2160
    %v2165 = vrsqrt.pop %v2134
    %v2166 = vmul.f32 %v2165, %v2134
    %v2167 = vmul.f32 %v2166, %v2165
    %v2168 = vmul.f32 0.5, %v2167
    %v2169 = vsub.f32 1.5, %v2168
    %v2170 = vmul.f32 %v2165, %v2169
    %vm2171 = vweird.f32 %v2134
    %vm2172 = vweird.f32 %v2165
    %vm2173 = vmor %vm2171, %vm2172
    %v2174 = vsel %vm2173, %v2165, %v2170
    %v2175 = vmul.f32 %v2107, %v2144
    %v2176 = vmul.f32 %v2108, %v2154
    %v2177 = vmul.f32 %v2109, %v2164
    %v2178 = vmul.f32 %v2110, %v2174
    %v2180 = vperm.slane %v2089, 0
    %v2182 = vmul.f32 %v2175, %v2180
    %v2183 = vmul.f32 %v2176, %v2180
    %v2184 = vmul.f32 %v2177, %v2180
    %v2185 = vmul.f32 %v2178, %v2180
    %v2187 = vperm.slane %v2090, 0
    %v2189 = vadd.f32 %v2182, %v2187
    %v2190 = vadd.f32 %v2183, %v2187
    %v2191 = vadd.f32 %v2184, %v2187
    %v2192 = vadd.f32 %v2185, %v2187
    %v2194 = vsel %vm843, %v230, 0
    %v2197 = vsel %vm843, %v231, 0
    %2199 = vmatpush.msra.mxu0 0.0
    %2200 = vmatpush.msra.mxu0 0.0
    %2201 = vmatpush.msra.mxu0 0.0
    %2202 = vmatpush.msra.mxu0 0.0
    %2203 = vmatpush.msra.mxu0 0.0
    %2204 = vmatpush.msra.mxu0 0.0
    %2205 = vmatpush.msra.mxu0 0.0
    %2206 = vmatpush.msra.mxu0 0.0
    %2207 = vmatpush.msra.mxu0 0.0
    %2208 = vmatpush.msra.mxu0 0.0
    %2209 = vmatpush.msra.mxu0 0.0
    %2210 = vmatpush.msra.mxu0 0.0
    %2211 = vmatpush.msra.mxu0 0.0
    %2212 = vmatpush.msra.mxu0 0.0
    %2213 = vmatpush.msra.mxu0 %v2190
    %2214 = vmatpush.msra.mxu0 %v2189
    %2215 = vmatmul.f32.gmra.mxu0 %v2194
    %v2216 = vpop.f32.mrf.mxu0
    %v2217 = vadd.f32 0.0, %v2216
    %2218 = vmatmul.f32.gmra.mxu0 %v2197
    %v2219 = vpop.f32.mrf.mxu0
    %v2220 = vadd.f32 0.0, %v2219
    %2221 = vdwg.mxu0
    %v2223 = vsel %vm843, %v232, 0
    %v2226 = vsel %vm843, %v233, 0
    %2228 = vmatpush.msra.mxu0 0.0
    %2229 = vmatpush.msra.mxu0 0.0
    %2230 = vmatpush.msra.mxu0 0.0
    %2231 = vmatpush.msra.mxu0 0.0
    %2232 = vmatpush.msra.mxu0 0.0
    %2233 = vmatpush.msra.mxu0 0.0
    %2234 = vmatpush.msra.mxu0 0.0
    %2235 = vmatpush.msra.mxu0 0.0
    %2236 = vmatpush.msra.mxu0 0.0
    %2237 = vmatpush.msra.mxu0 0.0
    %2238 = vmatpush.msra.mxu0 0.0
    %2239 = vmatpush.msra.mxu0 0.0
    %2240 = vmatpush.msra.mxu0 0.0
    %2241 = vmatpush.msra.mxu0 0.0
    %2242 = vmatpush.msra.mxu0 %v2192
    %2243 = vmatpush.msra.mxu0 %v2191
    %2244 = vmatmul.f32.gmra.mxu0 %v2223
    %v2245 = vpop.f32.mrf.mxu0
    %v2246 = vadd.f32 0.0, %v2245
    %2247 = vmatmul.f32.gmra.mxu0 %v2226
    %v2248 = vpop.f32.mrf.mxu0
    %v2249 = vadd.f32 0.0, %v2248
    %2250 = vdwg.mxu0
    %v2251 = vld [vmem:[%s5] sm:$0xff]
    %v2252 = vld [vmem:[%s5 + $0x8] sm:$0xff]
    %v2253 = vld [vmem:[%s5 + $0x10] sm:$0xff]
    %v2254 = vld [vmem:[%s5 + $0x18] sm:$0xff]
    %v2256 = vsel %vm843, %v269, 0
    %v2259 = vsel %vm843, %v270, 0
    %2261 = vmatpush.msra.mxu0 0.0
    %2262 = vmatpush.msra.mxu0 0.0
    %2263 = vmatpush.msra.mxu0 0.0
    %2264 = vmatpush.msra.mxu0 0.0
    %2265 = vmatpush.msra.mxu0 0.0
    %2266 = vmatpush.msra.mxu0 0.0
    %2267 = vmatpush.msra.mxu0 0.0
    %2268 = vmatpush.msra.mxu0 0.0
    %2269 = vmatpush.msra.mxu0 0.0
    %2270 = vmatpush.msra.mxu0 0.0
    %2271 = vmatpush.msra.mxu0 0.0
    %2272 = vmatpush.msra.mxu0 0.0
    %2273 = vmatpush.msra.mxu0 0.0
    %2274 = vmatpush.msra.mxu0 0.0
    %2275 = vmatpush.msra.mxu0 %v2252
    %2276 = vmatpush.msra.mxu0 %v2251
    %2277 = vmatmul.f32.gmra.mxu0 %v2256
    %v2278 = vpop.f32.mrf.mxu0
    %v2279 = vadd.f32 0.0, %v2278
    %2280 = vmatmul.f32.gmra.mxu0 %v2259
    %v2281 = vpop.f32.mrf.mxu0
    %v2282 = vadd.f32 0.0, %v2281
    %2283 = vdwg.mxu0
    %v2285 = vsel %vm843, %v271, 0
    %v2288 = vsel %vm843, %v272, 0
    %2290 = vmatpush.msra.mxu0 0.0
    %2291 = vmatpush.msra.mxu0 0.0
    %2292 = vmatpush.msra.mxu0 0.0
    %2293 = vmatpush.msra.mxu0 0.0
    %2294 = vmatpush.msra.mxu0 0.0
    %2295 = vmatpush.msra.mxu0 0.0
    %2296 = vmatpush.msra.mxu0 0.0
    %2297 = vmatpush.msra.mxu0 0.0
    %2298 = vmatpush.msra.mxu0 0.0
    %2299 = vmatpush.msra.mxu0 0.0
    %2300 = vmatpush.msra.mxu0 0.0
    %2301 = vmatpush.msra.mxu0 0.0
    %2302 = vmatpush.msra.mxu0 0.0
    %2303 = vmatpush.msra.mxu0 0.0
    %2304 = vmatpush.msra.mxu0 %v2254
    %2305 = vmatpush.msra.mxu0 %v2253
    %2306 = vmatmul.f32.gmra.mxu0 %v2285
    %v2307 = vpop.f32.mrf.mxu0
    %v2308 = vadd.f32 0.0, %v2307
    %2309 = vmatmul.f32.gmra.mxu0 %v2288
    %v2310 = vpop.f32.mrf.mxu0
    %v2311 = vadd.f32 0.0, %v2310
    %2312 = vdwg.mxu0
    %v2314 = vsel %vm843, %v293, 0
    %v2317 = vsel %vm843, %v294, 0
    %2319 = vmatpush.msra.mxu0 0.0
    %2320 = vmatpush.msra.mxu0 0.0
    %2321 = vmatpush.msra.mxu0 0.0
    %2322 = vmatpush.msra.mxu0 0.0
    %2323 = vmatpush.msra.mxu0 0.0
    %2324 = vmatpush.msra.mxu0 0.0
    %2325 = vmatpush.msra.mxu0 0.0
    %2326 = vmatpush.msra.mxu0 0.0
    %2327 = vmatpush.msra.mxu0 0.0
    %2328 = vmatpush.msra.mxu0 0.0
    %2329 = vmatpush.msra.mxu0 0.0
    %2330 = vmatpush.msra.mxu0 0.0
    %2331 = vmatpush.msra.mxu0 0.0
    %2332 = vmatpush.msra.mxu0 0.0
    %2333 = vmatpush.msra.mxu0 %v2252
    %2334 = vmatpush.msra.mxu0 %v2251
    %2335 = vmatmul.f32.gmra.mxu0 %v2314
    %v2336 = vpop.f32.mrf.mxu0
    %v2337 = vadd.f32 0.0, %v2336
    %2338 = vmatmul.f32.gmra.mxu0 %v2317
    %v2339 = vpop.f32.mrf.mxu0
    %v2340 = vadd.f32 0.0, %v2339
    %2341 = vdwg.mxu0
    %v2343 = vsel %vm843, %v295, 0
    %v2346 = vsel %vm843, %v296, 0
    %2348 = vmatpush.msra.mxu0 0.0
    %2349 = vmatpush.msra.mxu0 0.0
    %2350 = vmatpush.msra.mxu0 0.0
    %2351 = vmatpush.msra.mxu0 0.0
    %2352 = vmatpush.msra.mxu0 0.0
    %2353 = vmatpush.msra.mxu0 0.0
    %2354 = vmatpush.msra.mxu0 0.0
    %2355 = vmatpush.msra.mxu0 0.0
    %2356 = vmatpush.msra.mxu0 0.0
    %2357 = vmatpush.msra.mxu0 0.0
    %2358 = vmatpush.msra.mxu0 0.0
    %2359 = vmatpush.msra.mxu0 0.0
    %2360 = vmatpush.msra.mxu0 0.0
    %2361 = vmatpush.msra.mxu0 0.0
    %2362 = vmatpush.msra.mxu0 %v2254
    %2363 = vmatpush.msra.mxu0 %v2253
    %2364 = vmatmul.f32.gmra.mxu0 %v2343
    %v2365 = vpop.f32.mrf.mxu0
    %v2366 = vadd.f32 0.0, %v2365
    %2367 = vmatmul.f32.gmra.mxu0 %v2346
    %v2368 = vpop.f32.mrf.mxu0
    %v2369 = vadd.f32 0.0, %v2368
    %2370 = vdwg.mxu0
    %v2371 = vld [vmem:[%s17] sm:$0xff]
    %v2372 = vld [vmem:[%s17 + $0x8] sm:$0xff]
    %v2373 = vld [vmem:[%s17 + $0x10] sm:$0xff]
    %v2374 = vld [vmem:[%s17 + $0x18] sm:$0xff]
    %v2375 = vld [vmem:[%s57] sm:$0xff]
    %v2376 = vld [vmem:[%s57 + $0x8] sm:$0xff]
    %v2377 = vld [vmem:[%s57 + $0x10] sm:$0xff]
    %v2378 = vld [vmem:[%s57 + $0x18] sm:$0xff]
    %v2379 = vld [vmem:[%s57 + $0x20] sm:$0xff]
    %v2380 = vld [vmem:[%s57 + $0x28] sm:$0xff]
    %v2381 = vld [vmem:[%s57 + $0x30] sm:$0xff]
    %v2383 = vsel %vm966, %v2279, 0
    %v2386 = vsel %vm966, %v2282, 0
    %v2389 = vsel %vm966, %v2308, 0
    %v2392 = vsel %vm966, %v2311, 0
    %2394 = vmatpush.msra.mxu0 0.0
    %2395 = vmatpush.msra.mxu0 0.0
    %2396 = vmatpush.msra.mxu0 0.0
    %2397 = vmatpush.msra.mxu0 0.0
    %2398 = vmatpush.msra.mxu0 0.0
    %2399 = vmatpush.msra.mxu0 0.0
    %2400 = vmatpush.msra.mxu0 0.0
    %2401 = vmatpush.msra.mxu0 0.0
    %2402 = vmatpush.msra.mxu0 0.0
    %2403 = vmatpush.msra.mxu0 0.0
    %2404 = vmatpush.msra.mxu0 0.0
    %2405 = vmatpush.msra.mxu0 0.0
    %2406 = vmatpush.msra.mxu0 0.0
    %2407 = vmatpush.msra.mxu0 0.0
    %2408 = vmatpush.msra.mxu0 0.0
    %2409 = vmatpush.msra.mxu0 %v2379
    %2410 = vmatmul.f32.gmra.mxu0 %v2383
    %v2411 = vpop.f32.mrf.mxu0
    %v2412 = vadd.f32 0.0, %v2411
    %2413 = vmatmul.f32.gmra.mxu0 %v2386
    %v2414 = vpop.f32.mrf.mxu0
    %v2415 = vadd.f32 0.0, %v2414
    %2416 = vmatmul.f32.gmra.mxu0 %v2389
    %v2417 = vpop.f32.mrf.mxu0
    %v2418 = vadd.f32 0.0, %v2417
    %2419 = vmatmul.f32.gmra.mxu0 %v2392
    %v2420 = vpop.f32.mrf.mxu0
    %v2421 = vadd.f32 0.0, %v2420
    %2422 = vdwg.mxu0
    %v2424 = vsel %vm315, %v2217, 0
    %v2427 = vsel %vm315, %v2220, 0
    %v2430 = vsel %vm315, %v2246, 0
    %v2433 = vsel %vm315, %v2249, 0
    %2435 = vmatpush.msra.mxu0 0.0
    %2436 = vmatpush.msra.mxu0 0.0
    %2437 = vmatpush.msra.mxu0 0.0
    %2438 = vmatpush.msra.mxu0 0.0
    %2439 = vmatpush.msra.mxu0 0.0
    %2440 = vmatpush.msra.mxu0 0.0
    %2441 = vmatpush.msra.mxu0 0.0
    %2442 = vmatpush.msra.mxu0 0.0
    %2443 = vmatpush.msra.mxu0 0.0
    %2444 = vmatpush.msra.mxu0 0.0
    %2445 = vmatpush.msra.mxu0 0.0
    %2446 = vmatpush.msra.mxu0 0.0
    %2447 = vmatpush.msra.mxu0 %v2378
    %2448 = vmatpush.msra.mxu0 %v2377
    %2449 = vmatpush.msra.mxu0 %v2376
    %2450 = vmatpush.msra.mxu0 %v2375
    %2451 = vmatmul.f32.gmra.mxu0 %v2424
    %v2452 = vpop.f32.mrf.mxu0
    %v2453 = vadd.f32 %v2412, %v2452
    %2454 = vmatmul.f32.gmra.mxu0 %v2427
    %v2455 = vpop.f32.mrf.mxu0
    %v2456 = vadd.f32 %v2415, %v2455
    %2457 = vmatmul.f32.gmra.mxu0 %v2430
    %v2458 = vpop.f32.mrf.mxu0
    %v2459 = vadd.f32 %v2418, %v2458
    %2460 = vmatmul.f32.gmra.mxu0 %v2433
    %v2461 = vpop.f32.mrf.mxu0
    %v2462 = vadd.f32 %v2421, %v2461
    %2463 = vdwg.mxu0
    %v2465 = vsel %vm966, %v2337, 0
    %v2468 = vsel %vm966, %v2340, 0
    %v2471 = vsel %vm966, %v2366, 0
    %v2474 = vsel %vm966, %v2369, 0
    %2476 = vmatpush.msra.mxu0 0.0
    %2477 = vmatpush.msra.mxu0 0.0
    %2478 = vmatpush.msra.mxu0 0.0
    %2479 = vmatpush.msra.mxu0 0.0
    %2480 = vmatpush.msra.mxu0 0.0
    %2481 = vmatpush.msra.mxu0 0.0
    %2482 = vmatpush.msra.mxu0 0.0
    %2483 = vmatpush.msra.mxu0 0.0
    %2484 = vmatpush.msra.mxu0 0.0
    %2485 = vmatpush.msra.mxu0 0.0
    %2486 = vmatpush.msra.mxu0 0.0
    %2487 = vmatpush.msra.mxu0 0.0
    %2488 = vmatpush.msra.mxu0 0.0
    %2489 = vmatpush.msra.mxu0 0.0
    %2490 = vmatpush.msra.mxu0 0.0
    %2491 = vmatpush.msra.mxu0 %v2380
    %2492 = vmatmul.f32.gmra.mxu0 %v2465
    %v2493 = vpop.f32.mrf.mxu0
    %v2494 = vadd.f32 0.0, %v2493
    %2495 = vmatmul.f32.gmra.mxu0 %v2468
    %v2496 = vpop.f32.mrf.mxu0
    %v2497 = vadd.f32 0.0, %v2496
    %2498 = vmatmul.f32.gmra.mxu0 %v2471
    %v2499 = vpop.f32.mrf.mxu0
    %v2500 = vadd.f32 0.0, %v2499
    %2501 = vmatmul.f32.gmra.mxu0 %v2474
    %v2502 = vpop.f32.mrf.mxu0
    %v2503 = vadd.f32 0.0, %v2502
    %2504 = vdwg.mxu0
    %v2505 = vadd.f32 %v2453, %v2494
    %v2506 = vadd.f32 %v2456, %v2497
    %v2507 = vadd.f32 %v2459, %v2500
    %v2508 = vadd.f32 %v2462, %v2503
    %v2510 = vsel %vm966, %v2371, 0
    %v2513 = vsel %vm966, %v2372, 0
    %v2516 = vsel %vm966, %v2373, 0
    %v2519 = vsel %vm966, %v2374, 0
    %2521 = vmatpush.msra.mxu0 0.0
    %2522 = vmatpush.msra.mxu0 0.0
    %2523 = vmatpush.msra.mxu0 0.0
    %2524 = vmatpush.msra.mxu0 0.0
    %2525 = vmatpush.msra.mxu0 0.0
    %2526 = vmatpush.msra.mxu0 0.0
    %2527 = vmatpush.msra.mxu0 0.0
    %2528 = vmatpush.msra.mxu0 0.0
    %2529 = vmatpush.msra.mxu0 0.0
    %2530 = vmatpush.msra.mxu0 0.0
    %2531 = vmatpush.msra.mxu0 0.0
    %2532 = vmatpush.msra.mxu0 0.0
    %2533 = vmatpush.msra.mxu0 0.0
    %2534 = vmatpush.msra.mxu0 0.0
    %2535 = vmatpush.msra.mxu0 0.0
    %2536 = vmatpush.msra.mxu0 %v2381
    %2537 = vmatmul.f32.gmra.mxu0 %v2510
    %v2538 = vpop.f32.mrf.mxu0
    %v2539 = vadd.f32 0.0, %v2538
    %2540 = vmatmul.f32.gmra.mxu0 %v2513
    %v2541 = vpop.f32.mrf.mxu0
    %v2542 = vadd.f32 0.0, %v2541
    %2543 = vmatmul.f32.gmra.mxu0 %v2516
    %v2544 = vpop.f32.mrf.mxu0
    %v2545 = vadd.f32 0.0, %v2544
    %2546 = vmatmul.f32.gmra.mxu0 %v2519
    %v2547 = vpop.f32.mrf.mxu0
    %v2548 = vadd.f32 0.0, %v2547
    %2549 = vdwg.mxu0
    %v2550 = vadd.f32 %v2505, %v2539
    %v2551 = vadd.f32 %v2506, %v2542
    %v2552 = vadd.f32 %v2507, %v2545
    %v2553 = vadd.f32 %v2508, %v2548
    %v2554 = vld [vmem:[%s59] sm:$0x1]
    %v2556 = vperm.slane %v2554, 0
    %v2558 = vadd.f32 %v2550, %v2556
    %v2559 = vadd.f32 %v2551, %v2556
    %v2560 = vadd.f32 %v2552, %v2556
    %v2561 = vadd.f32 %v2553, %v2556
    %v2562 = vxor.u32 %v2558, 2147483648
    %v2563 = vxor.u32 %v2559, 2147483648
    %v2564 = vxor.u32 %v2560, 2147483648
    %v2565 = vxor.u32 %v2561, 2147483648
    %v2566 = vmul.f32 %v2562, 1.442695
    %v2567 = vpow.pop %v2566
    %v2568 = vmul.f32 %v2563, 1.442695
    %v2569 = vpow.pop %v2568
    %v2570 = vmul.f32 %v2564, 1.442695
    %v2571 = vpow.pop %v2570
    %v2572 = vmul.f32 %v2565, 1.442695
    %v2573 = vpow.pop %v2572
    %v2574 = vadd.f32 %v2567, 1.0
    %v2575 = vadd.f32 %v2569, 1.0
    %v2576 = vadd.f32 %v2571, 1.0
    %v2577 = vadd.f32 %v2573, 1.0
    %v2578 = vrcp.pop %v2574
    %v2579 = vmul.f32 %v2574, %v2578
    %v2580 = vsub.f32 1.0, %v2579
    %v2581 = vmul.f32 %v2578, %v2580
    %v2582 = vadd.f32 %v2578, %v2581
    %vm2583 = vweird.f32 %v2574
    %vm2584 = vweird.f32 %v2578
    %vm2585 = vmor %vm2583, %vm2584
    %v2586 = vsel %vm2585, %v2578, %v2582
    %v2587 = vand.u32 2147483647, %v2574
    %vm2588 = vcmp.eq.f32.partialorder %v2587, 8.507059e+37
    %v2589 = vand.u32 %v2574, 2147483648
    %v2590 = vor.u32 1.1754944e-38, %v2589
    %v2591 = vsel %vm2588, %v2590, %v2586
    %v2592 = vmul.f32 1.0, %v2591
    %v2593 = vrcp.pop %v2575
    %v2594 = vmul.f32 %v2575, %v2593
    %v2595 = vsub.f32 1.0, %v2594
    %v2596 = vmul.f32 %v2593, %v2595
    %v2597 = vadd.f32 %v2593, %v2596
    %vm2598 = vweird.f32 %v2575
    %vm2599 = vweird.f32 %v2593
    %vm2600 = vmor %vm2598, %vm2599
    %v2601 = vsel %vm2600, %v2593, %v2597
    %v2602 = vand.u32 2147483647, %v2575
    %vm2603 = vcmp.eq.f32.partialorder %v2602, 8.507059e+37
    %v2604 = vand.u32 %v2575, 2147483648
    %v2605 = vor.u32 1.1754944e-38, %v2604
    %v2606 = vsel %vm2603, %v2605, %v2601
    %v2607 = vmul.f32 1.0, %v2606
    %v2608 = vrcp.pop %v2576
    %v2609 = vmul.f32 %v2576, %v2608
    %v2610 = vsub.f32 1.0, %v2609
    %v2611 = vmul.f32 %v2608, %v2610
    %v2612 = vadd.f32 %v2608, %v2611
    %vm2613 = vweird.f32 %v2576
    %vm2614 = vweird.f32 %v2608
    %vm2615 = vmor %vm2613, %vm2614
    %v2616 = vsel %vm2615, %v2608, %v2612
    %v2617 = vand.u32 2147483647, %v2576
    %vm2618 = vcmp.eq.f32.partialorder %v2617, 8.507059e+37
    %v2619 = vand.u32 %v2576, 2147483648
    %v2620 = vor.u32 1.1754944e-38, %v2619
    %v2621 = vsel %vm2618, %v2620, %v2616
    %v2622 = vmul.f32 1.0, %v2621
    %v2623 = vrcp.pop %v2577
    %v2624 = vmul.f32 %v2577, %v2623
    %v2625 = vsub.f32 1.0, %v2624
    %v2626 = vmul.f32 %v2623, %v2625
    %v2627 = vadd.f32 %v2623, %v2626
    %vm2628 = vweird.f32 %v2577
    %vm2629 = vweird.f32 %v2623
    %vm2630 = vmor %vm2628, %vm2629
    %v2631 = vsel %vm2630, %v2623, %v2627
    %v2632 = vand.u32 2147483647, %v2577
    %vm2633 = vcmp.eq.f32.partialorder %v2632, 8.507059e+37
    %v2634 = vand.u32 %v2577, 2147483648
    %v2635 = vor.u32 1.1754944e-38, %v2634
    %v2636 = vsel %vm2633, %v2635, %v2631
    %v2637 = vmul.f32 1.0, %v2636
    %2642 = vrot.lane.b32.xlu0 %v2592, 96
    %v2643 = vpop.permute.xlu0 %2642
    %2644 = vrot.lane.b32.xlu0 %v2607, 96
    %v2645 = vpop.permute.xlu0 %2644
    %2646 = vrot.lane.b32.xlu0 %v2622, 96
    %v2647 = vpop.permute.xlu0 %2646
    %2648 = vrot.lane.b32.xlu0 %v2637, 96
    %v2649 = vpop.permute.xlu0 %2648
    %v2654 = vmul.f32 %v2558, %v2643
    %v2655 = vmul.f32 %v2559, %v2645
    %v2656 = vmul.f32 %v2560, %v2647
    %v2657 = vmul.f32 %v2561, %v2649
    %v2658 = vld [vmem:[%s61] sm:$0x7]
    %v2659 = vperm.slane %v2658, 0
    %v2660 = vmul.f32 %v2654, %v2659
    %v2661 = vmul.f32 %v2655, %v2659
    %v2662 = vmul.f32 %v2656, %v2659
    %v2663 = vmul.f32 %v2657, %v2659
    %v2664 = vrot.slane %v2654, 1
    %v2665 = vrot.slane %v2655, 1
    %v2666 = vrot.slane %v2656, 1
    %v2667 = vrot.slane %v2657, 1
    %vm2668 = vcmp.lt.s32.totalorder %v235, 7
    %v2669 = vsel %vm2668, %v2666, %v2667
    %v2670 = vsel %vm2668, %v2665, %v2666
    %v2671 = vsel %vm2668, %v2664, %v2665
    %v2672 = vsel %vm2668, %v2667, %v2664
    %v2673 = vperm.slane %v2658, 1
    %v2674 = vmul.f32 %v2671, %v2673
    %v2675 = vmul.f32 %v2670, %v2673
    %v2676 = vmul.f32 %v2669, %v2673
    %v2677 = vmul.f32 %v2672, %v2673
    %v2678 = vadd.f32 %v2660, %v2674
    %v2679 = vadd.f32 %v2661, %v2675
    %v2680 = vadd.f32 %v2662, %v2676
    %v2681 = vadd.f32 %v2663, %v2677
    %v2682 = vrot.slane %v2654, 2
    %v2683 = vrot.slane %v2655, 2
    %v2684 = vrot.slane %v2656, 2
    %v2685 = vrot.slane %v2657, 2
    %vm2686 = vcmp.lt.s32.totalorder %v235, 6
    %v2687 = vsel %vm2686, %v2684, %v2685
    %v2688 = vsel %vm2686, %v2683, %v2684
    %v2689 = vsel %vm2686, %v2682, %v2683
    %v2690 = vsel %vm2686, %v2685, %v2682
    %v2691 = vperm.slane %v2658, 2
    %v2692 = vmul.f32 %v2689, %v2691
    %v2693 = vmul.f32 %v2688, %v2691
    %v2694 = vmul.f32 %v2687, %v2691
    %v2695 = vmul.f32 %v2690, %v2691
    %v2696 = vadd.f32 %v2678, %v2692
    %v2697 = vadd.f32 %v2679, %v2693
    %v2698 = vadd.f32 %v2680, %v2694
    %v2699 = vadd.f32 %v2681, %v2695
    %vm2700 = vcmp.lt.s32.totalorder %v235, 14
    %vm2701 = vcmp.lt.s32.totalorder %v236, 14
    %v2702 = vsel %vm2700, 1.0, 0.0
    %v2703 = vsel %vm2701, 1.0, 0.0
    %v2704 = vmul.f32 %v2696, %v2702
    %v2705 = vmul.f32 %v2697, %v2703
    %v2706 = vmul.f32 %v2698, %v2702
    %v2707 = vmul.f32 %v2699, %v2703
    %v2708 = vsel %vm315, %v2704, 0.0
    %v2709 = vsel %vm315, %v2705, 0.0
    %v2710 = vadd.f32 %v2708, %v2709
    %v2711 = vsel %vm315, %v2706, 0.0
    %v2712 = vadd.f32 %v2710, %v2711
    %v2713 = vsel %vm315, %v2707, 0.0
    %v2714 = vadd.f32 %v2712, %v2713
    %v2715 = vrot.slane %v2714, 4
    %v2716 = vadd.f32 %v2714, %v2715
    %v2717 = vrot.slane %v2716, 2
    %v2718 = vadd.f32 %v2716, %v2717
    %v2719 = vrot.slane %v2718, 1
    %v2720 = vadd.f32 %v2718, %v2719
    %v2721 = vmul.f32 %v2720, 0.035714287
    %v2722 = vsub.f32 %v2696, %v2721
    %v2723 = vsub.f32 %v2697, %v2721
    %v2724 = vsub.f32 %v2698, %v2721
    %v2725 = vsub.f32 %v2699, %v2721
    %v2726 = vmul.f32 %v2722, %v2702
    %v2727 = vmul.f32 %v2723, %v2703
    %v2728 = vmul.f32 %v2724, %v2702
    %v2729 = vmul.f32 %v2725, %v2703
    %v2730 = vmul.f32 %v2726, %v2726
    %v2731 = vmul.f32 %v2727, %v2727
    %v2732 = vmul.f32 %v2728, %v2728
    %v2733 = vmul.f32 %v2729, %v2729
    %v2734 = vsel %vm315, %v2730, 0.0
    %v2735 = vsel %vm315, %v2731, 0.0
    %v2736 = vadd.f32 %v2734, %v2735
    %v2737 = vsel %vm315, %v2732, 0.0
    %v2738 = vadd.f32 %v2736, %v2737
    %v2739 = vsel %vm315, %v2733, 0.0
    %v2740 = vadd.f32 %v2738, %v2739
    %v2741 = vrot.slane %v2740, 4
    %v2742 = vadd.f32 %v2740, %v2741
    %v2743 = vrot.slane %v2742, 2
    %v2744 = vadd.f32 %v2742, %v2743
    %v2745 = vrot.slane %v2744, 1
    %v2746 = vadd.f32 %v2744, %v2745
    %v2747 = vmul.f32 %v2746, 0.035714287
    %v2748 = vadd.f32 %v2747, 1e-05
    %v2749 = vrsqrt.pop %v2748
    %v2750 = vmul.f32 %v2749, %v2748
    %v2751 = vmul.f32 %v2750, %v2749
    %v2752 = vmul.f32 0.5, %v2751
    %v2753 = vsub.f32 1.5, %v2752
    %v2754 = vmul.f32 %v2749, %v2753
    %vm2755 = vweird.f32 %v2748
    %vm2756 = vweird.f32 %v2749
    %vm2757 = vmor %vm2755, %vm2756
    %v2758 = vsel %vm2757, %v2749, %v2754
    %v2759 = vmul.f32 %v2722, %v2758
    %v2760 = vmul.f32 %v2723, %v2758
    %v2761 = vmul.f32 %v2724, %v2758
    %v2762 = vmul.f32 %v2725, %v2758
    %v2763 = vld [vmem:[%s63] sm:$0x1]
    %v2765 = vperm.slane %v2763, 0
    %v2767 = vmul.f32 %v2759, %v2765
    %v2768 = vmul.f32 %v2760, %v2765
    %v2769 = vmul.f32 %v2761, %v2765
    %v2770 = vmul.f32 %v2762, %v2765
    %v2771 = vld [vmem:[%s65] sm:$0x1]
    %v2773 = vperm.slane %v2771, 0
    %v2775 = vadd.f32 %v2767, %v2773
    %v2776 = vadd.f32 %v2768, %v2773
    %v2777 = vadd.f32 %v2769, %v2773
    %v2778 = vadd.f32 %v2770, %v2773
    %v2779 = vxor.u32 %v2775, 2147483648
    %v2780 = vxor.u32 %v2776, 2147483648
    %v2781 = vxor.u32 %v2777, 2147483648
    %v2782 = vxor.u32 %v2778, 2147483648
    %v2783 = vmul.f32 %v2779, 1.442695
    %v2784 = vpow.pop %v2783
    %v2785 = vmul.f32 %v2780, 1.442695
    %v2786 = vpow.pop %v2785
    %v2787 = vmul.f32 %v2781, 1.442695
    %v2788 = vpow.pop %v2787
    %v2789 = vmul.f32 %v2782, 1.442695
    %v2790 = vpow.pop %v2789
    %v2791 = vadd.f32 %v2784, 1.0
    %v2792 = vadd.f32 %v2786, 1.0
    %v2793 = vadd.f32 %v2788, 1.0
    %v2794 = vadd.f32 %v2790, 1.0
    %v2795 = vrcp.pop %v2791
    %v2796 = vmul.f32 %v2791, %v2795
    %v2797 = vsub.f32 1.0, %v2796
    %v2798 = vmul.f32 %v2795, %v2797
    %v2799 = vadd.f32 %v2795, %v2798
    %vm2800 = vweird.f32 %v2791
    %vm2801 = vweird.f32 %v2795
    %vm2802 = vmor %vm2800, %vm2801
    %v2803 = vsel %vm2802, %v2795, %v2799
    %v2804 = vand.u32 2147483647, %v2791
    %vm2805 = vcmp.eq.f32.partialorder %v2804, 8.507059e+37
    %v2806 = vand.u32 %v2791, 2147483648
    %v2807 = vor.u32 1.1754944e-38, %v2806
    %v2808 = vsel %vm2805, %v2807, %v2803
    %v2809 = vmul.f32 1.0, %v2808
    %v2810 = vrcp.pop %v2792
    %v2811 = vmul.f32 %v2792, %v2810
    %v2812 = vsub.f32 1.0, %v2811
    %v2813 = vmul.f32 %v2810, %v2812
    %v2814 = vadd.f32 %v2810, %v2813
    %vm2815 = vweird.f32 %v2792
    %vm2816 = vweird.f32 %v2810
    %vm2817 = vmor %vm2815, %vm2816
    %v2818 = vsel %vm2817, %v2810, %v2814
    %v2819 = vand.u32 2147483647, %v2792
    %vm2820 = vcmp.eq.f32.partialorder %v2819, 8.507059e+37
    %v2821 = vand.u32 %v2792, 2147483648
    %v2822 = vor.u32 1.1754944e-38, %v2821
    %v2823 = vsel %vm2820, %v2822, %v2818
    %v2824 = vmul.f32 1.0, %v2823
    %v2825 = vrcp.pop %v2793
    %v2826 = vmul.f32 %v2793, %v2825
    %v2827 = vsub.f32 1.0, %v2826
    %v2828 = vmul.f32 %v2825, %v2827
    %v2829 = vadd.f32 %v2825, %v2828
    %vm2830 = vweird.f32 %v2793
    %vm2831 = vweird.f32 %v2825
    %vm2832 = vmor %vm2830, %vm2831
    %v2833 = vsel %vm2832, %v2825, %v2829
    %v2834 = vand.u32 2147483647, %v2793
    %vm2835 = vcmp.eq.f32.partialorder %v2834, 8.507059e+37
    %v2836 = vand.u32 %v2793, 2147483648
    %v2837 = vor.u32 1.1754944e-38, %v2836
    %v2838 = vsel %vm2835, %v2837, %v2833
    %v2839 = vmul.f32 1.0, %v2838
    %v2840 = vrcp.pop %v2794
    %v2841 = vmul.f32 %v2794, %v2840
    %v2842 = vsub.f32 1.0, %v2841
    %v2843 = vmul.f32 %v2840, %v2842
    %v2844 = vadd.f32 %v2840, %v2843
    %vm2845 = vweird.f32 %v2794
    %vm2846 = vweird.f32 %v2840
    %vm2847 = vmor %vm2845, %vm2846
    %v2848 = vsel %vm2847, %v2840, %v2844
    %v2849 = vand.u32 2147483647, %v2794
    %vm2850 = vcmp.eq.f32.partialorder %v2849, 8.507059e+37
    %v2851 = vand.u32 %v2794, 2147483648
    %v2852 = vor.u32 1.1754944e-38, %v2851
    %v2853 = vsel %vm2850, %v2852, %v2848
    %v2854 = vmul.f32 1.0, %v2853
    %v2855 = vmul.f32 %v2775, %v2809
    %v2856 = vmul.f32 %v2776, %v2824
    %v2857 = vmul.f32 %v2777, %v2839
    %v2858 = vmul.f32 %v2778, %v2854
    %v2859 = vld [vmem:[%s67] sm:$0xff]
    %v2860 = vld [vmem:[%s67 + $0x8] sm:$0xff]
    %v2861 = vld [vmem:[%s67 + $0x10] sm:$0xff]
    %v2862 = vld [vmem:[%s67 + $0x18] sm:$0xff]
    %v2863 = vld [vmem:[%s69] sm:$0x1]
    %v2865 = vperm.slane %v2863, 0
    %v2868 = vsel %vm315, %v2855, 0
    %v2871 = vsel %vm315, %v2856, 0
    %v2874 = vsel %vm315, %v2857, 0
    %v2877 = vsel %vm315, %v2858, 0
    %2879 = vmatpush.msra.mxu0 0.0
    %2880 = vmatpush.msra.mxu0 0.0
    %2881 = vmatpush.msra.mxu0 0.0
    %2882 = vmatpush.msra.mxu0 0.0
    %2883 = vmatpush.msra.mxu0 0.0
    %2884 = vmatpush.msra.mxu0 0.0
    %2885 = vmatpush.msra.mxu0 0.0
    %2886 = vmatpush.msra.mxu0 0.0
    %2887 = vmatpush.msra.mxu0 0.0
    %2888 = vmatpush.msra.mxu0 0.0
    %2889 = vmatpush.msra.mxu0 0.0
    %2890 = vmatpush.msra.mxu0 0.0
    %2891 = vmatpush.msra.mxu0 %v2862
    %2892 = vmatpush.msra.mxu0 %v2861
    %2893 = vmatpush.msra.mxu0 %v2860
    %2894 = vmatpush.msra.mxu0 %v2859
    %2895 = vmatmul.f32.gmra.mxu0 %v2868
    %v2896 = vpop.f32.mrf.mxu0
    %v2897 = vadd.f32 %v2865, %v2896
    %2898 = vmatmul.f32.gmra.mxu0 %v2871
    %v2899 = vpop.f32.mrf.mxu0
    %v2900 = vadd.f32 %v2865, %v2899
    %2901 = vmatmul.f32.gmra.mxu0 %v2874
    %v2902 = vpop.f32.mrf.mxu0
    %v2903 = vadd.f32 %v2865, %v2902
    %2904 = vmatmul.f32.gmra.mxu0 %v2877
    %v2905 = vpop.f32.mrf.mxu0
    %v2906 = vadd.f32 %v2865, %v2905
    %2907 = vdwg.mxu0
    %v2909 = vsel %vm843, %v305, 0
    %v2912 = vsel %vm843, %v306, 0
    %2914 = vmatpush.msra.mxu0 0.0
    %2915 = vmatpush.msra.mxu0 0.0
    %2916 = vmatpush.msra.mxu0 0.0
    %2917 = vmatpush.msra.mxu0 0.0
    %2918 = vmatpush.msra.mxu0 0.0
    %2919 = vmatpush.msra.mxu0 0.0
    %2920 = vmatpush.msra.mxu0 0.0
    %2921 = vmatpush.msra.mxu0 0.0
    %2922 = vmatpush.msra.mxu0 0.0
    %2923 = vmatpush.msra.mxu0 0.0
    %2924 = vmatpush.msra.mxu0 0.0
    %2925 = vmatpush.msra.mxu0 0.0
    %2926 = vmatpush.msra.mxu0 0.0
    %2927 = vmatpush.msra.mxu0 0.0
    %2928 = vmatpush.msra.mxu0 %v2900
    %2929 = vmatpush.msra.mxu0 %v2897
    %2930 = vmatmul.f32.gmra.mxu0 %v2909
    %v2931 = vpop.f32.mrf.mxu0
    %v2932 = vadd.f32 0.0, %v2931
    %2933 = vmatmul.f32.gmra.mxu0 %v2912
    %v2934 = vpop.f32.mrf.mxu0
    %v2935 = vadd.f32 0.0, %v2934
    %2936 = vdwg.mxu0
    %v2938 = vsel %vm843, %v307, 0
    %v2941 = vsel %vm843, %v308, 0
    %2943 = vmatpush.msra.mxu0 0.0
    %2944 = vmatpush.msra.mxu0 0.0
    %2945 = vmatpush.msra.mxu0 0.0
    %2946 = vmatpush.msra.mxu0 0.0
    %2947 = vmatpush.msra.mxu0 0.0
    %2948 = vmatpush.msra.mxu0 0.0
    %2949 = vmatpush.msra.mxu0 0.0
    %2950 = vmatpush.msra.mxu0 0.0
    %2951 = vmatpush.msra.mxu0 0.0
    %2952 = vmatpush.msra.mxu0 0.0
    %2953 = vmatpush.msra.mxu0 0.0
    %2954 = vmatpush.msra.mxu0 0.0
    %2955 = vmatpush.msra.mxu0 0.0
    %2956 = vmatpush.msra.mxu0 0.0
    %2957 = vmatpush.msra.mxu0 %v2906
    %2958 = vmatpush.msra.mxu0 %v2903
    %2959 = vmatmul.f32.gmra.mxu0 %v2938
    %v2960 = vpop.f32.mrf.mxu0
    %v2961 = vadd.f32 0.0, %v2960
    %2962 = vmatmul.f32.gmra.mxu0 %v2941
    %v2963 = vpop.f32.mrf.mxu0
    %v2964 = vadd.f32 0.0, %v2963
    %2965 = vdwg.mxu0
    %2966 = vmatpush.msra.mxu0 0.0
    %2967 = vmatpush.msra.mxu0 0.0
    %2968 = vmatpush.msra.mxu0 0.0
    %2969 = vmatpush.msra.mxu0 0.0
    %2970 = vmatpush.msra.mxu0 0.0
    %2971 = vmatpush.msra.mxu0 0.0
    %2972 = vmatpush.msra.mxu0 0.0
    %2973 = vmatpush.msra.mxu0 0.0
    %2974 = vmatpush.msra.mxu0 0.0
    %2975 = vmatpush.msra.mxu0 0.0
    %2976 = vmatpush.msra.mxu0 0.0
    %2977 = vmatpush.msra.mxu0 0.0
    %2978 = vmatpush.msra.mxu0 0.0
    %2979 = vmatpush.msra.mxu0 0.0
    %2980 = vmatpush.msra.mxu0 1.0
    %2981 = vmatpush.msra.mxu0 1.0
    %2982 = vmatmul.f32.gmra.mxu0 %v2909
    %v2983 = vpop.f32.mrf.mxu0
    %v2984 = vadd.f32 0.0, %v2983
    %2985 = vmatmul.f32.gmra.mxu0 %v2912
    %v2986 = vpop.f32.mrf.mxu0
    %v2987 = vadd.f32 0.0, %v2986
    %2988 = vdwg.mxu0
    %2989 = vmatpush.msra.mxu0 0.0
    %2990 = vmatpush.msra.mxu0 0.0
    %2991 = vmatpush.msra.mxu0 0.0
    %2992 = vmatpush.msra.mxu0 0.0
    %2993 = vmatpush.msra.mxu0 0.0
    %2994 = vmatpush.msra.mxu0 0.0
    %2995 = vmatpush.msra.mxu0 0.0
    %2996 = vmatpush.msra.mxu0 0.0
    %2997 = vmatpush.msra.mxu0 0.0
    %2998 = vmatpush.msra.mxu0 0.0
    %2999 = vmatpush.msra.mxu0 0.0
    %3000 = vmatpush.msra.mxu0 0.0
    %3001 = vmatpush.msra.mxu0 0.0
    %3002 = vmatpush.msra.mxu0 0.0
    %3003 = vmatpush.msra.mxu0 1.0
    %3004 = vmatpush.msra.mxu0 1.0
    %3005 = vmatmul.f32.gmra.mxu0 %v2938
    %v3006 = vpop.f32.mrf.mxu0
    %v3007 = vadd.f32 0.0, %v3006
    %3008 = vmatmul.f32.gmra.mxu0 %v2941
    %v3009 = vpop.f32.mrf.mxu0
    %v3010 = vadd.f32 0.0, %v3009
    %3011 = vdwg.mxu0
    %v3012 = vmax.f32 %v2984, 1.0
    %v3013 = vmax.f32 %v2987, 1.0
    %v3014 = vmax.f32 %v3007, 1.0
    %v3015 = vmax.f32 %v3010, 1.0
    %3017 = vset.pattern.permute.xlu0 0
    %3018 = vperm.xlu0 %3017, %v3012
    %v3019 = vpop.permute.xlu0 %3018
    %3022 = vset.pattern.permute.xlu0 0
    %3023 = vperm.xlu0 %3022, %v3013
    %v3024 = vpop.permute.xlu0 %3023
    %3027 = vset.pattern.permute.xlu0 0
    %3028 = vperm.xlu0 %3027, %v3014
    %v3029 = vpop.permute.xlu0 %3028
    %3032 = vset.pattern.permute.xlu0 0
    %3033 = vperm.xlu0 %3032, %v3015
    %v3034 = vpop.permute.xlu0 %3033
    %v3036 = vrcp.pop %v3019
    %v3037 = vmul.f32 %v3019, %v3036
    %v3038 = vsub.f32 1.0, %v3037
    %v3039 = vmul.f32 %v3036, %v3038
    %v3040 = vadd.f32 %v3036, %v3039
    %vm3041 = vweird.f32 %v3019
    %vm3042 = vweird.f32 %v3036
    %vm3043 = vmor %vm3041, %vm3042
    %v3044 = vsel %vm3043, %v3036, %v3040
    %v3045 = vand.u32 2147483647, %v3019
    %vm3046 = vcmp.eq.f32.partialorder %v3045, 8.507059e+37
    %v3047 = vand.u32 %v3019, 2147483648
    %v3048 = vor.u32 1.1754944e-38, %v3047
    %v3049 = vsel %vm3046, %v3048, %v3044
    %v3050 = vmul.f32 %v2932, %v3049
    %v3051 = vrcp.pop %v3024
    %v3052 = vmul.f32 %v3024, %v3051
    %v3053 = vsub.f32 1.0, %v3052
    %v3054 = vmul.f32 %v3051, %v3053
    %v3055 = vadd.f32 %v3051, %v3054
    %vm3056 = vweird.f32 %v3024
    %vm3057 = vweird.f32 %v3051
    %vm3058 = vmor %vm3056, %vm3057
    %v3059 = vsel %vm3058, %v3051, %v3055
    %v3060 = vand.u32 2147483647, %v3024
    %vm3061 = vcmp.eq.f32.partialorder %v3060, 8.507059e+37
    %v3062 = vand.u32 %v3024, 2147483648
    %v3063 = vor.u32 1.1754944e-38, %v3062
    %v3064 = vsel %vm3061, %v3063, %v3059
    %v3065 = vmul.f32 %v2935, %v3064
    %v3066 = vrcp.pop %v3029
    %v3067 = vmul.f32 %v3029, %v3066
    %v3068 = vsub.f32 1.0, %v3067
    %v3069 = vmul.f32 %v3066, %v3068
    %v3070 = vadd.f32 %v3066, %v3069
    %vm3071 = vweird.f32 %v3029
    %vm3072 = vweird.f32 %v3066
    %vm3073 = vmor %vm3071, %vm3072
    %v3074 = vsel %vm3073, %v3066, %v3070
    %v3075 = vand.u32 2147483647, %v3029
    %vm3076 = vcmp.eq.f32.partialorder %v3075, 8.507059e+37
    %v3077 = vand.u32 %v3029, 2147483648
    %v3078 = vor.u32 1.1754944e-38, %v3077
    %v3079 = vsel %vm3076, %v3078, %v3074
    %v3080 = vmul.f32 %v2961, %v3079
    %v3081 = vrcp.pop %v3034
    %v3082 = vmul.f32 %v3034, %v3081
    %v3083 = vsub.f32 1.0, %v3082
    %v3084 = vmul.f32 %v3081, %v3083
    %v3085 = vadd.f32 %v3081, %v3084
    %vm3086 = vweird.f32 %v3034
    %vm3087 = vweird.f32 %v3081
    %vm3088 = vmor %vm3086, %vm3087
    %v3089 = vsel %vm3088, %v3081, %v3085
    %v3090 = vand.u32 2147483647, %v3034
    %vm3091 = vcmp.eq.f32.partialorder %v3090, 8.507059e+37
    %v3092 = vand.u32 %v3034, 2147483648
    %v3093 = vor.u32 1.1754944e-38, %v3092
    %v3094 = vsel %vm3091, %v3093, %v3089
    %v3095 = vmul.f32 %v2964, %v3094
    %v3096 = vsel %vm315, %v3050, 0.0
    %v3097 = vsel %vm315, %v3065, 0.0
    %v3098 = vadd.f32 %v3096, %v3097
    %v3099 = vrot.slane %v3098, 4
    %v3100 = vadd.f32 %v3098, %v3099
    %v3101 = vrot.slane %v3100, 2
    %v3102 = vadd.f32 %v3100, %v3101
    %v3103 = vrot.slane %v3102, 1
    %v3104 = vadd.f32 %v3102, %v3103
    %v3105 = vsel %vm315, %v3080, 0.0
    %v3106 = vsel %vm315, %v3095, 0.0
    %v3107 = vadd.f32 %v3105, %v3106
    %v3108 = vrot.slane %v3107, 4
    %v3109 = vadd.f32 %v3107, %v3108
    %v3110 = vrot.slane %v3109, 2
    %v3111 = vadd.f32 %v3109, %v3110
    %v3112 = vrot.slane %v3111, 1
    %v3113 = vadd.f32 %v3111, %v3112
    %v3114 = vadd.f32 %v2189, %v3104
    %v3115 = vadd.f32 %v2191, %v3113
    %v3116 = vld [vmem:[%s71] sm:$0xff]
    %v3117 = vld [vmem:[%s71 + $0x8] sm:$0xff]
    %v3118 = vld [vmem:[%s71 + $0x10] sm:$0xff]
    %v3119 = vld [vmem:[%s71 + $0x18] sm:$0xff]
    %v3122 = vrot.slane %v3115, 7
    %vm3123 = vcmask 1041409
    %v3124 = vsel %vm3123, %v3122, %v3114
    %v3125 = vsel %vm315, %v3124, 0
    %3127 = vmatpush.msra.mxu0 0.0
    %3128 = vmatpush.msra.mxu0 0.0
    %3129 = vmatpush.msra.mxu0 0.0
    %3130 = vmatpush.msra.mxu0 0.0
    %3131 = vmatpush.msra.mxu0 0.0
    %3132 = vmatpush.msra.mxu0 0.0
    %3133 = vmatpush.msra.mxu0 0.0
    %3134 = vmatpush.msra.mxu0 0.0
    %3135 = vmatpush.msra.mxu0 0.0
    %3136 = vmatpush.msra.mxu0 0.0
    %3137 = vmatpush.msra.mxu0 0.0
    %3138 = vmatpush.msra.mxu0 0.0
    %3139 = vmatpush.msra.mxu0 %v3119
    %3140 = vmatpush.msra.mxu0 %v3118
    %3141 = vmatpush.msra.mxu0 %v3117
    %3142 = vmatpush.msra.mxu0 %v3116
    %3143 = vmatmul.f32.gmra.mxu0 %v3125
    %v3144 = vpop.f32.mrf.mxu0
    %v3145 = vadd.f32 0.0, %v3144
    %3146 = vdwg.mxu0
    %vm3147 = vcmask 254976
    %v3148 = vsel %vm3147, %v3145, 0.0
    %v3149 = vrot.slane %v3148, 4
    %v3150 = vadd.f32 %v3148, %v3149
    %v3151 = vrot.slane %v3150, 2
    %v3152 = vadd.f32 %v3150, %v3151
    %v3153 = vrot.slane %v3152, 1
    %v3154 = vadd.f32 %v3152, %v3153
    %v3155 = vrcp.pop 2.0
    %v3156 = vmul.f32 2.0, %v3155
    %v3157 = vsub.f32 1.0, %v3156
    %v3158 = vmul.f32 %v3155, %v3157
    %v3159 = vadd.f32 %v3155, %v3158
    %vm3160 = vweird.f32 %v3155
    %v3161 = vsel %vm3160, %v3155, %v3159
    %v3162 = vmul.f32 %v3154, %v3161
    %v3163 = vsub.f32 %v3145, %v3162
    %v3164 = vmul.f32 %v3163, %v3163
    %v3165 = vsel %vm3147, %v3164, 0.0
    %v3166 = vrot.slane %v3165, 4
    %v3167 = vadd.f32 %v3165, %v3166
    %v3168 = vrot.slane %v3167, 2
    %v3169 = vadd.f32 %v3167, %v3168
    %v3170 = vrot.slane %v3169, 1
    %v3171 = vadd.f32 %v3169, %v3170
    %v3172 = vmul.f32 %v3171, %v3161
    %v3173 = vadd.f32 %v3172, 1e-05
    %v3174 = vrsqrt.pop %v3173
    %v3175 = vmul.f32 %v3174, %v3173
    %v3176 = vmul.f32 %v3175, %v3174
    %v3177 = vmul.f32 0.5, %v3176
    %v3178 = vsub.f32 1.5, %v3177
    %v3179 = vmul.f32 %v3174, %v3178
    %vm3180 = vweird.f32 %v3173
    %vm3181 = vweird.f32 %v3174
    %vm3182 = vmor %vm3180, %vm3181
    %v3183 = vsel %vm3182, %v3174, %v3179
    %v3184 = vmul.f32 %v3163, %v3183
    %v3185 = vld [vmem:[%s73] sm:$0x1]
    %v3187 = vperm.slane %v3185, 0
    %v3189 = vmul.f32 %v3184, %v3187
    %v3190 = vld [vmem:[%s75] sm:$0x1]
    %v3192 = vperm.slane %v3190, 0
    %v3194 = vadd.f32 %v3189, %v3192
    %v3195 = vmax.f32 %v3194, 0.0
    %v3196 = vld [vmem:[%s77] sm:$0xff]
    %v3197 = vld [vmem:[%s77 + $0x8] sm:$0xff]
    %v3198 = vld [vmem:[%s77 + $0x10] sm:$0xff]
    %v3199 = vld [vmem:[%s77 + $0x18] sm:$0xff]
    %v3201 = vsel %vm315, %v3195, 0
    %3203 = vmatpush.msra.mxu0 0.0
    %3204 = vmatpush.msra.mxu0 0.0
    %3205 = vmatpush.msra.mxu0 0.0
    %3206 = vmatpush.msra.mxu0 0.0
    %3207 = vmatpush.msra.mxu0 0.0
    %3208 = vmatpush.msra.mxu0 0.0
    %3209 = vmatpush.msra.mxu0 0.0
    %3210 = vmatpush.msra.mxu0 0.0
    %3211 = vmatpush.msra.mxu0 0.0
    %3212 = vmatpush.msra.mxu0 0.0
    %3213 = vmatpush.msra.mxu0 0.0
    %3214 = vmatpush.msra.mxu0 0.0
    %3215 = vmatpush.msra.mxu0 %v3199
    %3216 = vmatpush.msra.mxu0 %v3198
    %3217 = vmatpush.msra.mxu0 %v3197
    %3218 = vmatpush.msra.mxu0 %v3196
    %3219 = vmatmul.f32.gmra.mxu0 %v3201
    %v3220 = vpop.f32.mrf.mxu0
    %v3221 = vadd.f32 0.0, %v3220
    %3222 = vdwg.mxu0
    %v3224 = vrot.slane %v3221, 1
    %v3225 = vperm.slane %v3221, 0
    %v3226 = vperm.slane %v3224, 0
    %v3229 = vadd.f32 %v3050, %v3225
    %v3230 = vadd.f32 %v3065, %v3225
    %v3231 = vadd.f32 %v3080, %v3226
    %v3232 = vadd.f32 %v3095, %v3226
    %v3233 = vadd.f32 %v2085, %v3229
    %v3234 = vadd.f32 %v2086, %v3230
    %v3235 = vadd.f32 %v2087, %v3231
    %v3236 = vadd.f32 %v2088, %v3232
    %v3237 = vld [vmem:[%s79] sm:$0x1]
    %v3238 = vld [vmem:[%s81] sm:$0x1]
    %v3239 = vsel %vm315, %v3233, 0.0
    %3240 = vadd.xlane.f32.xlu0 %v3239
    %v3241 = vpop.xlane.xlu0 %3240
    %v3242 = vsel %vm315, %v3234, 0.0
    %3243 = vadd.xlane.f32.xlu0 %v3242
    %v3244 = vpop.xlane.xlu0 %3243
    %v3245 = vsel %vm315, %v3235, 0.0
    %3246 = vadd.xlane.f32.xlu0 %v3245
    %v3247 = vpop.xlane.xlu0 %3246
    %v3248 = vsel %vm315, %v3236, 0.0
    %3249 = vadd.xlane.f32.xlu0 %v3248
    %v3250 = vpop.xlane.xlu0 %3249
    %v3251 = vmul.f32 %v3241, %v334
    %v3252 = vmul.f32 %v3244, %v334
    %v3253 = vmul.f32 %v3247, %v334
    %v3254 = vmul.f32 %v3250, %v334
    %v3255 = vsub.f32 %v3233, %v3251
    %v3256 = vsub.f32 %v3234, %v3252
    %v3257 = vsub.f32 %v3235, %v3253
    %v3258 = vsub.f32 %v3236, %v3254
    %v3259 = vmul.f32 %v3255, %v3255
    %v3260 = vmul.f32 %v3256, %v3256
    %v3261 = vmul.f32 %v3257, %v3257
    %v3262 = vmul.f32 %v3258, %v3258
    %v3263 = vsel %vm315, %v3259, 0.0
    %3264 = vadd.xlane.f32.xlu0 %v3263
    %v3265 = vpop.xlane.xlu0 %3264
    %v3266 = vsel %vm315, %v3260, 0.0
    %3267 = vadd.xlane.f32.xlu0 %v3266
    %v3268 = vpop.xlane.xlu0 %3267
    %v3269 = vsel %vm315, %v3261, 0.0
    %3270 = vadd.xlane.f32.xlu0 %v3269
    %v3271 = vpop.xlane.xlu0 %3270
    %v3272 = vsel %vm315, %v3262, 0.0
    %3273 = vadd.xlane.f32.xlu0 %v3272
    %v3274 = vpop.xlane.xlu0 %3273
    %v3275 = vmul.f32 %v3265, %v334
    %v3276 = vmul.f32 %v3268, %v334
    %v3277 = vmul.f32 %v3271, %v334
    %v3278 = vmul.f32 %v3274, %v334
    %v3279 = vadd.f32 %v3275, 1e-05
    %v3280 = vadd.f32 %v3276, 1e-05
    %v3281 = vadd.f32 %v3277, 1e-05
    %v3282 = vadd.f32 %v3278, 1e-05
    %v3283 = vrsqrt.pop %v3279
    %v3284 = vmul.f32 %v3283, %v3279
    %v3285 = vmul.f32 %v3284, %v3283
    %v3286 = vmul.f32 0.5, %v3285
    %v3287 = vsub.f32 1.5, %v3286
    %v3288 = vmul.f32 %v3283, %v3287
    %vm3289 = vweird.f32 %v3279
    %vm3290 = vweird.f32 %v3283
    %vm3291 = vmor %vm3289, %vm3290
    %v3292 = vsel %vm3291, %v3283, %v3288
    %v3293 = vrsqrt.pop %v3280
    %v3294 = vmul.f32 %v3293, %v3280
    %v3295 = vmul.f32 %v3294, %v3293
    %v3296 = vmul.f32 0.5, %v3295
    %v3297 = vsub.f32 1.5, %v3296
    %v3298 = vmul.f32 %v3293, %v3297
    %vm3299 = vweird.f32 %v3280
    %vm3300 = vweird.f32 %v3293
    %vm3301 = vmor %vm3299, %vm3300
    %v3302 = vsel %vm3301, %v3293, %v3298
    %v3303 = vrsqrt.pop %v3281
    %v3304 = vmul.f32 %v3303, %v3281
    %v3305 = vmul.f32 %v3304, %v3303
    %v3306 = vmul.f32 0.5, %v3305
    %v3307 = vsub.f32 1.5, %v3306
    %v3308 = vmul.f32 %v3303, %v3307
    %vm3309 = vweird.f32 %v3281
    %vm3310 = vweird.f32 %v3303
    %vm3311 = vmor %vm3309, %vm3310
    %v3312 = vsel %vm3311, %v3303, %v3308
    %v3313 = vrsqrt.pop %v3282
    %v3314 = vmul.f32 %v3313, %v3282
    %v3315 = vmul.f32 %v3314, %v3313
    %v3316 = vmul.f32 0.5, %v3315
    %v3317 = vsub.f32 1.5, %v3316
    %v3318 = vmul.f32 %v3313, %v3317
    %vm3319 = vweird.f32 %v3282
    %vm3320 = vweird.f32 %v3313
    %vm3321 = vmor %vm3319, %vm3320
    %v3322 = vsel %vm3321, %v3313, %v3318
    %v3323 = vmul.f32 %v3255, %v3292
    %v3324 = vmul.f32 %v3256, %v3302
    %v3325 = vmul.f32 %v3257, %v3312
    %v3326 = vmul.f32 %v3258, %v3322
    %v3328 = vperm.slane %v3237, 0
    %v3330 = vmul.f32 %v3323, %v3328
    %v3331 = vmul.f32 %v3324, %v3328
    %v3332 = vmul.f32 %v3325, %v3328
    %v3333 = vmul.f32 %v3326, %v3328
    %v3335 = vperm.slane %v3238, 0
    %v3337 = vadd.f32 %v3330, %v3335
    %v3338 = vadd.f32 %v3331, %v3335
    %v3339 = vadd.f32 %v3332, %v3335
    %v3340 = vadd.f32 %v3333, %v3335
    %v3341 = vld [vmem:[%s83] sm:$0xff]
    %v3342 = vld [vmem:[%s83 + $0x8] sm:$0xff]
    %v3343 = vld [vmem:[%s83 + $0x10] sm:$0xff]
    %v3344 = vld [vmem:[%s83 + $0x18] sm:$0xff]
    %v3345 = vld [vmem:[%s85] sm:$0x1]
    %v3347 = vperm.slane %v3345, 0
    %v3350 = vsel %vm315, %v3337, 0
    %v3353 = vsel %vm315, %v3338, 0
    %v3356 = vsel %vm315, %v3339, 0
    %v3359 = vsel %vm315, %v3340, 0
    %3361 = vmatpush.msra.mxu0 0.0
    %3362 = vmatpush.msra.mxu0 0.0
    %3363 = vmatpush.msra.mxu0 0.0
    %3364 = vmatpush.msra.mxu0 0.0
    %3365 = vmatpush.msra.mxu0 0.0
    %3366 = vmatpush.msra.mxu0 0.0
    %3367 = vmatpush.msra.mxu0 0.0
    %3368 = vmatpush.msra.mxu0 0.0
    %3369 = vmatpush.msra.mxu0 0.0
    %3370 = vmatpush.msra.mxu0 0.0
    %3371 = vmatpush.msra.mxu0 0.0
    %3372 = vmatpush.msra.mxu0 0.0
    %3373 = vmatpush.msra.mxu0 %v3344
    %3374 = vmatpush.msra.mxu0 %v3343
    %3375 = vmatpush.msra.mxu0 %v3342
    %3376 = vmatpush.msra.mxu0 %v3341
    %3377 = vmatmul.f32.gmra.mxu0 %v3350
    %v3378 = vpop.f32.mrf.mxu0
    %v3379 = vadd.f32 %v3347, %v3378
    %3380 = vmatmul.f32.gmra.mxu0 %v3353
    %v3381 = vpop.f32.mrf.mxu0
    %v3382 = vadd.f32 %v3347, %v3381
    %3383 = vmatmul.f32.gmra.mxu0 %v3356
    %v3384 = vpop.f32.mrf.mxu0
    %v3385 = vadd.f32 %v3347, %v3384
    %3386 = vmatmul.f32.gmra.mxu0 %v3359
    %v3387 = vpop.f32.mrf.mxu0
    %v3388 = vadd.f32 %v3347, %v3387
    %3389 = vdwg.mxu0
    %v3390 = vxor.u32 %v3379, 2147483648
    %v3391 = vxor.u32 %v3382, 2147483648
    %v3392 = vxor.u32 %v3385, 2147483648
    %v3393 = vxor.u32 %v3388, 2147483648
    %v3394 = vmul.f32 %v3390, 1.442695
    %v3395 = vpow.pop %v3394
    %v3396 = vmul.f32 %v3391, 1.442695
    %v3397 = vpow.pop %v3396
    %v3398 = vmul.f32 %v3392, 1.442695
    %v3399 = vpow.pop %v3398
    %v3400 = vmul.f32 %v3393, 1.442695
    %v3401 = vpow.pop %v3400
    %v3402 = vadd.f32 %v3395, 1.0
    %v3403 = vadd.f32 %v3397, 1.0
    %v3404 = vadd.f32 %v3399, 1.0
    %v3405 = vadd.f32 %v3401, 1.0
    %v3406 = vrcp.pop %v3402
    %v3407 = vmul.f32 %v3402, %v3406
    %v3408 = vsub.f32 1.0, %v3407
    %v3409 = vmul.f32 %v3406, %v3408
    %v3410 = vadd.f32 %v3406, %v3409
    %vm3411 = vweird.f32 %v3402
    %vm3412 = vweird.f32 %v3406
    %vm3413 = vmor %vm3411, %vm3412
    %v3414 = vsel %vm3413, %v3406, %v3410
    %v3415 = vand.u32 2147483647, %v3402
    %vm3416 = vcmp.eq.f32.partialorder %v3415, 8.507059e+37
    %v3417 = vand.u32 %v3402, 2147483648
    %v3418 = vor.u32 1.1754944e-38, %v3417
    %v3419 = vsel %vm3416, %v3418, %v3414
    %v3420 = vmul.f32 1.0, %v3419
    %v3421 = vrcp.pop %v3403
    %v3422 = vmul.f32 %v3403, %v3421
    %v3423 = vsub.f32 1.0, %v3422
    %v3424 = vmul.f32 %v3421, %v3423
    %v3425 = vadd.f32 %v3421, %v3424
    %vm3426 = vweird.f32 %v3403
    %vm3427 = vweird.f32 %v3421
    %vm3428 = vmor %vm3426, %vm3427
    %v3429 = vsel %vm3428, %v3421, %v3425
    %v3430 = vand.u32 2147483647, %v3403
    %vm3431 = vcmp.eq.f32.partialorder %v3430, 8.507059e+37
    %v3432 = vand.u32 %v3403, 2147483648
    %v3433 = vor.u32 1.1754944e-38, %v3432
    %v3434 = vsel %vm3431, %v3433, %v3429
    %v3435 = vmul.f32 1.0, %v3434
    %v3436 = vrcp.pop %v3404
    %v3437 = vmul.f32 %v3404, %v3436
    %v3438 = vsub.f32 1.0, %v3437
    %v3439 = vmul.f32 %v3436, %v3438
    %v3440 = vadd.f32 %v3436, %v3439
    %vm3441 = vweird.f32 %v3404
    %vm3442 = vweird.f32 %v3436
    %vm3443 = vmor %vm3441, %vm3442
    %v3444 = vsel %vm3443, %v3436, %v3440
    %v3445 = vand.u32 2147483647, %v3404
    %vm3446 = vcmp.eq.f32.partialorder %v3445, 8.507059e+37
    %v3447 = vand.u32 %v3404, 2147483648
    %v3448 = vor.u32 1.1754944e-38, %v3447
    %v3449 = vsel %vm3446, %v3448, %v3444
    %v3450 = vmul.f32 1.0, %v3449
    %v3451 = vrcp.pop %v3405
    %v3452 = vmul.f32 %v3405, %v3451
    %v3453 = vsub.f32 1.0, %v3452
    %v3454 = vmul.f32 %v3451, %v3453
    %v3455 = vadd.f32 %v3451, %v3454
    %vm3456 = vweird.f32 %v3405
    %vm3457 = vweird.f32 %v3451
    %vm3458 = vmor %vm3456, %vm3457
    %v3459 = vsel %vm3458, %v3451, %v3455
    %v3460 = vand.u32 2147483647, %v3405
    %vm3461 = vcmp.eq.f32.partialorder %v3460, 8.507059e+37
    %v3462 = vand.u32 %v3405, 2147483648
    %v3463 = vor.u32 1.1754944e-38, %v3462
    %v3464 = vsel %vm3461, %v3463, %v3459
    %v3465 = vmul.f32 1.0, %v3464
    %v3466 = vmul.f32 %v3379, %v3420
    %v3467 = vmul.f32 %v3382, %v3435
    %v3468 = vmul.f32 %v3385, %v3450
    %v3469 = vmul.f32 %v3388, %v3465
    %v3470 = vld [vmem:[%s87] sm:$0xff]
    %v3471 = vld [vmem:[%s87 + $0x8] sm:$0xff]
    %v3472 = vld [vmem:[%s87 + $0x10] sm:$0xff]
    %v3473 = vld [vmem:[%s87 + $0x18] sm:$0xff]
    %v3474 = vld [vmem:[%s87 + $0x20] sm:$0xff]
    %v3475 = vld [vmem:[%s87 + $0x28] sm:$0xff]
    %v3476 = vld [vmem:[%s87 + $0x30] sm:$0xff]
    %v3477 = vld [vmem:[%s87 + $0x38] sm:$0xff]
    %v3478 = vld [vmem:[%s89] sm:$0x1]
    %v3480 = vperm.slane %v3478, 0
    %v3483 = vsel %vm566, %v3466, 0
    %v3486 = vsel %vm566, %v3467, 0
    %v3489 = vsel %vm566, %v3468, 0
    %v3492 = vsel %vm566, %v3469, 0
    %3494 = vmatpush.msra.mxu0 0.0
    %3495 = vmatpush.msra.mxu0 0.0
    %3496 = vmatpush.msra.mxu0 0.0
    %3497 = vmatpush.msra.mxu0 0.0
    %3498 = vmatpush.msra.mxu0 0.0
    %3499 = vmatpush.msra.mxu0 0.0
    %3500 = vmatpush.msra.mxu0 0.0
    %3501 = vmatpush.msra.mxu0 0.0
    %3502 = vmatpush.msra.mxu0 %v3477
    %3503 = vmatpush.msra.mxu0 %v3476
    %3504 = vmatpush.msra.mxu0 %v3475
    %3505 = vmatpush.msra.mxu0 %v3474
    %3506 = vmatpush.msra.mxu0 %v3473
    %3507 = vmatpush.msra.mxu0 %v3472
    %3508 = vmatpush.msra.mxu0 %v3471
    %3509 = vmatpush.msra.mxu0 %v3470
    %3510 = vmatmul.f32.gmra.mxu0 %v3483
    %v3511 = vpop.f32.mrf.mxu0
    %v3512 = vadd.f32 %v3480, %v3511
    %3513 = vmatmul.f32.gmra.mxu0 %v3486
    %v3514 = vpop.f32.mrf.mxu0
    %v3515 = vadd.f32 %v3480, %v3514
    %3516 = vmatmul.f32.gmra.mxu0 %v3489
    %v3517 = vpop.f32.mrf.mxu0
    %v3518 = vadd.f32 %v3480, %v3517
    %3519 = vmatmul.f32.gmra.mxu0 %v3492
    %v3520 = vpop.f32.mrf.mxu0
    %v3521 = vadd.f32 %v3480, %v3520
    %3522 = vdwg.mxu0
    %v3523 = vmul.f32 %v3512, 0.5
    %v3524 = vmul.f32 %v3515, 0.5
    %v3525 = vmul.f32 %v3518, 0.5
    %v3526 = vmul.f32 %v3521, 0.5
    %v3527 = vadd.f32 %v3523, %v3233
    %v3528 = vadd.f32 %v3524, %v3234
    %v3529 = vadd.f32 %v3525, %v3235
    %v3530 = vadd.f32 %v3526, %v3236
    %v3531 = vld [vmem:[%s91] sm:$0x1]
    %v3532 = vld [vmem:[#allocation2] sm:$0x1]
    %v3533 = vsel %vm315, %v3527, 0.0
    %3534 = vadd.xlane.f32.xlu0 %v3533
    %v3535 = vpop.xlane.xlu0 %3534
    %v3536 = vsel %vm315, %v3528, 0.0
    %3537 = vadd.xlane.f32.xlu0 %v3536
    %v3538 = vpop.xlane.xlu0 %3537
    %v3539 = vsel %vm315, %v3529, 0.0
    %3540 = vadd.xlane.f32.xlu0 %v3539
    %v3541 = vpop.xlane.xlu0 %3540
    %v3542 = vsel %vm315, %v3530, 0.0
    %3543 = vadd.xlane.f32.xlu0 %v3542
    %v3544 = vpop.xlane.xlu0 %3543
    %v3545 = vmul.f32 %v3535, %v334
    %v3546 = vmul.f32 %v3538, %v334
    %v3547 = vmul.f32 %v3541, %v334
    %v3548 = vmul.f32 %v3544, %v334
    %v3549 = vsub.f32 %v3527, %v3545
    %v3550 = vsub.f32 %v3528, %v3546
    %v3551 = vsub.f32 %v3529, %v3547
    %v3552 = vsub.f32 %v3530, %v3548
    %v3553 = vmul.f32 %v3549, %v3549
    %v3554 = vmul.f32 %v3550, %v3550
    %v3555 = vmul.f32 %v3551, %v3551
    %v3556 = vmul.f32 %v3552, %v3552
    %v3557 = vsel %vm315, %v3553, 0.0
    %3558 = vadd.xlane.f32.xlu0 %v3557
    %v3559 = vpop.xlane.xlu0 %3558
    %v3560 = vsel %vm315, %v3554, 0.0
    %3561 = vadd.xlane.f32.xlu0 %v3560
    %v3562 = vpop.xlane.xlu0 %3561
    %v3563 = vsel %vm315, %v3555, 0.0
    %3564 = vadd.xlane.f32.xlu0 %v3563
    %v3565 = vpop.xlane.xlu0 %3564
    %v3566 = vsel %vm315, %v3556, 0.0
    %3567 = vadd.xlane.f32.xlu0 %v3566
    %v3568 = vpop.xlane.xlu0 %3567
    %v3569 = vmul.f32 %v3559, %v334
    %v3570 = vmul.f32 %v3562, %v334
    %v3571 = vmul.f32 %v3565, %v334
    %v3572 = vmul.f32 %v3568, %v334
    %v3573 = vadd.f32 %v3569, 1e-05
    %v3574 = vadd.f32 %v3570, 1e-05
    %v3575 = vadd.f32 %v3571, 1e-05
    %v3576 = vadd.f32 %v3572, 1e-05
    %v3577 = vrsqrt.pop %v3573
    %v3578 = vmul.f32 %v3577, %v3573
    %v3579 = vmul.f32 %v3578, %v3577
    %v3580 = vmul.f32 0.5, %v3579
    %v3581 = vsub.f32 1.5, %v3580
    %v3582 = vmul.f32 %v3577, %v3581
    %vm3583 = vweird.f32 %v3573
    %vm3584 = vweird.f32 %v3577
    %vm3585 = vmor %vm3583, %vm3584
    %v3586 = vsel %vm3585, %v3577, %v3582
    %v3587 = vrsqrt.pop %v3574
    %v3588 = vmul.f32 %v3587, %v3574
    %v3589 = vmul.f32 %v3588, %v3587
    %v3590 = vmul.f32 0.5, %v3589
    %v3591 = vsub.f32 1.5, %v3590
    %v3592 = vmul.f32 %v3587, %v3591
    %vm3593 = vweird.f32 %v3574
    %vm3594 = vweird.f32 %v3587
    %vm3595 = vmor %vm3593, %vm3594
    %v3596 = vsel %vm3595, %v3587, %v3592
    %v3597 = vrsqrt.pop %v3575
    %v3598 = vmul.f32 %v3597, %v3575
    %v3599 = vmul.f32 %v3598, %v3597
    %v3600 = vmul.f32 0.5, %v3599
    %v3601 = vsub.f32 1.5, %v3600
    %v3602 = vmul.f32 %v3597, %v3601
    %vm3603 = vweird.f32 %v3575
    %vm3604 = vweird.f32 %v3597
    %vm3605 = vmor %vm3603, %vm3604
    %v3606 = vsel %vm3605, %v3597, %v3602
    %v3607 = vrsqrt.pop %v3576
    %v3608 = vmul.f32 %v3607, %v3576
    %v3609 = vmul.f32 %v3608, %v3607
    %v3610 = vmul.f32 0.5, %v3609
    %v3611 = vsub.f32 1.5, %v3610
    %v3612 = vmul.f32 %v3607, %v3611
    %vm3613 = vweird.f32 %v3576
    %vm3614 = vweird.f32 %v3607
    %vm3615 = vmor %vm3613, %vm3614
    %v3616 = vsel %vm3615, %v3607, %v3612
    %v3617 = vmul.f32 %v3549, %v3586
    %v3618 = vmul.f32 %v3550, %v3596
    %v3619 = vmul.f32 %v3551, %v3606
    %v3620 = vmul.f32 %v3552, %v3616
    %v3622 = vperm.slane %v3531, 0
    %v3624 = vmul.f32 %v3617, %v3622
    %v3625 = vmul.f32 %v3618, %v3622
    %v3626 = vmul.f32 %v3619, %v3622
    %v3627 = vmul.f32 %v3620, %v3622
    %v3629 = vperm.slane %v3532, 0
    %v3631 = vadd.f32 %v3624, %v3629
    %v3632 = vadd.f32 %v3625, %v3629
    %v3633 = vadd.f32 %v3626, %v3629
    %v3634 = vadd.f32 %v3627, %v3629
    %3635 = vst.msk [vmem:[%s95] sm:$0xff] %vm315, %v3631
    %3636 = vst.msk [vmem:[%s95 + $0x8] sm:$0xff] %vm315, %v3632
    %3637 = vst.msk [vmem:[%s95 + $0x10] sm:$0xff] %vm315, %v3633
    %3638 = vst.msk [vmem:[%s95 + $0x18] sm:$0xff] %vm315, %v3634
    // Predicated region
    $region194: #{conformer_block.1} parent=1 // pred_check
      _
    $region195: #{conformer_block.1} parent=1 // pred_check_branch
      %3640 = sbr.rel (0) target = $region197
    $region196: #{conformer_block.1} parent=1 // pred_region
      _
    $region197: #{conformer_block.1} parent=1 // pred_fallthru
      _
    // Predicated region
    $region198: #{conformer_block.1} parent=1 // pred_check
      _
    $region199: #{conformer_block.1} parent=1 // pred_check_branch
      %3642 = sbr.rel (0) target = $region201
    $region200: #{conformer_block.1} parent=1 // pred_region
      _
    $region201: #{conformer_block.1} parent=1 // pred_fallthru
      _
    %3643 = vsyncpa [#allocation3], 1

</llo_original>
